<compile_context>
chip_gen: v7x
topology: tpu7x:2x2x1
jax: 0.10.0
libtpu: 0.0.40
codegen_flags: <defaults>
</compile_context>

<pallas_src>
import jax
import jax.numpy as jnp
import numpy as np
from jax.experimental import pallas as pl
from jax.experimental.pallas import tpu as pltpu

NEG_SLOPE = 0.01   # nn.LeakyReLU default negative_slope
BN_EPS = 1e-5      # nn.BatchNorm2d default eps
LANES = 128        # pad all channel axes to the 128-lane width


def bottleneck_kernel(x_ref, w1_ref, b1_ref, w2_ref, b2_ref, w3_ref, b3_ref,
                      o_ref, mid_ref):
    # x_ref : (1, H, W, C)    bf16 channel-padded input (also the identity residual)
    # w1_ref: (C, C)          bf16 1x1 conv1, bn1 scale folded in
    # b1_ref: (1, C)          f32 folded bn1 bias
    # w2_ref: (9, C, C)       bf16 3x3 conv2 taps (ky*3+kx), bn2 scale folded in
    # b2_ref: (1, C)          f32 folded bn2 bias
    # w3_ref: (C, C)          bf16 1x1 conv3, bn3 scale folded in
    # b3_ref: (1, C)          f32 folded bn3 bias
    # o_ref : (1, H, W, C)    f32 output (lane-dense, full-width stores)
    # mid_ref: (H+2, W+2, C)  f32 VMEM scratch: spatially padded conv2 input
    H, W, C = x_ref.shape[1], x_ref.shape[2], x_ref.shape[3]

    x_in = x_ref[0].reshape(H * W, C)                      # bf16, lane-dense

    # --- conv1 (1x1) + bn1 bias + LeakyReLU --------------------------------
    h1 = jnp.dot(x_in, w1_ref[...], preferred_element_type=jnp.float32)
    h1 = h1 + b1_ref[...]
    h1 = jnp.where(h1 > 0, h1, NEG_SLOPE * h1)
    y = h1.reshape(H, W, C)

    # --- re-pad into the persistent VMEM scratch for conv2 -----------------
    # Zero only the 1-pixel halo strips; the interior is overwritten each step.
    zrow = jnp.zeros((1, W + 2, C), jnp.float32)
    zcol = jnp.zeros((H, 1, C), jnp.float32)
    mid_ref[0:1, :, :] = zrow
    mid_ref[H + 1:H + 2, :, :] = zrow
    mid_ref[1:1 + H, 0:1, :] = zcol
    mid_ref[1:1 + H, W + 1:W + 2, :] = zcol
    mid_ref[1:1 + H, 1:1 + W, :] = y

    # --- conv2 (3x3, pad 1) + bn2 bias + LeakyReLU --------------------------
    # 9 shifted-window matmuls, each (H*W, 128) x (128, 128) on the MXU.
    acc = jnp.zeros((H * W, C), jnp.float32)
    for k in range(9):
        ky, kx = k // 3, k % 3
        patch = mid_ref[ky:ky + H, kx:kx + W, :].reshape(H * W, C)
        acc = acc + jnp.dot(patch.astype(jnp.bfloat16), w2_ref[k],
                            preferred_element_type=jnp.float32)
    acc = acc + b2_ref[...]
    acc = jnp.where(acc > 0, acc, NEG_SLOPE * acc)
    y2 = acc.astype(jnp.bfloat16)

    # --- conv3 (1x1) + bn3 bias + identity residual + LeakyyReLU ------------
    h3 = jnp.dot(y2, w3_ref[...], preferred_element_type=jnp.float32)
    h3 = h3 + b3_ref[...] + x_in.astype(jnp.float32)
    h3 = jnp.where(h3 > 0, h3, NEG_SLOPE * h3)
    o_ref[...] = h3.reshape(1, H, W, C)


def bottleneck(x_nchw, params):
    """Bottleneck forward (stride=1, dilation=1, downsample=None). NCHW in/out."""
    (w1, g1, be1, m1, v1, w2, g2, be2, m2, v2, w3, g3, be3, m3, v3) = params
    N, Cin, H, W = x_nchw.shape
    planes = w1.shape[0]
    Cexp = w3.shape[0]
    # Identity residual is only valid for stride=1 / downsample=None blocks.
    assert Cexp == Cin, "stride=1 / downsample=None requires inplanes == planes * 4"
    C = LANES

    # --- fold BN (inference) scales into conv weights, keep only biases -----
    def fold(w_oihw, gamma, beta, mean, var):
        inv = gamma / jnp.sqrt(var + BN_EPS)
        return w_oihw * inv[:, None, None, None], beta - mean * inv

    w1f, bias1 = fold(w1, g1, be1, m1, v1)
    w2f, bias2 = fold(w2, g2, be2, m2, v2)
    w3f, bias3 = fold(w3, g3, be3, m3, v3)

    def pad_to(a, axis):
        pad = [(0, 0)] * a.ndim
        pad[axis] = (0, C - a.shape[axis])
        return jnp.pad(a, pad)

    # x: NCHW -> NHWC, channel-pad to 128 lanes, bf16 for the MXU.
    x_p = pad_to(jnp.transpose(x_nchw, (0, 2, 3, 1)), 3).astype(jnp.bfloat16)

    # 1x1 convs -> (Cin, Cout) matrices; 3x3 conv -> (tap, Cin, Cout). Zero-padded
    # channels contribute exactly zero, so results are unchanged.
    w1m = pad_to(pad_to(jnp.transpose(w1f[:, :, 0, 0], (1, 0)), 0), 1).astype(jnp.bfloat16)
    w3m = pad_to(pad_to(jnp.transpose(w3f[:, :, 0, 0], (1, 0)), 0), 1).astype(jnp.bfloat16)
    w2m = jnp.transpose(w2f, (2, 3, 1, 0)).reshape(9, planes, planes)
    w2m = pad_to(pad_to(w2m, 1), 2).astype(jnp.bfloat16)
    b1v = pad_to(bias1.reshape(1, -1).astype(jnp.float32), 1)
    b2v = pad_to(bias2.reshape(1, -1).astype(jnp.float32), 1)
    b3v = pad_to(bias3.reshape(1, -1).astype(jnp.float32), 1)

    out = pl.pallas_call(
        bottleneck_kernel,
        out_shape=jax.ShapeDtypeStruct((N, H, W, C), jnp.float32),
        grid_spec=pltpu.PrefetchScalarGridSpec(
            num_scalar_prefetch=0,
            grid=(N,),
            in_specs=[
                pl.BlockSpec((1, H, W, C), lambda b: (b, 0, 0, 0)),
                pl.BlockSpec((C, C), lambda b: (0, 0)),
                pl.BlockSpec((1, C), lambda b: (0, 0)),
                pl.BlockSpec((9, C, C), lambda b: (0, 0, 0)),
                pl.BlockSpec((1, C), lambda b: (0, 0)),
                pl.BlockSpec((C, C), lambda b: (0, 0)),
                pl.BlockSpec((1, C), lambda b: (0, 0)),
            ],
            out_specs=pl.BlockSpec((1, H, W, C), lambda b: (b, 0, 0, 0)),
            scratch_shapes=[pltpu.VMEM((H + 2, W + 2, C), jnp.float32)],
        ),
        compiler_params=pltpu.CompilerParams(
            dimension_semantics=("parallel",)),
    )(x_p, w1m, b1v, w2m, b2v, w3m, b3v)

    out = out[..., :Cexp]                      # drop channel padding (plain JAX glue)
    return jnp.transpose(out, (0, 3, 1, 2))    # back to NCHW


def reference_nchw(x, params):
    """Pure-JAX f32 reference mirroring the PyTorch Bottleneck forward."""
    (w1, g1, be1, m1, v1, w2, g2, be2, m2, v2, w3, g3, be3, m3, v3) = params

    def bn(o, g, b, m, v):
        inv = 1.0 / jnp.sqrt(v + BN_EPS)
        return (o - m[None, :, None, None]) * (g * inv)[None, :, None, None] \
            + b[None, :, None, None]

    def conv(a, w, pad):
        dn = jax.lax.conv_dimension_numbers(a.shape, w.shape, ("NCHW", "OIHW", "NCHW"))
        return jax.lax.conv_general_dilated(
            a, w, (1, 1), ((pad, pad), (pad, pad)), dimension_numbers=dn,
            precision=jax.lax.Precision.HIGHEST)

    lrelu = lambda t: jnp.where(t > 0, t, NEG_SLOPE * t)
    o = lrelu(bn(conv(x, w1, 0), g1, be1, m1, v1))
    o = lrelu(bn(conv(o, w2, 1), g2, be2, m2, v2))
    o = bn(conv(o, w3, 0), g3, be3, m3, v3)
    return lrelu(o + x)


if __name__ == "__main__":
    # Bottleneck(inplanes=16, planes=4): 1x1 16->4, 3x3 4->4, 1x1 4->16, residual = x
    N, planes, H, W = 2, 4, 16, 16
    inplanes = planes * 4

    key = jax.random.PRNGKey(0)
    ks = jax.random.split(key, 16)
    x = jax.random.normal(ks[0], (N, inplanes, H, W), jnp.float32)

    def conv_w(k, cout, cin, ksz):
        return jax.random.normal(k, (cout, cin, ksz, ksz), jnp.float32) / jnp.sqrt(ksz * ksz * cin)

    def bn_p(k1, k2, k3, k4, c):
        g = 1.0 + 0.1 * jax.random.normal(k1, (c,), jnp.float32)
        b = 0.1 * jax.random.normal(k2, (c,), jnp.float32)
        m = 0.1 * jax.random.normal(k3, (c,), jnp.float32)
        v = jnp.abs(1.0 + 0.1 * jax.random.normal(k4, (c,), jnp.float32))
        return g, b, m, v

    w1 = conv_w(ks[1], planes, inplanes, 1)
    w2 = conv_w(ks[2], planes, planes, 3)
    w3 = conv_w(ks[3], planes * 4, planes, 1)
    g1, be1, m1, v1 = bn_p(ks[4], ks[5], ks[6], ks[7], planes)
    g2, be2, m2, v2 = bn_p(ks[8], ks[9], ks[10], ks[11], planes)
    g3, be3, m3, v3 = bn_p(ks[12], ks[13], ks[14], ks[15], planes * 4)

    params = (w1, g1, be1, m1, v1, w2, g2, be2, m2, v2, w3, g3, be3, m3, v3)

    out = jax.block_until_ready(bottleneck(x, params))
    assert out.shape == (N, inplanes, H, W)

    ref = jax.block_until_ready(reference_nchw(x, params))
    # bf16 MXU matmuls (f32 accumulation) -> bf16-class tolerance vs the f32 reference.
    np.testing.assert_allclose(np.asarray(out), np.asarray(ref), rtol=2e-2, atol=2e-2)

    print("KERNEL_OK")
</pallas_src>

<mosaic_0001>
module attributes {stable_mosaic.version = 11 : i64} {
  func.func @bottleneck_kernel(%arg0: i32, %arg1: memref<1x16x16x128xbf16, #tpu.memory_space<vmem>>, %arg2: memref<128x128xbf16, #tpu.memory_space<vmem>>, %arg3: memref<1x128xf32, #tpu.memory_space<vmem>>, %arg4: memref<9x128x128xbf16, #tpu.memory_space<vmem>>, %arg5: memref<1x128xf32, #tpu.memory_space<vmem>>, %arg6: memref<128x128xbf16, #tpu.memory_space<vmem>>, %arg7: memref<1x128xf32, #tpu.memory_space<vmem>>, %arg8: memref<1x16x16x128xf32, #tpu.memory_space<vmem>>, %arg9: memref<18x18x128xf32, #tpu.memory_space<vmem>>) attributes {dimension_semantics = [#tpu.dimension_semantics<parallel>], iteration_bounds = array<i64: 2>, scalar_prefetch = 0 : i64, scratch_operands = 1 : i64, tpu.core_type = #tpu.core_type<tc>, window_params = [{transform_indices = @transform_0, window_bounds = array<i64: 1, 16, 16, 128>}, {pipeline_mode = #tpu.pipeline_mode<synchronous>, transform_indices = @transform_1, window_bounds = array<i64: 128, 128>}, {pipeline_mode = #tpu.pipeline_mode<synchronous>, transform_indices = @transform_2, window_bounds = array<i64: 1, 128>}, {pipeline_mode = #tpu.pipeline_mode<synchronous>, transform_indices = @transform_3, window_bounds = array<i64: 9, 128, 128>}, {pipeline_mode = #tpu.pipeline_mode<synchronous>, transform_indices = @transform_4, window_bounds = array<i64: 1, 128>}, {pipeline_mode = #tpu.pipeline_mode<synchronous>, transform_indices = @transform_5, window_bounds = array<i64: 128, 128>}, {pipeline_mode = #tpu.pipeline_mode<synchronous>, transform_indices = @transform_6, window_bounds = array<i64: 1, 128>}, {transform_indices = @transform_7, window_bounds = array<i64: 1, 16, 16, 128>}]} {
    %c0 = arith.constant 0 : index
    %c0_0 = arith.constant 0 : index
    %c0_1 = arith.constant 0 : index
    %c0_2 = arith.constant 0 : index
    %0 = vector.load %arg1[%c0, %c0_0, %c0_1, %c0_2] : memref<1x16x16x128xbf16, #tpu.memory_space<vmem>>, vector<1x16x16x128xbf16>
    %1 = vector.shape_cast %0 : vector<1x16x16x128xbf16> to vector<16x16x128xbf16>
    %2 = vector.shape_cast %1 : vector<16x16x128xbf16> to vector<256x128xbf16>
    %c0_3 = arith.constant 0 : index
    %c0_4 = arith.constant 0 : index
    %3 = vector.load %arg2[%c0_3, %c0_4] : memref<128x128xbf16, #tpu.memory_space<vmem>>, vector<128x128xbf16>
    %cst = arith.constant dense<0.000000e+00> : vector<256x128xf32>
    %4 = tpu.matmul %2, %3, %cst {dimension_numbers = #tpu.dot_dimension_numbers<[1], [0], [0], [1], [0, 0, 1, 1], [], []>} : vector<256x128xbf16>, vector<128x128xbf16>, vector<256x128xf32> -> vector<256x128xf32>
    %c0_5 = arith.constant 0 : index
    %c0_6 = arith.constant 0 : index
    %5 = vector.load %arg3[%c0_5, %c0_6] : memref<1x128xf32, #tpu.memory_space<vmem>>, vector<1x128xf32>
    %6 = vector.broadcast %5 : vector<1x128xf32> to vector<256x128xf32>
    %7 = arith.addf %4, %6 : vector<256x128xf32>
    %cst_7 = arith.constant 0.000000e+00 : f32
    %8 = vector.broadcast %cst_7 : f32 to vector<256x128xf32>
    %9 = arith.cmpf ogt, %7, %8 : vector<256x128xf32>
    %cst_8 = arith.constant 0.00999999977 : f32
    %10 = vector.broadcast %cst_8 : f32 to vector<256x128xf32>
    %11 = arith.mulf %10, %7 : vector<256x128xf32>
    %12 = arith.select %9, %7, %11 : vector<256x128xi1>, vector<256x128xf32>
    %13 = vector.shape_cast %12 : vector<256x128xf32> to vector<16x16x128xf32>
    %cst_9 = arith.constant 0.000000e+00 : f32
    %14 = vector.broadcast %cst_9 : f32 to vector<1x18x128xf32>
    %cst_10 = arith.constant 0.000000e+00 : f32
    %15 = vector.broadcast %cst_10 : f32 to vector<16x1x128xf32>
    %c0_11 = arith.constant 0 : index
    %c0_12 = arith.constant 0 : index
    %c0_13 = arith.constant 0 : index
    %16 = vector.load %arg9[%c0_11, %c0_12, %c0_13] : memref<18x18x128xf32, #tpu.memory_space<vmem>>, vector<1x18x128xf32>
    tpu.vector_store %arg9[%c0_11, %c0_12, %c0_13], %14 {strides = array<i32>} : memref<18x18x128xf32, #tpu.memory_space<vmem>>, vector<1x18x128xf32>,
    %c17 = arith.constant 17 : index
    %c0_14 = arith.constant 0 : index
    %c0_15 = arith.constant 0 : index
    %17 = vector.load %arg9[%c17, %c0_14, %c0_15] : memref<18x18x128xf32, #tpu.memory_space<vmem>>, vector<1x18x128xf32>
    tpu.vector_store %arg9[%c17, %c0_14, %c0_15], %14 {strides = array<i32>} : memref<18x18x128xf32, #tpu.memory_space<vmem>>, vector<1x18x128xf32>,
    %c1 = arith.constant 1 : index
    %c0_16 = arith.constant 0 : index
    %c0_17 = arith.constant 0 : index
    %18 = vector.load %arg9[%c1, %c0_16, %c0_17] : memref<18x18x128xf32, #tpu.memory_space<vmem>>, vector<16x1x128xf32>
    tpu.vector_store %arg9[%c1, %c0_16, %c0_17], %15 {strides = array<i32>} : memref<18x18x128xf32, #tpu.memory_space<vmem>>, vector<16x1x128xf32>,
    %c1_18 = arith.constant 1 : index
    %c17_19 = arith.constant 17 : index
    %c0_20 = arith.constant 0 : index
    %19 = vector.load %arg9[%c1_18, %c17_19, %c0_20] : memref<18x18x128xf32, #tpu.memory_space<vmem>>, vector<16x1x128xf32>
    tpu.vector_store %arg9[%c1_18, %c17_19, %c0_20], %15 {strides = array<i32>} : memref<18x18x128xf32, #tpu.memory_space<vmem>>, vector<16x1x128xf32>,
    %c1_21 = arith.constant 1 : index
    %c1_22 = arith.constant 1 : index
    %c0_23 = arith.constant 0 : index
    %20 = vector.load %arg9[%c1_21, %c1_22, %c0_23] : memref<18x18x128xf32, #tpu.memory_space<vmem>>, vector<16x16x128xf32>
    tpu.vector_store %arg9[%c1_21, %c1_22, %c0_23], %13 {strides = array<i32>} : memref<18x18x128xf32, #tpu.memory_space<vmem>>, vector<16x16x128xf32>,
    %cst_24 = arith.constant 0.000000e+00 : f32
    %21 = vector.broadcast %cst_24 : f32 to vector<256x128xf32>
    %c0_25 = arith.constant 0 : index
    %c0_26 = arith.constant 0 : index
    %c0_27 = arith.constant 0 : index
    %22 = vector.load %arg9[%c0_25, %c0_26, %c0_27] : memref<18x18x128xf32, #tpu.memory_space<vmem>>, vector<16x16x128xf32>
    %23 = vector.shape_cast %22 : vector<16x16x128xf32> to vector<256x128xf32>
    %24 = arith.truncf %23 : vector<256x128xf32> to vector<256x128xbf16>
    %c0_28 = arith.constant 0 : index
    %c0_29 = arith.constant 0 : index
    %c0_30 = arith.constant 0 : index
    %25 = vector.load %arg4[%c0_28, %c0_29, %c0_30] : memref<9x128x128xbf16, #tpu.memory_space<vmem>>, vector<1x128x128xbf16>
    %26 = vector.shape_cast %25 : vector<1x128x128xbf16> to vector<128x128xbf16>
    %cst_31 = arith.constant dense<0.000000e+00> : vector<256x128xf32>
    %27 = tpu.matmul %24, %26, %cst_31 {dimension_numbers = #tpu.dot_dimension_numbers<[1], [0], [0], [1], [0, 0, 1, 1], [], []>} : vector<256x128xbf16>, vector<128x128xbf16>, vector<256x128xf32> -> vector<256x128xf32>
    %28 = arith.addf %21, %27 : vector<256x128xf32>
    %c0_32 = arith.constant 0 : index
    %c1_33 = arith.constant 1 : index
    %c0_34 = arith.constant 0 : index
    %29 = vector.load %arg9[%c0_32, %c1_33, %c0_34] : memref<18x18x128xf32, #tpu.memory_space<vmem>>, vector<16x16x128xf32>
    %30 = vector.shape_cast %29 : vector<16x16x128xf32> to vector<256x128xf32>
    %31 = arith.truncf %30 : vector<256x128xf32> to vector<256x128xbf16>
    %c1_35 = arith.constant 1 : index
    %c0_36 = arith.constant 0 : index
    %c0_37 = arith.constant 0 : index
    %32 = vector.load %arg4[%c1_35, %c0_36, %c0_37] : memref<9x128x128xbf16, #tpu.memory_space<vmem>>, vector<1x128x128xbf16>
    %33 = vector.shape_cast %32 : vector<1x128x128xbf16> to vector<128x128xbf16>
    %cst_38 = arith.constant dense<0.000000e+00> : vector<256x128xf32>
    %34 = tpu.matmul %31, %33, %cst_38 {dimension_numbers = #tpu.dot_dimension_numbers<[1], [0], [0], [1], [0, 0, 1, 1], [], []>} : vector<256x128xbf16>, vector<128x128xbf16>, vector<256x128xf32> -> vector<256x128xf32>
    %35 = arith.addf %28, %34 : vector<256x128xf32>
    %c0_39 = arith.constant 0 : index
    %c2 = arith.constant 2 : index
    %c0_40 = arith.constant 0 : index
    %36 = vector.load %arg9[%c0_39, %c2, %c0_40] : memref<18x18x128xf32, #tpu.memory_space<vmem>>, vector<16x16x128xf32>
    %37 = vector.shape_cast %36 : vector<16x16x128xf32> to vector<256x128xf32>
    %38 = arith.truncf %37 : vector<256x128xf32> to vector<256x128xbf16>
    %c2_41 = arith.constant 2 : index
    %c0_42 = arith.constant 0 : index
    %c0_43 = arith.constant 0 : index
    %39 = vector.load %arg4[%c2_41, %c0_42, %c0_43] : memref<9x128x128xbf16, #tpu.memory_space<vmem>>, vector<1x128x128xbf16>
    %40 = vector.shape_cast %39 : vector<1x128x128xbf16> to vector<128x128xbf16>
    %cst_44 = arith.constant dense<0.000000e+00> : vector<256x128xf32>
    %41 = tpu.matmul %38, %40, %cst_44 {dimension_numbers = #tpu.dot_dimension_numbers<[1], [0], [0], [1], [0, 0, 1, 1], [], []>} : vector<256x128xbf16>, vector<128x128xbf16>, vector<256x128xf32> -> vector<256x128xf32>
    %42 = arith.addf %35, %41 : vector<256x128xf32>
    %c1_45 = arith.constant 1 : index
    %c0_46 = arith.constant 0 : index
    %c0_47 = arith.constant 0 : index
    %43 = vector.load %arg9[%c1_45, %c0_46, %c0_47] : memref<18x18x128xf32, #tpu.memory_space<vmem>>, vector<16x16x128xf32>
    %44 = vector.shape_cast %43 : vector<16x16x128xf32> to vector<256x128xf32>
    %45 = arith.truncf %44 : vector<256x128xf32> to vector<256x128xbf16>
    %c3 = arith.constant 3 : index
    %c0_48 = arith.constant 0 : index
    %c0_49 = arith.constant 0 : index
    %46 = vector.load %arg4[%c3, %c0_48, %c0_49] : memref<9x128x128xbf16, #tpu.memory_space<vmem>>, vector<1x128x128xbf16>
    %47 = vector.shape_cast %46 : vector<1x128x128xbf16> to vector<128x128xbf16>
    %cst_50 = arith.constant dense<0.000000e+00> : vector<256x128xf32>
    %48 = tpu.matmul %45, %47, %cst_50 {dimension_numbers = #tpu.dot_dimension_numbers<[1], [0], [0], [1], [0, 0, 1, 1], [], []>} : vector<256x128xbf16>, vector<128x128xbf16>, vector<256x128xf32> -> vector<256x128xf32>
    %49 = arith.addf %42, %48 : vector<256x128xf32>
    %c1_51 = arith.constant 1 : index
    %c1_52 = arith.constant 1 : index
    %c0_53 = arith.constant 0 : index
    %50 = vector.load %arg9[%c1_51, %c1_52, %c0_53] : memref<18x18x128xf32, #tpu.memory_space<vmem>>, vector<16x16x128xf32>
    %51 = vector.shape_cast %50 : vector<16x16x128xf32> to vector<256x128xf32>
    %52 = arith.truncf %51 : vector<256x128xf32> to vector<256x128xbf16>
    %c4 = arith.constant 4 : index
    %c0_54 = arith.constant 0 : index
    %c0_55 = arith.constant 0 : index
    %53 = vector.load %arg4[%c4, %c0_54, %c0_55] : memref<9x128x128xbf16, #tpu.memory_space<vmem>>, vector<1x128x128xbf16>
    %54 = vector.shape_cast %53 : vector<1x128x128xbf16> to vector<128x128xbf16>
    %cst_56 = arith.constant dense<0.000000e+00> : vector<256x128xf32>
    %55 = tpu.matmul %52, %54, %cst_56 {dimension_numbers = #tpu.dot_dimension_numbers<[1], [0], [0], [1], [0, 0, 1, 1], [], []>} : vector<256x128xbf16>, vector<128x128xbf16>, vector<256x128xf32> -> vector<256x128xf32>
    %56 = arith.addf %49, %55 : vector<256x128xf32>
    %c1_57 = arith.constant 1 : index
    %c2_58 = arith.constant 2 : index
    %c0_59 = arith.constant 0 : index
    %57 = vector.load %arg9[%c1_57, %c2_58, %c0_59] : memref<18x18x128xf32, #tpu.memory_space<vmem>>, vector<16x16x128xf32>
    %58 = vector.shape_cast %57 : vector<16x16x128xf32> to vector<256x128xf32>
    %59 = arith.truncf %58 : vector<256x128xf32> to vector<256x128xbf16>
    %c5 = arith.constant 5 : index
    %c0_60 = arith.constant 0 : index
    %c0_61 = arith.constant 0 : index
    %60 = vector.load %arg4[%c5, %c0_60, %c0_61] : memref<9x128x128xbf16, #tpu.memory_space<vmem>>, vector<1x128x128xbf16>
    %61 = vector.shape_cast %60 : vector<1x128x128xbf16> to vector<128x128xbf16>
    %cst_62 = arith.constant dense<0.000000e+00> : vector<256x128xf32>
    %62 = tpu.matmul %59, %61, %cst_62 {dimension_numbers = #tpu.dot_dimension_numbers<[1], [0], [0], [1], [0, 0, 1, 1], [], []>} : vector<256x128xbf16>, vector<128x128xbf16>, vector<256x128xf32> -> vector<256x128xf32>
    %63 = arith.addf %56, %62 : vector<256x128xf32>
    %c2_63 = arith.constant 2 : index
    %c0_64 = arith.constant 0 : index
    %c0_65 = arith.constant 0 : index
    %64 = vector.load %arg9[%c2_63, %c0_64, %c0_65] : memref<18x18x128xf32, #tpu.memory_space<vmem>>, vector<16x16x128xf32>
    %65 = vector.shape_cast %64 : vector<16x16x128xf32> to vector<256x128xf32>
    %66 = arith.truncf %65 : vector<256x128xf32> to vector<256x128xbf16>
    %c6 = arith.constant 6 : index
    %c0_66 = arith.constant 0 : index
    %c0_67 = arith.constant 0 : index
    %67 = vector.load %arg4[%c6, %c0_66, %c0_67] : memref<9x128x128xbf16, #tpu.memory_space<vmem>>, vector<1x128x128xbf16>
    %68 = vector.shape_cast %67 : vector<1x128x128xbf16> to vector<128x128xbf16>
    %cst_68 = arith.constant dense<0.000000e+00> : vector<256x128xf32>
    %69 = tpu.matmul %66, %68, %cst_68 {dimension_numbers = #tpu.dot_dimension_numbers<[1], [0], [0], [1], [0, 0, 1, 1], [], []>} : vector<256x128xbf16>, vector<128x128xbf16>, vector<256x128xf32> -> vector<256x128xf32>
    %70 = arith.addf %63, %69 : vector<256x128xf32>
    %c2_69 = arith.constant 2 : index
    %c1_70 = arith.constant 1 : index
    %c0_71 = arith.constant 0 : index
    %71 = vector.load %arg9[%c2_69, %c1_70, %c0_71] : memref<18x18x128xf32, #tpu.memory_space<vmem>>, vector<16x16x128xf32>
    %72 = vector.shape_cast %71 : vector<16x16x128xf32> to vector<256x128xf32>
    %73 = arith.truncf %72 : vector<256x128xf32> to vector<256x128xbf16>
    %c7 = arith.constant 7 : index
    %c0_72 = arith.constant 0 : index
    %c0_73 = arith.constant 0 : index
    %74 = vector.load %arg4[%c7, %c0_72, %c0_73] : memref<9x128x128xbf16, #tpu.memory_space<vmem>>, vector<1x128x128xbf16>
    %75 = vector.shape_cast %74 : vector<1x128x128xbf16> to vector<128x128xbf16>
    %cst_74 = arith.constant dense<0.000000e+00> : vector<256x128xf32>
    %76 = tpu.matmul %73, %75, %cst_74 {dimension_numbers = #tpu.dot_dimension_numbers<[1], [0], [0], [1], [0, 0, 1, 1], [], []>} : vector<256x128xbf16>, vector<128x128xbf16>, vector<256x128xf32> -> vector<256x128xf32>
    %77 = arith.addf %70, %76 : vector<256x128xf32>
    %c2_75 = arith.constant 2 : index
    %c2_76 = arith.constant 2 : index
    %c0_77 = arith.constant 0 : index
    %78 = vector.load %arg9[%c2_75, %c2_76, %c0_77] : memref<18x18x128xf32, #tpu.memory_space<vmem>>, vector<16x16x128xf32>
    %79 = vector.shape_cast %78 : vector<16x16x128xf32> to vector<256x128xf32>
    %80 = arith.truncf %79 : vector<256x128xf32> to vector<256x128xbf16>
    %c8 = arith.constant 8 : index
    %c0_78 = arith.constant 0 : index
    %c0_79 = arith.constant 0 : index
    %81 = vector.load %arg4[%c8, %c0_78, %c0_79] : memref<9x128x128xbf16, #tpu.memory_space<vmem>>, vector<1x128x128xbf16>
    %82 = vector.shape_cast %81 : vector<1x128x128xbf16> to vector<128x128xbf16>
    %cst_80 = arith.constant dense<0.000000e+00> : vector<256x128xf32>
    %83 = tpu.matmul %80, %82, %cst_80 {dimension_numbers = #tpu.dot_dimension_numbers<[1], [0], [0], [1], [0, 0, 1, 1], [], []>} : vector<256x128xbf16>, vector<128x128xbf16>, vector<256x128xf32> -> vector<256x128xf32>
    %84 = arith.addf %77, %83 : vector<256x128xf32>
    %c0_81 = arith.constant 0 : index
    %c0_82 = arith.constant 0 : index
    %85 = vector.load %arg5[%c0_81, %c0_82] : memref<1x128xf32, #tpu.memory_space<vmem>>, vector<1x128xf32>
    %86 = vector.broadcast %85 : vector<1x128xf32> to vector<256x128xf32>
    %87 = arith.addf %84, %86 : vector<256x128xf32>
    %cst_83 = arith.constant 0.000000e+00 : f32
    %88 = vector.broadcast %cst_83 : f32 to vector<256x128xf32>
    %89 = arith.cmpf ogt, %87, %88 : vector<256x128xf32>
    %cst_84 = arith.constant 0.00999999977 : f32
    %90 = vector.broadcast %cst_84 : f32 to vector<256x128xf32>
    %91 = arith.mulf %90, %87 : vector<256x128xf32>
    %92 = arith.select %89, %87, %91 : vector<256x128xi1>, vector<256x128xf32>
    %93 = arith.truncf %92 : vector<256x128xf32> to vector<256x128xbf16>
    %c0_85 = arith.constant 0 : index
    %c0_86 = arith.constant 0 : index
    %94 = vector.load %arg6[%c0_85, %c0_86] : memref<128x128xbf16, #tpu.memory_space<vmem>>, vector<128x128xbf16>
    %cst_87 = arith.constant dense<0.000000e+00> : vector<256x128xf32>
    %95 = tpu.matmul %93, %94, %cst_87 {dimension_numbers = #tpu.dot_dimension_numbers<[1], [0], [0], [1], [0, 0, 1, 1], [], []>} : vector<256x128xbf16>, vector<128x128xbf16>, vector<256x128xf32> -> vector<256x128xf32>
    %c0_88 = arith.constant 0 : index
    %c0_89 = arith.constant 0 : index
    %96 = vector.load %arg7[%c0_88, %c0_89] : memref<1x128xf32, #tpu.memory_space<vmem>>, vector<1x128xf32>
    %97 = vector.broadcast %96 : vector<1x128xf32> to vector<256x128xf32>
    %98 = arith.addf %95, %97 : vector<256x128xf32>
    %99 = arith.extf %2 : vector<256x128xbf16> to vector<256x128xf32>
    %100 = arith.addf %98, %99 : vector<256x128xf32>
    %cst_90 = arith.constant 0.000000e+00 : f32
    %101 = vector.broadcast %cst_90 : f32 to vector<256x128xf32>
    %102 = arith.cmpf ogt, %100, %101 : vector<256x128xf32>
    %cst_91 = arith.constant 0.00999999977 : f32
    %103 = vector.broadcast %cst_91 : f32 to vector<256x128xf32>
    %104 = arith.mulf %103, %100 : vector<256x128xf32>
    %105 = arith.select %102, %100, %104 : vector<256x128xi1>, vector<256x128xf32>
    %106 = vector.shape_cast %105 : vector<256x128xf32> to vector<1x16x16x128xf32>
    %c0_92 = arith.constant 0 : index
    %c0_93 = arith.constant 0 : index
    %c0_94 = arith.constant 0 : index
    %c0_95 = arith.constant 0 : index
    %107 = vector.load %arg8[%c0_92, %c0_93, %c0_94, %c0_95] : memref<1x16x16x128xf32, #tpu.memory_space<vmem>>, vector<1x16x16x128xf32>
    tpu.vector_store %arg8[%c0_92, %c0_93, %c0_94, %c0_95], %106 {strides = array<i32>} : memref<1x16x16x128xf32, #tpu.memory_space<vmem>>, vector<1x16x16x128xf32>,
    return
  }
  func.func @transform_0(%arg0: i32) -> (i32, i32, i32, i32) {
    %c0_i32 = arith.constant 0 : i32
    %c0_i32_0 = arith.constant 0 : i32
    %c0_i32_1 = arith.constant 0 : i32
    %c0_i32_2 = arith.constant 0 : i32
    return %arg0, %c0_i32, %c0_i32_0, %c0_i32_1 : i32, i32, i32, i32
  }
  func.func @transform_1(%arg0: i32) -> (i32, i32) {
    %c0_i32 = arith.constant 0 : i32
    %c0_i32_0 = arith.constant 0 : i32
    %c0_i32_1 = arith.constant 0 : i32
    return %c0_i32, %c0_i32_0 : i32, i32
  }
  func.func @transform_2(%arg0: i32) -> (i32, i32) {
    %c0_i32 = arith.constant 0 : i32
    %c0_i32_0 = arith.constant 0 : i32
    %c0_i32_1 = arith.constant 0 : i32
    return %c0_i32, %c0_i32_0 : i32, i32
  }
  func.func @transform_3(%arg0: i32) -> (i32, i32, i32) {
    %c0_i32 = arith.constant 0 : i32
    %c0_i32_0 = arith.constant 0 : i32
    %c0_i32_1 = arith.constant 0 : i32
    %c0_i32_2 = arith.constant 0 : i32
    return %c0_i32, %c0_i32_0, %c0_i32_1 : i32, i32, i32
  }
  func.func @transform_4(%arg0: i32) -> (i32, i32) {
    %c0_i32 = arith.constant 0 : i32
    %c0_i32_0 = arith.constant 0 : i32
    %c0_i32_1 = arith.constant 0 : i32
    return %c0_i32, %c0_i32_0 : i32, i32
  }
  func.func @transform_5(%arg0: i32) -> (i32, i32) {
    %c0_i32 = arith.constant 0 : i32
    %c0_i32_0 = arith.constant 0 : i32
    %c0_i32_1 = arith.constant 0 : i32
    return %c0_i32, %c0_i32_0 : i32, i32
  }
  func.func @transform_6(%arg0: i32) -> (i32, i32) {
    %c0_i32 = arith.constant 0 : i32
    %c0_i32_0 = arith.constant 0 : i32
    %c0_i32_1 = arith.constant 0 : i32
    return %c0_i32, %c0_i32_0 : i32, i32
  }
  func.func @transform_7(%arg0: i32) -> (i32, i32, i32, i32) {
    %c0_i32 = arith.constant 0 : i32
    %c0_i32_0 = arith.constant 0 : i32
    %c0_i32_1 = arith.constant 0 : i32
    %c0_i32_2 = arith.constant 0 : i32
    return %arg0, %c0_i32, %c0_i32_0, %c0_i32_1 : i32, i32, i32, i32
  }
}

</mosaic_0001>

<llo_original>
// kernel: tpu_custom_call.1
$region0: #{tpu_custom_call.1}
  #allocation0 [shape = 'u32[]', space=smem, size = 0x4, offset = 0x4, fixed_abs, tag = 'smem constant byte address 0x4 - core index']
  #allocation1 [shape = 'u32[144,128]{1,0:T(1,128)}', space=vmem, size = 0x12000, scoped, tag = 'internal scratch']
  #allocation2 [shape = 'f32[18,18,128]{2,1,0:T(8,128)}', space=vmem, size = 0x36000, scoped, tag = 'scratch operand']
  %s0 = inlined_call_operand.hbm [shape: bf16[2,16,16,128], index: 0, kind: input, shape index: {}]
  %s1 = inlined_call_operand.hbm [shape: bf16[128,128], index: 1, kind: input, shape index: {}]
  %s2 = inlined_call_operand.vmem [shape: f32[1,128], index: 2, kind: input, shape index: {}]
  %s3 = inlined_call_operand.hbm [shape: bf16[9,128,128], index: 3, kind: input, shape index: {}]
  %s4 = inlined_call_operand.vmem [shape: f32[1,128], index: 4, kind: input, shape index: {}]
  %s5 = inlined_call_operand.hbm [shape: bf16[128,128], index: 5, kind: input, shape index: {}]
  %s6 = inlined_call_operand.vmem [shape: f32[1,128], index: 6, kind: input, shape index: {}]
  %s7 = inlined_call_operand.hbm [shape: f32[2,16,16,128], index: 7, kind: output, shape index: {}]
  %s8 = sld [smem:[#allocation0]]
  $region77: #{tpu_custom_call.1} parent=0
    _
  %s10 = ssub.s32 1, %s8
  %s11 = scalar_select 0, %s10, %s8
  $region1: #{tpu_custom_call.1} parent=0
    #allocation3 [shape = 'u8[131072]{0}', space=vmem, size = 0x20000, scoped, tag = 'input window, operand 0']
    #allocation4 [shape = 's32[2]{0}', space=sflag, size = 0x8, scoped, tag = 'scoped memory for tpu_custom_call.1']
    #allocation5 [shape = 's32[2]{0}', space=sflag, size = 0x8, scoped, tag = 'scoped memory for tpu_custom_call.1']
    #allocation6 [shape = 'u8[32768]{0}', space=vmem, size = 0x8000, scoped, tag = 'input window, operand 1, single buffered']
    #allocation7 [shape = 's32[1]{0}', space=sflag, size = 0x4, scoped, tag = 'scoped memory for tpu_custom_call.1']
    #allocation8 [shape = 'u8[294912]{0}', space=vmem, size = 0x48000, scoped, tag = 'input window, operand 3, single buffered']
    #allocation9 [shape = 'u8[32768]{0}', space=vmem, size = 0x8000, scoped, tag = 'input window, operand 5, single buffered']
    #allocation10 [shape = 's32[1]{0}', space=sflag, size = 0x4, scoped, tag = 'scoped memory for tpu_custom_call.1']
    #allocation11 [shape = 'u8[262144]{0}', space=vmem, size = 0x40000, scoped, tag = 'output window, operand 0']
    %12 = vsyncpa [#allocation4], 0
    %s13 = scalar_lea.sflag [#allocation4], 1
    %14 = vsyncpa %s13, 0
    %15 = vsyncpa [#allocation7], 0
    %16 = vsyncpa [#allocation10], 0
    %17 = vsyncpa [#allocation5], 0
    %s18 = scalar_lea.sflag [#allocation5], 1
    %19 = vsyncpa %s18, 0
    loop: start=0, step=1, limit=4
    $region2: #{tpu_custom_call.1} parent=1 // loop_pre_header
      _
    $region3: #{tpu_custom_call.1} parent=1 // loop_header
      %s21 = sphi 0, %s25
      %p22 = scmp.ge.s32.totalorder %s21, 4
      %s31 = sphi 0, %s33
      %s34 = sphi 0, %s31
      %s35 = sphi 0, %s34
      %s51 = sphi 0, %s35
      %s55 = sphi 0, %s55
      %s57 = sphi 0, %s55
      %s58 = sphi 0, %s57
      %s72 = sphi 0, %s58
      %s76 = sphi 0, %s76
      %s78 = sphi 0, %s76
      %s79 = sphi 0, %s78
      %s93 = sphi 0, %s79
      %s97 = sphi 0, %s97
      %s99 = sphi 0, %s97
      %s100 = sphi 0, %s99
      %s114 = sphi 0, %s100
      %s118 = sphi 0, %s118
      %s120 = sphi 0, %s118
      %s121 = sphi 0, %s120
      %s135 = sphi 0, %s121
      %s139 = sphi 0, %s139
      %s141 = sphi 0, %s139
      %s142 = sphi 0, %s141
      %s156 = sphi 0, %s142
      %s160 = sphi 0, %s160
      %s162 = sphi 0, %s160
      %s163 = sphi 0, %s162
      %s177 = sphi 0, %s163
      %s183 = sphi 0, %s185
      %s186 = sphi 0, %s183
      %s187 = sphi 0, %s186
      %s203 = sphi 0, %s187
    $region4: #{tpu_custom_call.1} parent=1 // loop_header_branch
      %24 = sbr.rel (%p22) target = $region8
    $region5: #{tpu_custom_call.1} parent=1 // loop_body
      %s26 = ssub.s32 %s21, 1
      %s27 = ssub.s32 %s21, 2
      %s28 = sadd.s32 %s21, 1
      %s29 = ssub.s32 %s21, %s28
      %p30 = scmp.eq.s32.totalorder %s29, 0
      %s32 = sadd.s32 %s31, 1
      %s33 = scalar_select %p30, %s31, %s32
      %p36 = pneg %p30
      %p37 = scmp.eq.s32.totalorder %s21, 1
      %p38 = por %p36, %p37
      %p39 = scmp.ne.s32.totalorder %s31, %s34
      %p40 = scmp.eq.s32.totalorder %s21, 0
      %p41 = por %p39, %p40
      %p42 = scmp.ne.s32.totalorder %s31, %s34
      %p43 = scmp.eq.s32.totalorder %s26, 1
      %p44 = por %p42, %p43
      %p45 = scmp.ne.s32.totalorder %s34, %s35
      %p46 = scmp.eq.s32.totalorder %s26, 0
      %p47 = por %p45, %p46
      %p48 = scmp.ne.s32.totalorder %s34, %s35
      %p49 = scmp.eq.s32.totalorder %s27, 1
      %p50 = por %p48, %p49
      %p52 = scmp.ne.s32.totalorder %s35, %s51
      %p53 = scmp.eq.s32.totalorder %s27, 0
      %p54 = por %p52, %p53
      %s56 = sadd.s32 %s55, 1
      %p59 = scmp.eq.s32.totalorder %s21, 1
      %p60 = scmp.ne.s32.totalorder %s55, %s57
      %p61 = scmp.eq.s32.totalorder %s21, 0
      %p62 = por %p60, %p61
      %p63 = scmp.ne.s32.totalorder %s55, %s57
      %p64 = scmp.eq.s32.totalorder %s26, 1
      %p65 = por %p63, %p64
      %p66 = scmp.ne.s32.totalorder %s57, %s58
      %p67 = scmp.eq.s32.totalorder %s26, 0
      %p68 = por %p66, %p67
      %p69 = scmp.ne.s32.totalorder %s57, %s58
      %p70 = scmp.eq.s32.totalorder %s27, 1
      %p71 = por %p69, %p70
      %p73 = scmp.ne.s32.totalorder %s58, %s72
      %p74 = scmp.eq.s32.totalorder %s27, 0
      %p75 = por %p73, %p74
      %s77 = sadd.s32 %s76, 1
      %p80 = scmp.eq.s32.totalorder %s21, 1
      %p81 = scmp.ne.s32.totalorder %s76, %s78
      %p82 = scmp.eq.s32.totalorder %s21, 0
      %p83 = por %p81, %p82
      %p84 = scmp.ne.s32.totalorder %s76, %s78
      %p85 = scmp.eq.s32.totalorder %s26, 1
      %p86 = por %p84, %p85
      %p87 = scmp.ne.s32.totalorder %s78, %s79
      %p88 = scmp.eq.s32.totalorder %s26, 0
      %p89 = por %p87, %p88
      %p90 = scmp.ne.s32.totalorder %s78, %s79
      %p91 = scmp.eq.s32.totalorder %s27, 1
      %p92 = por %p90, %p91
      %p94 = scmp.ne.s32.totalorder %s79, %s93
      %p95 = scmp.eq.s32.totalorder %s27, 0
      %p96 = por %p94, %p95
      %s98 = sadd.s32 %s97, 1
      %p101 = scmp.eq.s32.totalorder %s21, 1
      %p102 = scmp.ne.s32.totalorder %s97, %s99
      %p103 = scmp.eq.s32.totalorder %s21, 0
      %p104 = por %p102, %p103
      %p105 = scmp.ne.s32.totalorder %s97, %s99
      %p106 = scmp.eq.s32.totalorder %s26, 1
      %p107 = por %p105, %p106
      %p108 = scmp.ne.s32.totalorder %s99, %s100
      %p109 = scmp.eq.s32.totalorder %s26, 0
      %p110 = por %p108, %p109
      %p111 = scmp.ne.s32.totalorder %s99, %s100
      %p112 = scmp.eq.s32.totalorder %s27, 1
      %p113 = por %p111, %p112
      %p115 = scmp.ne.s32.totalorder %s100, %s114
      %p116 = scmp.eq.s32.totalorder %s27, 0
      %p117 = por %p115, %p116
      %s119 = sadd.s32 %s118, 1
      %p122 = scmp.eq.s32.totalorder %s21, 1
      %p123 = scmp.ne.s32.totalorder %s118, %s120
      %p124 = scmp.eq.s32.totalorder %s21, 0
      %p125 = por %p123, %p124
      %p126 = scmp.ne.s32.totalorder %s118, %s120
      %p127 = scmp.eq.s32.totalorder %s26, 1
      %p128 = por %p126, %p127
      %p129 = scmp.ne.s32.totalorder %s120, %s121
      %p130 = scmp.eq.s32.totalorder %s26, 0
      %p131 = por %p129, %p130
      %p132 = scmp.ne.s32.totalorder %s120, %s121
      %p133 = scmp.eq.s32.totalorder %s27, 1
      %p134 = por %p132, %p133
      %p136 = scmp.ne.s32.totalorder %s121, %s135
      %p137 = scmp.eq.s32.totalorder %s27, 0
      %p138 = por %p136, %p137
      %s140 = sadd.s32 %s139, 1
      %p143 = scmp.eq.s32.totalorder %s21, 1
      %p144 = scmp.ne.s32.totalorder %s139, %s141
      %p145 = scmp.eq.s32.totalorder %s21, 0
      %p146 = por %p144, %p145
      %p147 = scmp.ne.s32.totalorder %s139, %s141
      %p148 = scmp.eq.s32.totalorder %s26, 1
      %p149 = por %p147, %p148
      %p150 = scmp.ne.s32.totalorder %s141, %s142
      %p151 = scmp.eq.s32.totalorder %s26, 0
      %p152 = por %p150, %p151
      %p153 = scmp.ne.s32.totalorder %s141, %s142
      %p154 = scmp.eq.s32.totalorder %s27, 1
      %p155 = por %p153, %p154
      %p157 = scmp.ne.s32.totalorder %s142, %s156
      %p158 = scmp.eq.s32.totalorder %s27, 0
      %p159 = por %p157, %p158
      %s161 = sadd.s32 %s160, 1
      %p164 = scmp.eq.s32.totalorder %s21, 1
      %p165 = scmp.ne.s32.totalorder %s160, %s162
      %p166 = scmp.eq.s32.totalorder %s21, 0
      %p167 = por %p165, %p166
      %p168 = scmp.ne.s32.totalorder %s160, %s162
      %p169 = scmp.eq.s32.totalorder %s26, 1
      %p170 = por %p168, %p169
      %p171 = scmp.ne.s32.totalorder %s162, %s163
      %p172 = scmp.eq.s32.totalorder %s26, 0
      %p173 = por %p171, %p172
      %p174 = scmp.ne.s32.totalorder %s162, %s163
      %p175 = scmp.eq.s32.totalorder %s27, 1
      %p176 = por %p174, %p175
      %p178 = scmp.ne.s32.totalorder %s163, %s177
      %p179 = scmp.eq.s32.totalorder %s27, 0
      %p180 = por %p178, %p179
      %s181 = ssub.s32 %s21, %s28
      %p182 = scmp.eq.s32.totalorder %s181, 0
      %s184 = sadd.s32 %s183, 1
      %s185 = scalar_select %p182, %s183, %s184
      %p188 = pneg %p182
      %p189 = scmp.eq.s32.totalorder %s21, 1
      %p190 = por %p188, %p189
      %p191 = scmp.ne.s32.totalorder %s183, %s186
      %p192 = scmp.eq.s32.totalorder %s21, 0
      %p193 = por %p191, %p192
      %p194 = scmp.ne.s32.totalorder %s183, %s186
      %p195 = scmp.eq.s32.totalorder %s26, 1
      %p196 = por %p194, %p195
      %p197 = scmp.ne.s32.totalorder %s186, %s187
      %p198 = scmp.eq.s32.totalorder %s26, 0
      %p199 = por %p197, %p198
      %p200 = scmp.ne.s32.totalorder %s186, %s187
      %p201 = scmp.eq.s32.totalorder %s27, 1
      %p202 = por %p200, %p201
      %p204 = scmp.ne.s32.totalorder %s187, %s203
      %p205 = scmp.eq.s32.totalorder %s27, 0
      %p206 = por %p204, %p205
      %p207 = scmp.le.s32.totalorder 1, %s21
      %p208 = scmp.lt.s32.totalorder %s21, 3
      %p209 = pnand %p207, %p208
      %p210 = pneg %p209
      // Predicated region
      $region9: #{tpu_custom_call.1} parent=5 // pred_check
        _
      $region10: #{tpu_custom_call.1} parent=5 // pred_check_branch
        %212 = sbr.rel (%p209) target = $region12
      $region11: #{tpu_custom_call.1} parent=5 // pred_region
        %s213 = ssub.s32 %s21, 1
        // Predicated region
        $region13: #{tpu_custom_call.1} parent=11 // pred_check
          %p214 = pneg %p68
        $region14: #{tpu_custom_call.1} parent=11 // pred_check_branch
          %216 = sbr.rel (%p214) target = $region16
        $region15: #{tpu_custom_call.1} parent=11 // pred_region
          %s218 = ssub.s32 1024, 1024
          %219 = vsyncadd [#allocation7], %s218
          %s220 = sshll.u32 [#allocation6], 4
          %s221 = int_to_ptr.vmem [resolvable:$true] %s220
          %226 = dma.hbm_to_vmem [thread:$0]  %s1, 1024, %s221, [#allocation7], 64, 64, 4
        $region16: #{tpu_custom_call.1} parent=11 // pred_fallthru
          _
        // Predicated region
        $region17: #{tpu_custom_call.1} parent=11 // pred_check
          %p227 = pneg %p89
        $region18: #{tpu_custom_call.1} parent=11 // pred_check_branch
          %229 = sbr.rel (%p227) target = $region20
        $region19: #{tpu_custom_call.1} parent=11 // pred_region
          _
        $region20: #{tpu_custom_call.1} parent=11 // pred_fallthru
          _
        // Predicated region
        $region21: #{tpu_custom_call.1} parent=11 // pred_check
          %p230 = pneg %p110
        $region22: #{tpu_custom_call.1} parent=11 // pred_check_branch
          %232 = sbr.rel (%p230) target = $region24
        $region23: #{tpu_custom_call.1} parent=11 // pred_region
          %s234 = ssub.s32 9216, 9216
          %235 = vsyncadd [#allocation7], %s234
          %s236 = sshll.u32 [#allocation8], 4
          %s237 = int_to_ptr.vmem [resolvable:$true] %s236
          %242 = dma.hbm_to_vmem [thread:$0]  %s3, 9216, %s237, [#allocation7], 64, 64, 4
        $region24: #{tpu_custom_call.1} parent=11 // pred_fallthru
          _
        // Predicated region
        $region25: #{tpu_custom_call.1} parent=11 // pred_check
          %p243 = pneg %p131
        $region26: #{tpu_custom_call.1} parent=11 // pred_check_branch
          %245 = sbr.rel (%p243) target = $region28
        $region27: #{tpu_custom_call.1} parent=11 // pred_region
          _
        $region28: #{tpu_custom_call.1} parent=11 // pred_fallthru
          _
        // Predicated region
        $region29: #{tpu_custom_call.1} parent=11 // pred_check
          %p246 = pneg %p152
        $region30: #{tpu_custom_call.1} parent=11 // pred_check_branch
          %248 = sbr.rel (%p246) target = $region32
        $region31: #{tpu_custom_call.1} parent=11 // pred_region
          %s250 = ssub.s32 1024, 1024
          %251 = vsyncadd [#allocation10], %s250
          %s252 = sshll.u32 [#allocation9], 4
          %s253 = int_to_ptr.vmem [resolvable:$true] %s252
          %258 = dma.hbm_to_vmem [thread:$0]  %s5, 1024, %s253, [#allocation10], 64, 64, 4
        $region32: #{tpu_custom_call.1} parent=11 // pred_fallthru
          _
        // Predicated region
        $region33: #{tpu_custom_call.1} parent=11 // pred_check
          %p259 = pneg %p173
        $region34: #{tpu_custom_call.1} parent=11 // pred_check_branch
          %261 = sbr.rel (%p259) target = $region36
        $region35: #{tpu_custom_call.1} parent=11 // pred_region
          _
        $region36: #{tpu_custom_call.1} parent=11 // pred_fallthru
          _
      $region12: #{tpu_custom_call.1} parent=5 // pred_fallthru
        _
      %p262 = scmp.lt.s32.totalorder %s21, 2
      // Predicated region
      $region37: #{tpu_custom_call.1} parent=5 // pred_check
        %p263 = pneg %p262
      $region38: #{tpu_custom_call.1} parent=5 // pred_check_branch
        %265 = sbr.rel (%p263) target = $region40
      $region39: #{tpu_custom_call.1} parent=5 // pred_region
        // Predicated region
        $region41: #{tpu_custom_call.1} parent=39 // pred_check
          %p266 = pneg %p41
        $region42: #{tpu_custom_call.1} parent=39 // pred_check_branch
          %268 = sbr.rel (%p266) target = $region44
        $region43: #{tpu_custom_call.1} parent=39 // pred_region
          %s269 = sand.u32 %s31, 1
          %s270 = scalar_lea.sflag [#allocation4], %s269
          %s271 = sand.u32 %s31, 1
          %s272 = smul.addr %s271, 128
          %s273 = scalar_lea.vmem [#allocation3], %s272
          %s275 = ssub.s32 2048, 2048
          %276 = vsyncadd %s270, %s275
          %s277 = smul.addr %s21, 32
          %s278 = smul.addr %s277, 64
          %s279 = scalar_lea.hbm %s0, %s278
          %s280 = sshll.u32 %s273, 4
          %s281 = int_to_ptr.vmem [resolvable:$true] %s280
          %286 = dma.hbm_to_vmem [thread:$0]  %s279, 2048, %s281, %s270, 64, 64, 4
        $region44: #{tpu_custom_call.1} parent=39 // pred_fallthru
          _
      $region40: #{tpu_custom_call.1} parent=5 // pred_fallthru
        _
      %p287 = scmp.le.s32.totalorder 1, %s21
      %p288 = scmp.lt.s32.totalorder %s21, 3
      %p289 = pnand %p287, %p288
      %p290 = pneg %p289
      // Predicated region
      $region45: #{tpu_custom_call.1} parent=5 // pred_check
        _
      $region46: #{tpu_custom_call.1} parent=5 // pred_check_branch
        %292 = sbr.rel (%p289) target = $region48
      $region47: #{tpu_custom_call.1} parent=5 // pred_region
        %s293 = ssub.s32 %s21, 1
        %s294 = sand.u32 %s34, 1
        %s295 = scalar_lea.sflag [#allocation4], %s294
        %s296 = sand.u32 %s34, 1
        %s297 = smul.addr %s296, 128
        %s298 = scalar_lea.vmem [#allocation3], %s297
        // Predicated region
        $region49: #{tpu_custom_call.1} parent=47 // pred_check
          %p299 = pneg %p47
        $region50: #{tpu_custom_call.1} parent=47 // pred_check_branch
          %301 = sbr.rel (%p299) target = $region52
        $region51: #{tpu_custom_call.1} parent=47 // pred_region
          %302 = dma.done %s295, 2048
        $region52: #{tpu_custom_call.1} parent=47 // pred_fallthru
          _
        // Predicated region
        $region53: #{tpu_custom_call.1} parent=47 // pred_check
          %p303 = pneg %p68
        $region54: #{tpu_custom_call.1} parent=47 // pred_check_branch
          %305 = sbr.rel (%p303) target = $region56
        $region55: #{tpu_custom_call.1} parent=47 // pred_region
          %306 = dma.done [#allocation7], 1024
        $region56: #{tpu_custom_call.1} parent=47 // pred_fallthru
          _
        // Predicated region
        $region57: #{tpu_custom_call.1} parent=47 // pred_check
          %p307 = pneg %p110
        $region58: #{tpu_custom_call.1} parent=47 // pred_check_branch
          %309 = sbr.rel (%p307) target = $region60
        $region59: #{tpu_custom_call.1} parent=47 // pred_region
          %310 = dma.done [#allocation7], 9216
        $region60: #{tpu_custom_call.1} parent=47 // pred_fallthru
          _
        // Predicated region
        $region61: #{tpu_custom_call.1} parent=47 // pred_check
          %p311 = pneg %p152
        $region62: #{tpu_custom_call.1} parent=47 // pred_check_branch
          %313 = sbr.rel (%p311) target = $region64
        $region63: #{tpu_custom_call.1} parent=47 // pred_region
          %314 = dma.done [#allocation10], 1024
        $region64: #{tpu_custom_call.1} parent=47 // pred_fallthru
          _
        %s315 = sand.u32 %s34, 1
        %s316 = scalar_lea.sflag [#allocation4], %s315
        %s317 = sand.u32 %s34, 1
        %s318 = smul.addr %s317, 128
        %s319 = scalar_lea.vmem [#allocation3], %s318
        %p320 = pneg %p47
        %p321 = pneg %p44
        %p322 = pneg %p68
        %p323 = pneg %p65
        %p324 = pneg %p89
        %p325 = pneg %p86
        %p326 = pneg %p110
        %p327 = pneg %p107
        %p328 = pneg %p131
        %p329 = pneg %p128
        %p330 = pneg %p152
        %p331 = pneg %p149
        %p332 = pneg %p173
        %p333 = pneg %p170
        %p334 = pneg %p199
        %p335 = pneg %p196
        %s336 = sand.u32 %s186, 1
        %s337 = scalar_lea.sflag [#allocation5], %s336
        %s338 = sand.u32 %s186, 1
        %s339 = smul.addr %s338, 256
        %s340 = scalar_lea.vmem [#allocation11], %s339
        %v342 = vld [vmem:[%s298] sm:$0xf]
        %v343 = vld [vmem:[%s298 + $0x4] sm:$0xf]
        %v344 = vld [vmem:[%s298 + $0x8] sm:$0xf]
        %v345 = vld [vmem:[%s298 + $0xc] sm:$0xf]
        %v346 = vld [vmem:[%s298 + $0x10] sm:$0xf]
        %v347 = vld [vmem:[%s298 + $0x14] sm:$0xf]
        %v348 = vld [vmem:[%s298 + $0x18] sm:$0xf]
        %v349 = vld [vmem:[%s298 + $0x1c] sm:$0xf]
        %v350 = vld [vmem:[%s298 + $0x20] sm:$0xf]
        %v351 = vld [vmem:[%s298 + $0x24] sm:$0xf]
        %v352 = vld [vmem:[%s298 + $0x28] sm:$0xf]
        %v353 = vld [vmem:[%s298 + $0x2c] sm:$0xf]
        %v354 = vld [vmem:[%s298 + $0x30] sm:$0xf]
        %v355 = vld [vmem:[%s298 + $0x34] sm:$0xf]
        %v356 = vld [vmem:[%s298 + $0x38] sm:$0xf]
        %v357 = vld [vmem:[%s298 + $0x3c] sm:$0xf]
        %v358 = vld [vmem:[%s298 + $0x40] sm:$0xf]
        %v359 = vld [vmem:[%s298 + $0x44] sm:$0xf]
        %v360 = vld [vmem:[%s298 + $0x48] sm:$0xf]
        %v361 = vld [vmem:[%s298 + $0x4c] sm:$0xf]
        %v362 = vld [vmem:[%s298 + $0x50] sm:$0xf]
        %v363 = vld [vmem:[%s298 + $0x54] sm:$0xf]
        %v364 = vld [vmem:[%s298 + $0x58] sm:$0xf]
        %v365 = vld [vmem:[%s298 + $0x5c] sm:$0xf]
        %v366 = vld [vmem:[%s298 + $0x60] sm:$0xf]
        %v367 = vld [vmem:[%s298 + $0x64] sm:$0xf]
        %v368 = vld [vmem:[%s298 + $0x68] sm:$0xf]
        %v369 = vld [vmem:[%s298 + $0x6c] sm:$0xf]
        %v370 = vld [vmem:[%s298 + $0x70] sm:$0xf]
        %v371 = vld [vmem:[%s298 + $0x74] sm:$0xf]
        %v372 = vld [vmem:[%s298 + $0x78] sm:$0xf]
        %v373 = vld [vmem:[%s298 + $0x7c] sm:$0xf]
        %v374 = vld [vmem:[#allocation6] sm:$0xf]
        %v375 = vld [vmem:[#allocation6 + $0x4] sm:$0xf]
        %v376 = vld [vmem:[#allocation6 + $0x8] sm:$0xf]
        %v377 = vld [vmem:[#allocation6 + $0xc] sm:$0xf]
        %v378 = vld [vmem:[#allocation6 + $0x10] sm:$0xf]
        %v379 = vld [vmem:[#allocation6 + $0x14] sm:$0xf]
        %v380 = vld [vmem:[#allocation6 + $0x18] sm:$0xf]
        %v381 = vld [vmem:[#allocation6 + $0x1c] sm:$0xf]
        %v382 = vld [vmem:[#allocation6 + $0x20] sm:$0xf]
        %v383 = vld [vmem:[#allocation6 + $0x24] sm:$0xf]
        %v384 = vld [vmem:[#allocation6 + $0x28] sm:$0xf]
        %v385 = vld [vmem:[#allocation6 + $0x2c] sm:$0xf]
        %v386 = vld [vmem:[#allocation6 + $0x30] sm:$0xf]
        %v387 = vld [vmem:[#allocation6 + $0x34] sm:$0xf]
        %v388 = vld [vmem:[#allocation6 + $0x38] sm:$0xf]
        %v389 = vld [vmem:[#allocation6 + $0x3c] sm:$0xf]
        %v390 = vld [vmem:[%s2] sm:$0x1]
        %v392 = vlaneseq
        %v393 = vshrl.u32 %v392, 7
        %v394 = vsub.s32 0, %v393
        %v395 = vrot.slane %v390, %v394
        %v429 = vunpack.c.l.b16 %v342
        %v430 = vunpack.c.l.b16 %v343
        %v431 = vunpack.c.l.b16 %v344
        %v432 = vunpack.c.l.b16 %v345
        %v433 = vunpack.c.l.b16 %v346
        %v434 = vunpack.c.l.b16 %v347
        %v435 = vunpack.c.l.b16 %v348
        %v436 = vunpack.c.l.b16 %v349
        %v437 = vunpack.c.l.b16 %v350
        %v438 = vunpack.c.l.b16 %v351
        %v439 = vunpack.c.l.b16 %v352
        %v440 = vunpack.c.l.b16 %v353
        %v441 = vunpack.c.l.b16 %v354
        %v442 = vunpack.c.l.b16 %v355
        %v443 = vunpack.c.l.b16 %v356
        %v444 = vunpack.c.l.b16 %v357
        %v445 = vunpack.c.l.b16 %v358
        %v446 = vunpack.c.l.b16 %v359
        %v447 = vunpack.c.l.b16 %v360
        %v448 = vunpack.c.l.b16 %v361
        %v449 = vunpack.c.l.b16 %v362
        %v450 = vunpack.c.l.b16 %v363
        %v451 = vunpack.c.l.b16 %v364
        %v452 = vunpack.c.l.b16 %v365
        %v453 = vunpack.c.l.b16 %v366
        %v454 = vunpack.c.l.b16 %v367
        %v455 = vunpack.c.l.b16 %v368
        %v456 = vunpack.c.l.b16 %v369
        %v457 = vunpack.c.l.b16 %v370
        %v458 = vunpack.c.l.b16 %v371
        %v459 = vunpack.c.l.b16 %v372
        %v460 = vunpack.c.l.b16 %v373
        %v461 = vpack.c.b16 %v430, %v429
        %v462 = vpack.c.b16 %v432, %v431
        %v463 = vpack.c.b16 %v434, %v433
        %v464 = vpack.c.b16 %v436, %v435
        %v465 = vpack.c.b16 %v438, %v437
        %v466 = vpack.c.b16 %v440, %v439
        %v467 = vpack.c.b16 %v442, %v441
        %v468 = vpack.c.b16 %v444, %v443
        %v469 = vpack.c.b16 %v446, %v445
        %v470 = vpack.c.b16 %v448, %v447
        %v471 = vpack.c.b16 %v450, %v449
        %v472 = vpack.c.b16 %v452, %v451
        %v473 = vpack.c.b16 %v454, %v453
        %v474 = vpack.c.b16 %v456, %v455
        %v475 = vpack.c.b16 %v458, %v457
        %v476 = vpack.c.b16 %v460, %v459
        %v509 = vunpack.c.l.b16 %v374
        %v510 = vunpack.c.l.b16 %v375
        %v511 = vunpack.c.l.b16 %v376
        %v512 = vunpack.c.l.b16 %v377
        %v513 = vunpack.c.l.b16 %v378
        %v514 = vunpack.c.l.b16 %v379
        %v515 = vunpack.c.l.b16 %v380
        %v516 = vunpack.c.l.b16 %v381
        %v517 = vunpack.c.l.b16 %v382
        %v518 = vunpack.c.l.b16 %v383
        %v519 = vunpack.c.l.b16 %v384
        %v520 = vunpack.c.l.b16 %v385
        %v521 = vunpack.c.l.b16 %v386
        %v522 = vunpack.c.l.b16 %v387
        %v523 = vunpack.c.l.b16 %v388
        %v524 = vunpack.c.l.b16 %v389
        %v525 = vpack.c.b16 %v510, %v509
        %v526 = vpack.c.b16 %v512, %v511
        %v527 = vpack.c.b16 %v514, %v513
        %v528 = vpack.c.b16 %v516, %v515
        %v529 = vpack.c.b16 %v518, %v517
        %v530 = vpack.c.b16 %v520, %v519
        %v531 = vpack.c.b16 %v522, %v521
        %v532 = vpack.c.b16 %v524, %v523
        %541 = vmatprep.subr.bf16.mxu0 0
        %542 = vmatpush1.bf16.msra.mxu0 %v525
        %543 = vmatprep.subr.bf16.mxu0 0
        %544 = vmatpush1.bf16.msra.mxu0 %v526
        %545 = vmatprep.subr.bf16.mxu0 0
        %546 = vmatpush1.bf16.msra.mxu0 %v527
        %547 = vmatprep.subr.bf16.mxu0 0
        %548 = vmatpush1.bf16.msra.mxu0 %v528
        %549 = vmatprep.subr.bf16.mxu0 0
        %550 = vmatpush1.bf16.msra.mxu0 %v529
        %551 = vmatprep.subr.bf16.mxu0 0
        %552 = vmatpush1.bf16.msra.mxu0 %v530
        %553 = vmatprep.subr.bf16.mxu0 0
        %554 = vmatpush1.bf16.msra.mxu0 %v531
        %555 = vmatprep.subr.bf16.mxu0 0
        %556 = vmatpush1.bf16.msra.mxu0 %v532
        %557 = vmatprep.subr.bf16.mxu0 0
        %558 = vmatpush1.bf16.msra.mxu0 0
        %559 = vmatprep.subr.bf16.mxu0 0
        %560 = vmatpush1.bf16.msra.mxu0 0
        %561 = vmatprep.subr.bf16.mxu0 0
        %562 = vmatpush1.bf16.msra.mxu0 0
        %563 = vmatprep.subr.bf16.mxu0 0
        %564 = vmatpush1.bf16.msra.mxu0 0
        %565 = vmatprep.subr.bf16.mxu0 0
        %566 = vmatpush1.bf16.msra.mxu0 0
        %567 = vmatprep.subr.bf16.mxu0 0
        %568 = vmatpush1.bf16.msra.mxu0 0
        %569 = vmatprep.subr.bf16.mxu0 0
        %570 = vmatpush1.bf16.msra.mxu0 0
        %571 = vmatprep.subr.bf16.mxu0 0
        %572 = vmatpush1.bf16.msra.mxu0 0
        %573 = vmatprep.mubr.bf16.mxu0 0
        %574 = vmatmul.mubr.bf16.gmra.mrb[0].mxu0 %v461
        %v575 = vpop.f32.mrb[0].mxu0
        %v576 = vadd.f32 %v395, %v575
        %v577 = vpop.f32.mrb[0].mxu0
        %v578 = vpop.f32.mrb[0].mxu0
        %v579 = vadd.f32 %v395, %v578
        %v580 = vpop.f32.mrb[0].mxu0
        %581 = vmatprep.mubr.bf16.mxu0 0
        %582 = vmatmul.mubr.bf16.gmra.mrb[0].mxu0 %v462
        %v583 = vpop.f32.mrb[0].mxu0
        %v584 = vadd.f32 %v395, %v583
        %v585 = vpop.f32.mrb[0].mxu0
        %v586 = vpop.f32.mrb[0].mxu0
        %v587 = vadd.f32 %v395, %v586
        %v588 = vpop.f32.mrb[0].mxu0
        %589 = vmatprep.mubr.bf16.mxu0 0
        %590 = vmatmul.mubr.bf16.gmra.mrb[0].mxu0 %v463
        %v591 = vpop.f32.mrb[0].mxu0
        %v592 = vadd.f32 %v395, %v591
        %v593 = vpop.f32.mrb[0].mxu0
        %v594 = vpop.f32.mrb[0].mxu0
        %v595 = vadd.f32 %v395, %v594
        %v596 = vpop.f32.mrb[0].mxu0
        %597 = vmatprep.mubr.bf16.mxu0 0
        %598 = vmatmul.mubr.bf16.gmra.mrb[0].mxu0 %v464
        %v599 = vpop.f32.mrb[0].mxu0
        %v600 = vadd.f32 %v395, %v599
        %v601 = vpop.f32.mrb[0].mxu0
        %v602 = vpop.f32.mrb[0].mxu0
        %v603 = vadd.f32 %v395, %v602
        %v604 = vpop.f32.mrb[0].mxu0
        %605 = vmatprep.mubr.bf16.mxu0 0
        %606 = vmatmul.mubr.bf16.gmra.mrb[0].mxu0 %v465
        %v607 = vpop.f32.mrb[0].mxu0
        %v608 = vadd.f32 %v395, %v607
        %v609 = vpop.f32.mrb[0].mxu0
        %v610 = vpop.f32.mrb[0].mxu0
        %v611 = vadd.f32 %v395, %v610
        %v612 = vpop.f32.mrb[0].mxu0
        %613 = vmatprep.mubr.bf16.mxu0 0
        %614 = vmatmul.mubr.bf16.gmra.mrb[0].mxu0 %v466
        %v615 = vpop.f32.mrb[0].mxu0
        %v616 = vadd.f32 %v395, %v615
        %v617 = vpop.f32.mrb[0].mxu0
        %v618 = vpop.f32.mrb[0].mxu0
        %v619 = vadd.f32 %v395, %v618
        %v620 = vpop.f32.mrb[0].mxu0
        %621 = vmatprep.mubr.bf16.mxu0 0
        %622 = vmatmul.mubr.bf16.gmra.mrb[0].mxu0 %v467
        %v623 = vpop.f32.mrb[0].mxu0
        %v624 = vadd.f32 %v395, %v623
        %v625 = vpop.f32.mrb[0].mxu0
        %v626 = vpop.f32.mrb[0].mxu0
        %v627 = vadd.f32 %v395, %v626
        %v628 = vpop.f32.mrb[0].mxu0
        %629 = vmatprep.mubr.bf16.mxu0 0
        %630 = vmatmul.mubr.bf16.gmra.mrb[0].mxu0 %v468
        %v631 = vpop.f32.mrb[0].mxu0
        %v632 = vadd.f32 %v395, %v631
        %v633 = vpop.f32.mrb[0].mxu0
        %v634 = vpop.f32.mrb[0].mxu0
        %v635 = vadd.f32 %v395, %v634
        %v636 = vpop.f32.mrb[0].mxu0
        %637 = vmatprep.mubr.bf16.mxu0 0
        %638 = vmatmul.mubr.bf16.gmra.mrb[0].mxu0 %v469
        %v639 = vpop.f32.mrb[0].mxu0
        %v640 = vadd.f32 %v395, %v639
        %v641 = vpop.f32.mrb[0].mxu0
        %v642 = vpop.f32.mrb[0].mxu0
        %v643 = vadd.f32 %v395, %v642
        %v644 = vpop.f32.mrb[0].mxu0
        %645 = vmatprep.mubr.bf16.mxu0 0
        %646 = vmatmul.mubr.bf16.gmra.mrb[0].mxu0 %v470
        %v647 = vpop.f32.mrb[0].mxu0
        %v648 = vadd.f32 %v395, %v647
        %v649 = vpop.f32.mrb[0].mxu0
        %v650 = vpop.f32.mrb[0].mxu0
        %v651 = vadd.f32 %v395, %v650
        %v652 = vpop.f32.mrb[0].mxu0
        %653 = vmatprep.mubr.bf16.mxu0 0
        %654 = vmatmul.mubr.bf16.gmra.mrb[0].mxu0 %v471
        %v655 = vpop.f32.mrb[0].mxu0
        %v656 = vadd.f32 %v395, %v655
        %v657 = vpop.f32.mrb[0].mxu0
        %v658 = vpop.f32.mrb[0].mxu0
        %v659 = vadd.f32 %v395, %v658
        %v660 = vpop.f32.mrb[0].mxu0
        %661 = vmatprep.mubr.bf16.mxu0 0
        %662 = vmatmul.mubr.bf16.gmra.mrb[0].mxu0 %v472
        %v663 = vpop.f32.mrb[0].mxu0
        %v664 = vadd.f32 %v395, %v663
        %v665 = vpop.f32.mrb[0].mxu0
        %v666 = vpop.f32.mrb[0].mxu0
        %v667 = vadd.f32 %v395, %v666
        %v668 = vpop.f32.mrb[0].mxu0
        %669 = vmatprep.mubr.bf16.mxu0 0
        %670 = vmatmul.mubr.bf16.gmra.mrb[0].mxu0 %v473
        %v671 = vpop.f32.mrb[0].mxu0
        %v672 = vadd.f32 %v395, %v671
        %v673 = vpop.f32.mrb[0].mxu0
        %v674 = vpop.f32.mrb[0].mxu0
        %v675 = vadd.f32 %v395, %v674
        %v676 = vpop.f32.mrb[0].mxu0
        %677 = vmatprep.mubr.bf16.mxu0 0
        %678 = vmatmul.mubr.bf16.gmra.mrb[0].mxu0 %v474
        %v679 = vpop.f32.mrb[0].mxu0
        %v680 = vadd.f32 %v395, %v679
        %v681 = vpop.f32.mrb[0].mxu0
        %v682 = vpop.f32.mrb[0].mxu0
        %v683 = vadd.f32 %v395, %v682
        %v684 = vpop.f32.mrb[0].mxu0
        %685 = vmatprep.mubr.bf16.mxu0 0
        %686 = vmatmul.mubr.bf16.gmra.mrb[0].mxu0 %v475
        %v687 = vpop.f32.mrb[0].mxu0
        %v688 = vadd.f32 %v395, %v687
        %v689 = vpop.f32.mrb[0].mxu0
        %v690 = vpop.f32.mrb[0].mxu0
        %v691 = vadd.f32 %v395, %v690
        %v692 = vpop.f32.mrb[0].mxu0
        %693 = vmatprep.mubr.bf16.mxu0 0
        %694 = vmatmul.mubr.bf16.gmra.mrb[0].mxu0 %v476
        %v695 = vpop.f32.mrb[0].mxu0
        %v696 = vadd.f32 %v395, %v695
        %v697 = vpop.f32.mrb[0].mxu0
        %v698 = vpop.f32.mrb[0].mxu0
        %v699 = vadd.f32 %v395, %v698
        %v700 = vpop.f32.mrb[0].mxu0
        %701 = vdwg.mxu0
        %vm702 = vcmp.gt.f32.partialorder %v576, 0.0
        %vm703 = vcmp.gt.f32.partialorder %v579, 0.0
        %vm704 = vcmp.gt.f32.partialorder %v584, 0.0
        %vm705 = vcmp.gt.f32.partialorder %v587, 0.0
        %vm706 = vcmp.gt.f32.partialorder %v592, 0.0
        %vm707 = vcmp.gt.f32.partialorder %v595, 0.0
        %vm708 = vcmp.gt.f32.partialorder %v600, 0.0
        %vm709 = vcmp.gt.f32.partialorder %v603, 0.0
        %vm710 = vcmp.gt.f32.partialorder %v608, 0.0
        %vm711 = vcmp.gt.f32.partialorder %v611, 0.0
        %vm712 = vcmp.gt.f32.partialorder %v616, 0.0
        %vm713 = vcmp.gt.f32.partialorder %v619, 0.0
        %vm714 = vcmp.gt.f32.partialorder %v624, 0.0
        %vm715 = vcmp.gt.f32.partialorder %v627, 0.0
        %vm716 = vcmp.gt.f32.partialorder %v632, 0.0
        %vm717 = vcmp.gt.f32.partialorder %v635, 0.0
        %vm718 = vcmp.gt.f32.partialorder %v640, 0.0
        %vm719 = vcmp.gt.f32.partialorder %v643, 0.0
        %vm720 = vcmp.gt.f32.partialorder %v648, 0.0
        %vm721 = vcmp.gt.f32.partialorder %v651, 0.0
        %vm722 = vcmp.gt.f32.partialorder %v656, 0.0
        %vm723 = vcmp.gt.f32.partialorder %v659, 0.0
        %vm724 = vcmp.gt.f32.partialorder %v664, 0.0
        %vm725 = vcmp.gt.f32.partialorder %v667, 0.0
        %vm726 = vcmp.gt.f32.partialorder %v672, 0.0
        %vm727 = vcmp.gt.f32.partialorder %v675, 0.0
        %vm728 = vcmp.gt.f32.partialorder %v680, 0.0
        %vm729 = vcmp.gt.f32.partialorder %v683, 0.0
        %vm730 = vcmp.gt.f32.partialorder %v688, 0.0
        %vm731 = vcmp.gt.f32.partialorder %v691, 0.0
        %vm732 = vcmp.gt.f32.partialorder %v696, 0.0
        %vm733 = vcmp.gt.f32.partialorder %v699, 0.0
        %v734 = vmul.f32 %v576, 0.01
        %v735 = vmul.f32 %v579, 0.01
        %v736 = vmul.f32 %v584, 0.01
        %v737 = vmul.f32 %v587, 0.01
        %v738 = vmul.f32 %v592, 0.01
        %v739 = vmul.f32 %v595, 0.01
        %v740 = vmul.f32 %v600, 0.01
        %v741 = vmul.f32 %v603, 0.01
        %v742 = vmul.f32 %v608, 0.01
        %v743 = vmul.f32 %v611, 0.01
        %v744 = vmul.f32 %v616, 0.01
        %v745 = vmul.f32 %v619, 0.01
        %v746 = vmul.f32 %v624, 0.01
        %v747 = vmul.f32 %v627, 0.01
        %v748 = vmul.f32 %v632, 0.01
        %v749 = vmul.f32 %v635, 0.01
        %v750 = vmul.f32 %v640, 0.01
        %v751 = vmul.f32 %v643, 0.01
        %v752 = vmul.f32 %v648, 0.01
        %v753 = vmul.f32 %v651, 0.01
        %v754 = vmul.f32 %v656, 0.01
        %v755 = vmul.f32 %v659, 0.01
        %v756 = vmul.f32 %v664, 0.01
        %v757 = vmul.f32 %v667, 0.01
        %v758 = vmul.f32 %v672, 0.01
        %v759 = vmul.f32 %v675, 0.01
        %v760 = vmul.f32 %v680, 0.01
        %v761 = vmul.f32 %v683, 0.01
        %v762 = vmul.f32 %v688, 0.01
        %v763 = vmul.f32 %v691, 0.01
        %v764 = vmul.f32 %v696, 0.01
        %v765 = vmul.f32 %v699, 0.01
        %v766 = vsel %vm702, %v576, %v734
        %v767 = vsel %vm703, %v579, %v735
        %v768 = vsel %vm704, %v584, %v736
        %v769 = vsel %vm705, %v587, %v737
        %v770 = vsel %vm706, %v592, %v738
        %v771 = vsel %vm707, %v595, %v739
        %v772 = vsel %vm708, %v600, %v740
        %v773 = vsel %vm709, %v603, %v741
        %v774 = vsel %vm710, %v608, %v742
        %v775 = vsel %vm711, %v611, %v743
        %v776 = vsel %vm712, %v616, %v744
        %v777 = vsel %vm713, %v619, %v745
        %v778 = vsel %vm714, %v624, %v746
        %v779 = vsel %vm715, %v627, %v747
        %v780 = vsel %vm716, %v632, %v748
        %v781 = vsel %vm717, %v635, %v749
        %v782 = vsel %vm718, %v640, %v750
        %v783 = vsel %vm719, %v643, %v751
        %v784 = vsel %vm720, %v648, %v752
        %v785 = vsel %vm721, %v651, %v753
        %v786 = vsel %vm722, %v656, %v754
        %v787 = vsel %vm723, %v659, %v755
        %v788 = vsel %vm724, %v664, %v756
        %v789 = vsel %vm725, %v667, %v757
        %v790 = vsel %vm726, %v672, %v758
        %v791 = vsel %vm727, %v675, %v759
        %v792 = vsel %vm728, %v680, %v760
        %v793 = vsel %vm729, %v683, %v761
        %v794 = vsel %vm730, %v688, %v762
        %v795 = vsel %vm731, %v691, %v763
        %v796 = vsel %vm732, %v696, %v764
        %v797 = vsel %vm733, %v699, %v765
        %798 = vst [vmem:[#allocation2] sm:$0xff] 0.0
        %799 = vst [vmem:[#allocation2 + $0x8] sm:$0xff] 0.0
        %800 = vst [vmem:[#allocation2 + $0x10] sm:$0x3] 0.0
        %s801 = scalar_lea.vmem [#allocation2], 408
        %802 = vst [vmem:[%s801] sm:$0xff] 0.0
        %803 = vst [vmem:[%s801 + $0x8] sm:$0xff] 0.0
        %804 = vst [vmem:[%s801 + $0x10] sm:$0x3] 0.0
        %s805 = scalar_lea.vmem [#allocation2], 24
        %806 = vst [vmem:[%s805] sm:$0x1] 0.0
        %807 = vst [vmem:[%s805 + $0x18] sm:$0x1] 0.0
        %808 = vst [vmem:[%s805 + $0x30] sm:$0x1] 0.0
        %809 = vst [vmem:[%s805 + $0x48] sm:$0x1] 0.0
        %810 = vst [vmem:[%s805 + $0x60] sm:$0x1] 0.0
        %811 = vst [vmem:[%s805 + $0x78] sm:$0x1] 0.0
        %812 = vst [vmem:[%s805 + $0x90] sm:$0x1] 0.0
        %813 = vst [vmem:[%s805 + $0xa8] sm:$0x1] 0.0
        %814 = vst [vmem:[%s805 + $0xc0] sm:$0x1] 0.0
        %815 = vst [vmem:[%s805 + $0xd8] sm:$0x1] 0.0
        %816 = vst [vmem:[%s805 + $0xf0] sm:$0x1] 0.0
        %817 = vst [vmem:[%s805 + $0x108] sm:$0x1] 0.0
        %818 = vst [vmem:[%s805 + $0x120] sm:$0x1] 0.0
        %819 = vst [vmem:[%s805 + $0x138] sm:$0x1] 0.0
        %820 = vst [vmem:[%s805 + $0x150] sm:$0x1] 0.0
        %821 = vst [vmem:[%s805 + $0x168] sm:$0x1] 0.0
        %822 = vst [vmem:[%s805 + $0x11] sm:$0x1] 0.0
        %823 = vst [vmem:[%s805 + $0x29] sm:$0x1] 0.0
        %824 = vst [vmem:[%s805 + $0x41] sm:$0x1] 0.0
        %825 = vst [vmem:[%s805 + $0x59] sm:$0x1] 0.0
        %826 = vst [vmem:[%s805 + $0x71] sm:$0x1] 0.0
        %827 = vst [vmem:[%s805 + $0x89] sm:$0x1] 0.0
        %828 = vst [vmem:[%s805 + $0xa1] sm:$0x1] 0.0
        %829 = vst [vmem:[%s805 + $0xb9] sm:$0x1] 0.0
        %830 = vst [vmem:[%s805 + $0xd1] sm:$0x1] 0.0
        %831 = vst [vmem:[%s805 + $0xe9] sm:$0x1] 0.0
        %832 = vst [vmem:[%s805 + $0x101] sm:$0x1] 0.0
        %833 = vst [vmem:[%s805 + $0x119] sm:$0x1] 0.0
        %834 = vst [vmem:[%s805 + $0x131] sm:$0x1] 0.0
        %835 = vst [vmem:[%s805 + $0x149] sm:$0x1] 0.0
        %836 = vst [vmem:[%s805 + $0x161] sm:$0x1] 0.0
        %837 = vst [vmem:[%s805 + $0x179] sm:$0x1] 0.0
        %838 = vst [vmem:[%s805 + $0x1] sm:$0xff] %v766
        %839 = vst [vmem:[%s805 + $0x9] sm:$0xff] %v767
        %840 = vst [vmem:[%s805 + $0x19] sm:$0xff] %v768
        %841 = vst [vmem:[%s805 + $0x21] sm:$0xff] %v769
        %842 = vst [vmem:[%s805 + $0x31] sm:$0xff] %v770
        %843 = vst [vmem:[%s805 + $0x39] sm:$0xff] %v771
        %844 = vst [vmem:[%s805 + $0x49] sm:$0xff] %v772
        %845 = vst [vmem:[%s805 + $0x51] sm:$0xff] %v773
        %846 = vst [vmem:[%s805 + $0x61] sm:$0xff] %v774
        %847 = vst [vmem:[%s805 + $0x69] sm:$0xff] %v775
        %848 = vst [vmem:[%s805 + $0x79] sm:$0xff] %v776
        %849 = vst [vmem:[%s805 + $0x81] sm:$0xff] %v777
        %850 = vst [vmem:[%s805 + $0x91] sm:$0xff] %v778
        %851 = vst [vmem:[%s805 + $0x99] sm:$0xff] %v779
        %852 = vst [vmem:[%s805 + $0xa9] sm:$0xff] %v780
        %853 = vst [vmem:[%s805 + $0xb1] sm:$0xff] %v781
        %854 = vst [vmem:[%s805 + $0xc1] sm:$0xff] %v782
        %855 = vst [vmem:[%s805 + $0xc9] sm:$0xff] %v783
        %856 = vst [vmem:[%s805 + $0xd9] sm:$0xff] %v784
        %857 = vst [vmem:[%s805 + $0xe1] sm:$0xff] %v785
        %858 = vst [vmem:[%s805 + $0xf1] sm:$0xff] %v786
        %859 = vst [vmem:[%s805 + $0xf9] sm:$0xff] %v787
        %860 = vst [vmem:[%s805 + $0x109] sm:$0xff] %v788
        %861 = vst [vmem:[%s805 + $0x111] sm:$0xff] %v789
        %862 = vst [vmem:[%s805 + $0x121] sm:$0xff] %v790
        %863 = vst [vmem:[%s805 + $0x129] sm:$0xff] %v791
        %864 = vst [vmem:[%s805 + $0x139] sm:$0xff] %v792
        %865 = vst [vmem:[%s805 + $0x141] sm:$0xff] %v793
        %866 = vst [vmem:[%s805 + $0x151] sm:$0xff] %v794
        %867 = vst [vmem:[%s805 + $0x159] sm:$0xff] %v795
        %868 = vst [vmem:[%s805 + $0x169] sm:$0xff] %v796
        %869 = vst [vmem:[%s805 + $0x171] sm:$0xff] %v797
        %v870 = vld [vmem:[#allocation2] sm:$0xff]
        %v871 = vld [vmem:[#allocation2 + $0x8] sm:$0xff]
        %v872 = vld [vmem:[#allocation2 + $0x18] sm:$0xff]
        %v873 = vld [vmem:[#allocation2 + $0x20] sm:$0xff]
        %v874 = vld [vmem:[#allocation2 + $0x30] sm:$0xff]
        %v875 = vld [vmem:[#allocation2 + $0x38] sm:$0xff]
        %v876 = vld [vmem:[#allocation2 + $0x48] sm:$0xff]
        %v877 = vld [vmem:[#allocation2 + $0x50] sm:$0xff]
        %v878 = vld [vmem:[#allocation2 + $0x60] sm:$0xff]
        %v879 = vld [vmem:[#allocation2 + $0x68] sm:$0xff]
        %v880 = vld [vmem:[#allocation2 + $0x78] sm:$0xff]
        %v881 = vld [vmem:[#allocation2 + $0x80] sm:$0xff]
        %v882 = vld [vmem:[#allocation2 + $0x90] sm:$0xff]
        %v883 = vld [vmem:[#allocation2 + $0x98] sm:$0xff]
        %v884 = vld [vmem:[#allocation2 + $0xa8] sm:$0xff]
        %v885 = vld [vmem:[#allocation2 + $0xb0] sm:$0xff]
        %v886 = vld [vmem:[#allocation2 + $0xc0] sm:$0xff]
        %v887 = vld [vmem:[#allocation2 + $0xc8] sm:$0xff]
        %v888 = vld [vmem:[#allocation2 + $0xd8] sm:$0xff]
        %v889 = vld [vmem:[#allocation2 + $0xe0] sm:$0xff]
        %v890 = vld [vmem:[#allocation2 + $0xf0] sm:$0xff]
        %v891 = vld [vmem:[#allocation2 + $0xf8] sm:$0xff]
        %v892 = vld [vmem:[#allocation2 + $0x108] sm:$0xff]
        %v893 = vld [vmem:[#allocation2 + $0x110] sm:$0xff]
        %v894 = vld [vmem:[#allocation2 + $0x120] sm:$0xff]
        %v895 = vld [vmem:[#allocation2 + $0x128] sm:$0xff]
        %v896 = vld [vmem:[#allocation2 + $0x138] sm:$0xff]
        %v897 = vld [vmem:[#allocation2 + $0x140] sm:$0xff]
        %v898 = vld [vmem:[#allocation2 + $0x150] sm:$0xff]
        %v899 = vld [vmem:[#allocation2 + $0x158] sm:$0xff]
        %v900 = vld [vmem:[#allocation2 + $0x168] sm:$0xff]
        %v901 = vld [vmem:[#allocation2 + $0x170] sm:$0xff]
        %v902 = vpack.c.bf16 %v871, %v870
        %v903 = vpack.c.bf16 %v873, %v872
        %v904 = vpack.c.bf16 %v875, %v874
        %v905 = vpack.c.bf16 %v877, %v876
        %v906 = vpack.c.bf16 %v879, %v878
        %v907 = vpack.c.bf16 %v881, %v880
        %v908 = vpack.c.bf16 %v883, %v882
        %v909 = vpack.c.bf16 %v885, %v884
        %v910 = vpack.c.bf16 %v887, %v886
        %v911 = vpack.c.bf16 %v889, %v888
        %v912 = vpack.c.bf16 %v891, %v890
        %v913 = vpack.c.bf16 %v893, %v892
        %v914 = vpack.c.bf16 %v895, %v894
        %v915 = vpack.c.bf16 %v897, %v896
        %v916 = vpack.c.bf16 %v899, %v898
        %v917 = vpack.c.bf16 %v901, %v900
        %v918 = vld [vmem:[#allocation8] sm:$0xf]
        %v919 = vld [vmem:[#allocation8 + $0x4] sm:$0xf]
        %v920 = vld [vmem:[#allocation8 + $0x8] sm:$0xf]
        %v921 = vld [vmem:[#allocation8 + $0xc] sm:$0xf]
        %v922 = vld [vmem:[#allocation8 + $0x10] sm:$0xf]
        %v923 = vld [vmem:[#allocation8 + $0x14] sm:$0xf]
        %v924 = vld [vmem:[#allocation8 + $0x18] sm:$0xf]
        %v925 = vld [vmem:[#allocation8 + $0x1c] sm:$0xf]
        %v926 = vld [vmem:[#allocation8 + $0x20] sm:$0xf]
        %v927 = vld [vmem:[#allocation8 + $0x24] sm:$0xf]
        %v928 = vld [vmem:[#allocation8 + $0x28] sm:$0xf]
        %v929 = vld [vmem:[#allocation8 + $0x2c] sm:$0xf]
        %v930 = vld [vmem:[#allocation8 + $0x30] sm:$0xf]
        %v931 = vld [vmem:[#allocation8 + $0x34] sm:$0xf]
        %v932 = vld [vmem:[#allocation8 + $0x38] sm:$0xf]
        %v933 = vld [vmem:[#allocation8 + $0x3c] sm:$0xf]
        %v934 = vld [vmem:[#allocation2 + $0x1] sm:$0xff]
        %v935 = vld [vmem:[#allocation2 + $0x9] sm:$0xff]
        %v936 = vld [vmem:[#allocation2 + $0x19] sm:$0xff]
        %v937 = vld [vmem:[#allocation2 + $0x21] sm:$0xff]
        %v938 = vld [vmem:[#allocation2 + $0x31] sm:$0xff]
        %v939 = vld [vmem:[#allocation2 + $0x39] sm:$0xff]
        %v940 = vld [vmem:[#allocation2 + $0x49] sm:$0xff]
        %v941 = vld [vmem:[#allocation2 + $0x51] sm:$0xff]
        %v942 = vld [vmem:[#allocation2 + $0x61] sm:$0xff]
        %v943 = vld [vmem:[#allocation2 + $0x69] sm:$0xff]
        %v944 = vld [vmem:[#allocation2 + $0x79] sm:$0xff]
        %v945 = vld [vmem:[#allocation2 + $0x81] sm:$0xff]
        %v946 = vld [vmem:[#allocation2 + $0x91] sm:$0xff]
        %v947 = vld [vmem:[#allocation2 + $0x99] sm:$0xff]
        %v948 = vld [vmem:[#allocation2 + $0xa9] sm:$0xff]
        %v949 = vld [vmem:[#allocation2 + $0xb1] sm:$0xff]
        %v950 = vld [vmem:[#allocation2 + $0xc1] sm:$0xff]
        %v951 = vld [vmem:[#allocation2 + $0xc9] sm:$0xff]
        %v952 = vld [vmem:[#allocation2 + $0xd9] sm:$0xff]
        %v953 = vld [vmem:[#allocation2 + $0xe1] sm:$0xff]
        %v954 = vld [vmem:[#allocation2 + $0xf1] sm:$0xff]
        %v955 = vld [vmem:[#allocation2 + $0xf9] sm:$0xff]
        %v956 = vld [vmem:[#allocation2 + $0x109] sm:$0xff]
        %v957 = vld [vmem:[#allocation2 + $0x111] sm:$0xff]
        %v958 = vld [vmem:[#allocation2 + $0x121] sm:$0xff]
        %v959 = vld [vmem:[#allocation2 + $0x129] sm:$0xff]
        %v960 = vld [vmem:[#allocation2 + $0x139] sm:$0xff]
        %v961 = vld [vmem:[#allocation2 + $0x141] sm:$0xff]
        %v962 = vld [vmem:[#allocation2 + $0x151] sm:$0xff]
        %v963 = vld [vmem:[#allocation2 + $0x159] sm:$0xff]
        %v964 = vld [vmem:[#allocation2 + $0x169] sm:$0xff]
        %v965 = vld [vmem:[#allocation2 + $0x171] sm:$0xff]
        %v966 = vpack.c.bf16 %v935, %v934
        %v967 = vpack.c.bf16 %v937, %v936
        %v968 = vpack.c.bf16 %v939, %v938
        %v969 = vpack.c.bf16 %v941, %v940
        %v970 = vpack.c.bf16 %v943, %v942
        %v971 = vpack.c.bf16 %v945, %v944
        %v972 = vpack.c.bf16 %v947, %v946
        %v973 = vpack.c.bf16 %v949, %v948
        %v974 = vpack.c.bf16 %v951, %v950
        %v975 = vpack.c.bf16 %v953, %v952
        %v976 = vpack.c.bf16 %v955, %v954
        %v977 = vpack.c.bf16 %v957, %v956
        %v978 = vpack.c.bf16 %v959, %v958
        %v979 = vpack.c.bf16 %v961, %v960
        %v980 = vpack.c.bf16 %v963, %v962
        %v981 = vpack.c.bf16 %v965, %v964
        %s982 = scalar_lea.vmem [#allocation8], 64
        %v983 = vld [vmem:[%s982] sm:$0xf]
        %v984 = vld [vmem:[%s982 + $0x4] sm:$0xf]
        %v985 = vld [vmem:[%s982 + $0x8] sm:$0xf]
        %v986 = vld [vmem:[%s982 + $0xc] sm:$0xf]
        %v987 = vld [vmem:[%s982 + $0x10] sm:$0xf]
        %v988 = vld [vmem:[%s982 + $0x14] sm:$0xf]
        %v989 = vld [vmem:[%s982 + $0x18] sm:$0xf]
        %v990 = vld [vmem:[%s982 + $0x1c] sm:$0xf]
        %v991 = vld [vmem:[%s982 + $0x20] sm:$0xf]
        %v992 = vld [vmem:[%s982 + $0x24] sm:$0xf]
        %v993 = vld [vmem:[%s982 + $0x28] sm:$0xf]
        %v994 = vld [vmem:[%s982 + $0x2c] sm:$0xf]
        %v995 = vld [vmem:[%s982 + $0x30] sm:$0xf]
        %v996 = vld [vmem:[%s982 + $0x34] sm:$0xf]
        %v997 = vld [vmem:[%s982 + $0x38] sm:$0xf]
        %v998 = vld [vmem:[%s982 + $0x3c] sm:$0xf]
        %v1015 = vunpack.c.l.b16 %v983
        %v1016 = vunpack.c.l.b16 %v984
        %v1017 = vunpack.c.l.b16 %v985
        %v1018 = vunpack.c.l.b16 %v986
        %v1019 = vunpack.c.l.b16 %v987
        %v1020 = vunpack.c.l.b16 %v988
        %v1021 = vunpack.c.l.b16 %v989
        %v1022 = vunpack.c.l.b16 %v990
        %v1023 = vunpack.c.l.b16 %v991
        %v1024 = vunpack.c.l.b16 %v992
        %v1025 = vunpack.c.l.b16 %v993
        %v1026 = vunpack.c.l.b16 %v994
        %v1027 = vunpack.c.l.b16 %v995
        %v1028 = vunpack.c.l.b16 %v996
        %v1029 = vunpack.c.l.b16 %v997
        %v1030 = vunpack.c.l.b16 %v998
        %v1031 = vpack.c.b16 %v1016, %v1015
        %v1032 = vpack.c.b16 %v1018, %v1017
        %v1033 = vpack.c.b16 %v1020, %v1019
        %v1034 = vpack.c.b16 %v1022, %v1021
        %v1035 = vpack.c.b16 %v1024, %v1023
        %v1036 = vpack.c.b16 %v1026, %v1025
        %v1037 = vpack.c.b16 %v1028, %v1027
        %v1038 = vpack.c.b16 %v1030, %v1029
        %1047 = vmatprep.subr.bf16.mxu0 0
        %1048 = vmatpush1.bf16.msra.mxu0 %v1031
        %1049 = vmatprep.subr.bf16.mxu0 0
        %1050 = vmatpush1.bf16.msra.mxu0 %v1032
        %1051 = vmatprep.subr.bf16.mxu0 0
        %1052 = vmatpush1.bf16.msra.mxu0 %v1033
        %1053 = vmatprep.subr.bf16.mxu0 0
        %1054 = vmatpush1.bf16.msra.mxu0 %v1034
        %1055 = vmatprep.subr.bf16.mxu0 0
        %1056 = vmatpush1.bf16.msra.mxu0 %v1035
        %1057 = vmatprep.subr.bf16.mxu0 0
        %1058 = vmatpush1.bf16.msra.mxu0 %v1036
        %1059 = vmatprep.subr.bf16.mxu0 0
        %1060 = vmatpush1.bf16.msra.mxu0 %v1037
        %1061 = vmatprep.subr.bf16.mxu0 0
        %1062 = vmatpush1.bf16.msra.mxu0 %v1038
        %1063 = vmatprep.subr.bf16.mxu0 0
        %1064 = vmatpush1.bf16.msra.mxu0 0
        %1065 = vmatprep.subr.bf16.mxu0 0
        %1066 = vmatpush1.bf16.msra.mxu0 0
        %1067 = vmatprep.subr.bf16.mxu0 0
        %1068 = vmatpush1.bf16.msra.mxu0 0
        %1069 = vmatprep.subr.bf16.mxu0 0
        %1070 = vmatpush1.bf16.msra.mxu0 0
        %1071 = vmatprep.subr.bf16.mxu0 0
        %1072 = vmatpush1.bf16.msra.mxu0 0
        %1073 = vmatprep.subr.bf16.mxu0 0
        %1074 = vmatpush1.bf16.msra.mxu0 0
        %1075 = vmatprep.subr.bf16.mxu0 0
        %1076 = vmatpush1.bf16.msra.mxu0 0
        %1077 = vmatprep.subr.bf16.mxu0 0
        %1078 = vmatpush1.bf16.msra.mxu0 0
        %1079 = vmatprep.mubr.bf16.mxu0 0
        %1080 = vmatmul.mubr.bf16.gmra.mrb[0].mxu0 %v966
        %v1081 = vpop.f32.mrb[0].mxu0
        %v1082 = vadd.f32 0.0, %v1081
        %v1083 = vpop.f32.mrb[0].mxu0
        %v1084 = vpop.f32.mrb[0].mxu0
        %v1085 = vadd.f32 0.0, %v1084
        %v1086 = vpop.f32.mrb[0].mxu0
        %1087 = vmatprep.mubr.bf16.mxu0 0
        %1088 = vmatmul.mubr.bf16.gmra.mrb[0].mxu0 %v967
        %v1089 = vpop.f32.mrb[0].mxu0
        %v1090 = vadd.f32 0.0, %v1089
        %v1091 = vpop.f32.mrb[0].mxu0
        %v1092 = vpop.f32.mrb[0].mxu0
        %v1093 = vadd.f32 0.0, %v1092
        %v1094 = vpop.f32.mrb[0].mxu0
        %1095 = vmatprep.mubr.bf16.mxu0 0
        %1096 = vmatmul.mubr.bf16.gmra.mrb[0].mxu0 %v968
        %v1097 = vpop.f32.mrb[0].mxu0
        %v1098 = vadd.f32 0.0, %v1097
        %v1099 = vpop.f32.mrb[0].mxu0
        %v1100 = vpop.f32.mrb[0].mxu0
        %v1101 = vadd.f32 0.0, %v1100
        %v1102 = vpop.f32.mrb[0].mxu0
        %1103 = vmatprep.mubr.bf16.mxu0 0
        %1104 = vmatmul.mubr.bf16.gmra.mrb[0].mxu0 %v969
        %v1105 = vpop.f32.mrb[0].mxu0
        %v1106 = vadd.f32 0.0, %v1105
        %v1107 = vpop.f32.mrb[0].mxu0
        %v1108 = vpop.f32.mrb[0].mxu0
        %v1109 = vadd.f32 0.0, %v1108
        %v1110 = vpop.f32.mrb[0].mxu0
        %1111 = vmatprep.mubr.bf16.mxu0 0
        %1112 = vmatmul.mubr.bf16.gmra.mrb[0].mxu0 %v970
        %v1113 = vpop.f32.mrb[0].mxu0
        %v1114 = vadd.f32 0.0, %v1113
        %v1115 = vpop.f32.mrb[0].mxu0
        %v1116 = vpop.f32.mrb[0].mxu0
        %v1117 = vadd.f32 0.0, %v1116
        %v1118 = vpop.f32.mrb[0].mxu0
        %1119 = vmatprep.mubr.bf16.mxu0 0
        %1120 = vmatmul.mubr.bf16.gmra.mrb[0].mxu0 %v971
        %v1121 = vpop.f32.mrb[0].mxu0
        %v1122 = vadd.f32 0.0, %v1121
        %v1123 = vpop.f32.mrb[0].mxu0
        %v1124 = vpop.f32.mrb[0].mxu0
        %v1125 = vadd.f32 0.0, %v1124
        %v1126 = vpop.f32.mrb[0].mxu0
        %1127 = vmatprep.mubr.bf16.mxu0 0
        %1128 = vmatmul.mubr.bf16.gmra.mrb[0].mxu0 %v972
        %v1129 = vpop.f32.mrb[0].mxu0
        %v1130 = vadd.f32 0.0, %v1129
        %v1131 = vpop.f32.mrb[0].mxu0
        %v1132 = vpop.f32.mrb[0].mxu0
        %v1133 = vadd.f32 0.0, %v1132
        %v1134 = vpop.f32.mrb[0].mxu0
        %1135 = vmatprep.mubr.bf16.mxu0 0
        %1136 = vmatmul.mubr.bf16.gmra.mrb[0].mxu0 %v973
        %v1137 = vpop.f32.mrb[0].mxu0
        %v1138 = vadd.f32 0.0, %v1137
        %v1139 = vpop.f32.mrb[0].mxu0
        %v1140 = vpop.f32.mrb[0].mxu0
        %v1141 = vadd.f32 0.0, %v1140
        %v1142 = vpop.f32.mrb[0].mxu0
        %1143 = vmatprep.mubr.bf16.mxu0 0
        %1144 = vmatmul.mubr.bf16.gmra.mrb[0].mxu0 %v974
        %v1145 = vpop.f32.mrb[0].mxu0
        %v1146 = vadd.f32 0.0, %v1145
        %v1147 = vpop.f32.mrb[0].mxu0
        %v1148 = vpop.f32.mrb[0].mxu0
        %v1149 = vadd.f32 0.0, %v1148
        %v1150 = vpop.f32.mrb[0].mxu0
        %1151 = vmatprep.mubr.bf16.mxu0 0
        %1152 = vmatmul.mubr.bf16.gmra.mrb[0].mxu0 %v975
        %v1153 = vpop.f32.mrb[0].mxu0
        %v1154 = vadd.f32 0.0, %v1153
        %v1155 = vpop.f32.mrb[0].mxu0
        %v1156 = vpop.f32.mrb[0].mxu0
        %v1157 = vadd.f32 0.0, %v1156
        %v1158 = vpop.f32.mrb[0].mxu0
        %1159 = vmatprep.mubr.bf16.mxu0 0
        %1160 = vmatmul.mubr.bf16.gmra.mrb[0].mxu0 %v976
        %v1161 = vpop.f32.mrb[0].mxu0
        %v1162 = vadd.f32 0.0, %v1161
        %v1163 = vpop.f32.mrb[0].mxu0
        %v1164 = vpop.f32.mrb[0].mxu0
        %v1165 = vadd.f32 0.0, %v1164
        %v1166 = vpop.f32.mrb[0].mxu0
        %1167 = vmatprep.mubr.bf16.mxu0 0
        %1168 = vmatmul.mubr.bf16.gmra.mrb[0].mxu0 %v977
        %v1169 = vpop.f32.mrb[0].mxu0
        %v1170 = vadd.f32 0.0, %v1169
        %v1171 = vpop.f32.mrb[0].mxu0
        %v1172 = vpop.f32.mrb[0].mxu0
        %v1173 = vadd.f32 0.0, %v1172
        %v1174 = vpop.f32.mrb[0].mxu0
        %1175 = vmatprep.mubr.bf16.mxu0 0
        %1176 = vmatmul.mubr.bf16.gmra.mrb[0].mxu0 %v978
        %v1177 = vpop.f32.mrb[0].mxu0
        %v1178 = vadd.f32 0.0, %v1177
        %v1179 = vpop.f32.mrb[0].mxu0
        %v1180 = vpop.f32.mrb[0].mxu0
        %v1181 = vadd.f32 0.0, %v1180
        %v1182 = vpop.f32.mrb[0].mxu0
        %1183 = vmatprep.mubr.bf16.mxu0 0
        %1184 = vmatmul.mubr.bf16.gmra.mrb[0].mxu0 %v979
        %v1185 = vpop.f32.mrb[0].mxu0
        %v1186 = vadd.f32 0.0, %v1185
        %v1187 = vpop.f32.mrb[0].mxu0
        %v1188 = vpop.f32.mrb[0].mxu0
        %v1189 = vadd.f32 0.0, %v1188
        %v1190 = vpop.f32.mrb[0].mxu0
        %1191 = vmatprep.mubr.bf16.mxu0 0
        %1192 = vmatmul.mubr.bf16.gmra.mrb[0].mxu0 %v980
        %v1193 = vpop.f32.mrb[0].mxu0
        %v1194 = vadd.f32 0.0, %v1193
        %v1195 = vpop.f32.mrb[0].mxu0
        %v1196 = vpop.f32.mrb[0].mxu0
        %v1197 = vadd.f32 0.0, %v1196
        %v1198 = vpop.f32.mrb[0].mxu0
        %1199 = vmatprep.mubr.bf16.mxu0 0
        %1200 = vmatmul.mubr.bf16.gmra.mrb[0].mxu0 %v981
        %v1201 = vpop.f32.mrb[0].mxu0
        %v1202 = vadd.f32 0.0, %v1201
        %v1203 = vpop.f32.mrb[0].mxu0
        %v1204 = vpop.f32.mrb[0].mxu0
        %v1205 = vadd.f32 0.0, %v1204
        %v1206 = vpop.f32.mrb[0].mxu0
        %1207 = vdwg.mxu0
        %v1224 = vunpack.c.l.b16 %v918
        %v1225 = vunpack.c.l.b16 %v919
        %v1226 = vunpack.c.l.b16 %v920
        %v1227 = vunpack.c.l.b16 %v921
        %v1228 = vunpack.c.l.b16 %v922
        %v1229 = vunpack.c.l.b16 %v923
        %v1230 = vunpack.c.l.b16 %v924
        %v1231 = vunpack.c.l.b16 %v925
        %v1232 = vunpack.c.l.b16 %v926
        %v1233 = vunpack.c.l.b16 %v927
        %v1234 = vunpack.c.l.b16 %v928
        %v1235 = vunpack.c.l.b16 %v929
        %v1236 = vunpack.c.l.b16 %v930
        %v1237 = vunpack.c.l.b16 %v931
        %v1238 = vunpack.c.l.b16 %v932
        %v1239 = vunpack.c.l.b16 %v933
        %v1240 = vpack.c.b16 %v1225, %v1224
        %v1241 = vpack.c.b16 %v1227, %v1226
        %v1242 = vpack.c.b16 %v1229, %v1228
        %v1243 = vpack.c.b16 %v1231, %v1230
        %v1244 = vpack.c.b16 %v1233, %v1232
        %v1245 = vpack.c.b16 %v1235, %v1234
        %v1246 = vpack.c.b16 %v1237, %v1236
        %v1247 = vpack.c.b16 %v1239, %v1238
        %1256 = vmatprep.subr.bf16.mxu0 0
        %1257 = vmatpush1.bf16.msra.mxu0 %v1240
        %1258 = vmatprep.subr.bf16.mxu0 0
        %1259 = vmatpush1.bf16.msra.mxu0 %v1241
        %1260 = vmatprep.subr.bf16.mxu0 0
        %1261 = vmatpush1.bf16.msra.mxu0 %v1242
        %1262 = vmatprep.subr.bf16.mxu0 0
        %1263 = vmatpush1.bf16.msra.mxu0 %v1243
        %1264 = vmatprep.subr.bf16.mxu0 0
        %1265 = vmatpush1.bf16.msra.mxu0 %v1244
        %1266 = vmatprep.subr.bf16.mxu0 0
        %1267 = vmatpush1.bf16.msra.mxu0 %v1245
        %1268 = vmatprep.subr.bf16.mxu0 0
        %1269 = vmatpush1.bf16.msra.mxu0 %v1246
        %1270 = vmatprep.subr.bf16.mxu0 0
        %1271 = vmatpush1.bf16.msra.mxu0 %v1247
        %1272 = vmatprep.subr.bf16.mxu0 0
        %1273 = vmatpush1.bf16.msra.mxu0 0
        %1274 = vmatprep.subr.bf16.mxu0 0
        %1275 = vmatpush1.bf16.msra.mxu0 0
        %1276 = vmatprep.subr.bf16.mxu0 0
        %1277 = vmatpush1.bf16.msra.mxu0 0
        %1278 = vmatprep.subr.bf16.mxu0 0
        %1279 = vmatpush1.bf16.msra.mxu0 0
        %1280 = vmatprep.subr.bf16.mxu0 0
        %1281 = vmatpush1.bf16.msra.mxu0 0
        %1282 = vmatprep.subr.bf16.mxu0 0
        %1283 = vmatpush1.bf16.msra.mxu0 0
        %1284 = vmatprep.subr.bf16.mxu0 0
        %1285 = vmatpush1.bf16.msra.mxu0 0
        %1286 = vmatprep.subr.bf16.mxu0 0
        %1287 = vmatpush1.bf16.msra.mxu0 0
        %1288 = vmatprep.mubr.bf16.mxu0 0
        %1289 = vmatmul.mubr.bf16.gmra.mrb[0].mxu0 %v902
        %v1290 = vpop.f32.mrb[0].mxu0
        %v1291 = vadd.f32 %v1082, %v1290
        %v1292 = vpop.f32.mrb[0].mxu0
        %v1293 = vpop.f32.mrb[0].mxu0
        %v1294 = vadd.f32 %v1085, %v1293
        %v1295 = vpop.f32.mrb[0].mxu0
        %1296 = vmatprep.mubr.bf16.mxu0 0
        %1297 = vmatmul.mubr.bf16.gmra.mrb[0].mxu0 %v903
        %v1298 = vpop.f32.mrb[0].mxu0
        %v1299 = vadd.f32 %v1090, %v1298
        %v1300 = vpop.f32.mrb[0].mxu0
        %v1301 = vpop.f32.mrb[0].mxu0
        %v1302 = vadd.f32 %v1093, %v1301
        %v1303 = vpop.f32.mrb[0].mxu0
        %1304 = vmatprep.mubr.bf16.mxu0 0
        %1305 = vmatmul.mubr.bf16.gmra.mrb[0].mxu0 %v904
        %v1306 = vpop.f32.mrb[0].mxu0
        %v1307 = vadd.f32 %v1098, %v1306
        %v1308 = vpop.f32.mrb[0].mxu0
        %v1309 = vpop.f32.mrb[0].mxu0
        %v1310 = vadd.f32 %v1101, %v1309
        %v1311 = vpop.f32.mrb[0].mxu0
        %1312 = vmatprep.mubr.bf16.mxu0 0
        %1313 = vmatmul.mubr.bf16.gmra.mrb[0].mxu0 %v905
        %v1314 = vpop.f32.mrb[0].mxu0
        %v1315 = vadd.f32 %v1106, %v1314
        %v1316 = vpop.f32.mrb[0].mxu0
        %v1317 = vpop.f32.mrb[0].mxu0
        %v1318 = vadd.f32 %v1109, %v1317
        %v1319 = vpop.f32.mrb[0].mxu0
        %1320 = vmatprep.mubr.bf16.mxu0 0
        %1321 = vmatmul.mubr.bf16.gmra.mrb[0].mxu0 %v906
        %v1322 = vpop.f32.mrb[0].mxu0
        %v1323 = vadd.f32 %v1114, %v1322
        %v1324 = vpop.f32.mrb[0].mxu0
        %v1325 = vpop.f32.mrb[0].mxu0
        %v1326 = vadd.f32 %v1117, %v1325
        %v1327 = vpop.f32.mrb[0].mxu0
        %1328 = vmatprep.mubr.bf16.mxu0 0
        %1329 = vmatmul.mubr.bf16.gmra.mrb[0].mxu0 %v907
        %v1330 = vpop.f32.mrb[0].mxu0
        %v1331 = vadd.f32 %v1122, %v1330
        %v1332 = vpop.f32.mrb[0].mxu0
        %v1333 = vpop.f32.mrb[0].mxu0
        %v1334 = vadd.f32 %v1125, %v1333
        %v1335 = vpop.f32.mrb[0].mxu0
        %1336 = vmatprep.mubr.bf16.mxu0 0
        %1337 = vmatmul.mubr.bf16.gmra.mrb[0].mxu0 %v908
        %v1338 = vpop.f32.mrb[0].mxu0
        %v1339 = vadd.f32 %v1130, %v1338
        %v1340 = vpop.f32.mrb[0].mxu0
        %v1341 = vpop.f32.mrb[0].mxu0
        %v1342 = vadd.f32 %v1133, %v1341
        %v1343 = vpop.f32.mrb[0].mxu0
        %1344 = vmatprep.mubr.bf16.mxu0 0
        %1345 = vmatmul.mubr.bf16.gmra.mrb[0].mxu0 %v909
        %v1346 = vpop.f32.mrb[0].mxu0
        %v1347 = vadd.f32 %v1138, %v1346
        %v1348 = vpop.f32.mrb[0].mxu0
        %v1349 = vpop.f32.mrb[0].mxu0
        %v1350 = vadd.f32 %v1141, %v1349
        %v1351 = vpop.f32.mrb[0].mxu0
        %1352 = vmatprep.mubr.bf16.mxu0 0
        %1353 = vmatmul.mubr.bf16.gmra.mrb[0].mxu0 %v910
        %v1354 = vpop.f32.mrb[0].mxu0
        %v1355 = vadd.f32 %v1146, %v1354
        %v1356 = vpop.f32.mrb[0].mxu0
        %v1357 = vpop.f32.mrb[0].mxu0
        %v1358 = vadd.f32 %v1149, %v1357
        %v1359 = vpop.f32.mrb[0].mxu0
        %1360 = vmatprep.mubr.bf16.mxu0 0
        %1361 = vmatmul.mubr.bf16.gmra.mrb[0].mxu0 %v911
        %v1362 = vpop.f32.mrb[0].mxu0
        %v1363 = vadd.f32 %v1154, %v1362
        %v1364 = vpop.f32.mrb[0].mxu0
        %v1365 = vpop.f32.mrb[0].mxu0
        %v1366 = vadd.f32 %v1157, %v1365
        %v1367 = vpop.f32.mrb[0].mxu0
        %1368 = vmatprep.mubr.bf16.mxu0 0
        %1369 = vmatmul.mubr.bf16.gmra.mrb[0].mxu0 %v912
        %v1370 = vpop.f32.mrb[0].mxu0
        %v1371 = vadd.f32 %v1162, %v1370
        %v1372 = vpop.f32.mrb[0].mxu0
        %v1373 = vpop.f32.mrb[0].mxu0
        %v1374 = vadd.f32 %v1165, %v1373
        %v1375 = vpop.f32.mrb[0].mxu0
        %1376 = vmatprep.mubr.bf16.mxu0 0
        %1377 = vmatmul.mubr.bf16.gmra.mrb[0].mxu0 %v913
        %v1378 = vpop.f32.mrb[0].mxu0
        %v1379 = vadd.f32 %v1170, %v1378
        %v1380 = vpop.f32.mrb[0].mxu0
        %v1381 = vpop.f32.mrb[0].mxu0
        %v1382 = vadd.f32 %v1173, %v1381
        %v1383 = vpop.f32.mrb[0].mxu0
        %1384 = vmatprep.mubr.bf16.mxu0 0
        %1385 = vmatmul.mubr.bf16.gmra.mrb[0].mxu0 %v914
        %v1386 = vpop.f32.mrb[0].mxu0
        %v1387 = vadd.f32 %v1178, %v1386
        %v1388 = vpop.f32.mrb[0].mxu0
        %v1389 = vpop.f32.mrb[0].mxu0
        %v1390 = vadd.f32 %v1181, %v1389
        %v1391 = vpop.f32.mrb[0].mxu0
        %1392 = vmatprep.mubr.bf16.mxu0 0
        %1393 = vmatmul.mubr.bf16.gmra.mrb[0].mxu0 %v915
        %v1394 = vpop.f32.mrb[0].mxu0
        %v1395 = vadd.f32 %v1186, %v1394
        %v1396 = vpop.f32.mrb[0].mxu0
        %v1397 = vpop.f32.mrb[0].mxu0
        %v1398 = vadd.f32 %v1189, %v1397
        %v1399 = vpop.f32.mrb[0].mxu0
        %1400 = vmatprep.mubr.bf16.mxu0 0
        %1401 = vmatmul.mubr.bf16.gmra.mrb[0].mxu0 %v916
        %v1402 = vpop.f32.mrb[0].mxu0
        %v1403 = vadd.f32 %v1194, %v1402
        %v1404 = vpop.f32.mrb[0].mxu0
        %v1405 = vpop.f32.mrb[0].mxu0
        %v1406 = vadd.f32 %v1197, %v1405
        %v1407 = vpop.f32.mrb[0].mxu0
        %1408 = vmatprep.mubr.bf16.mxu0 0
        %1409 = vmatmul.mubr.bf16.gmra.mrb[0].mxu0 %v917
        %v1410 = vpop.f32.mrb[0].mxu0
        %v1411 = vadd.f32 %v1202, %v1410
        %v1412 = vpop.f32.mrb[0].mxu0
        %v1413 = vpop.f32.mrb[0].mxu0
        %v1414 = vadd.f32 %v1205, %v1413
        %v1415 = vpop.f32.mrb[0].mxu0
        %1416 = vdwg.mxu0
        %v1417 = vld [vmem:[#allocation2 + $0x2] sm:$0xff]
        %v1418 = vld [vmem:[#allocation2 + $0xa] sm:$0xff]
        %v1419 = vld [vmem:[#allocation2 + $0x1a] sm:$0xff]
        %v1420 = vld [vmem:[#allocation2 + $0x22] sm:$0xff]
        %v1421 = vld [vmem:[#allocation2 + $0x32] sm:$0xff]
        %v1422 = vld [vmem:[#allocation2 + $0x3a] sm:$0xff]
        %v1423 = vld [vmem:[#allocation2 + $0x4a] sm:$0xff]
        %v1424 = vld [vmem:[#allocation2 + $0x52] sm:$0xff]
        %v1425 = vld [vmem:[#allocation2 + $0x62] sm:$0xff]
        %v1426 = vld [vmem:[#allocation2 + $0x6a] sm:$0xff]
        %v1427 = vld [vmem:[#allocation2 + $0x7a] sm:$0xff]
        %v1428 = vld [vmem:[#allocation2 + $0x82] sm:$0xff]
        %v1429 = vld [vmem:[#allocation2 + $0x92] sm:$0xff]
        %v1430 = vld [vmem:[#allocation2 + $0x9a] sm:$0xff]
        %v1431 = vld [vmem:[#allocation2 + $0xaa] sm:$0xff]
        %v1432 = vld [vmem:[#allocation2 + $0xb2] sm:$0xff]
        %v1433 = vld [vmem:[#allocation2 + $0xc2] sm:$0xff]
        %v1434 = vld [vmem:[#allocation2 + $0xca] sm:$0xff]
        %v1435 = vld [vmem:[#allocation2 + $0xda] sm:$0xff]
        %v1436 = vld [vmem:[#allocation2 + $0xe2] sm:$0xff]
        %v1437 = vld [vmem:[#allocation2 + $0xf2] sm:$0xff]
        %v1438 = vld [vmem:[#allocation2 + $0xfa] sm:$0xff]
        %v1439 = vld [vmem:[#allocation2 + $0x10a] sm:$0xff]
        %v1440 = vld [vmem:[#allocation2 + $0x112] sm:$0xff]
        %v1441 = vld [vmem:[#allocation2 + $0x122] sm:$0xff]
        %v1442 = vld [vmem:[#allocation2 + $0x12a] sm:$0xff]
        %v1443 = vld [vmem:[#allocation2 + $0x13a] sm:$0xff]
        %v1444 = vld [vmem:[#allocation2 + $0x142] sm:$0xff]
        %v1445 = vld [vmem:[#allocation2 + $0x152] sm:$0xff]
        %v1446 = vld [vmem:[#allocation2 + $0x15a] sm:$0xff]
        %v1447 = vld [vmem:[#allocation2 + $0x16a] sm:$0xff]
        %v1448 = vld [vmem:[#allocation2 + $0x172] sm:$0xff]
        %v1449 = vpack.c.bf16 %v1418, %v1417
        %v1450 = vpack.c.bf16 %v1420, %v1419
        %v1451 = vpack.c.bf16 %v1422, %v1421
        %v1452 = vpack.c.bf16 %v1424, %v1423
        %v1453 = vpack.c.bf16 %v1426, %v1425
        %v1454 = vpack.c.bf16 %v1428, %v1427
        %v1455 = vpack.c.bf16 %v1430, %v1429
        %v1456 = vpack.c.bf16 %v1432, %v1431
        %v1457 = vpack.c.bf16 %v1434, %v1433
        %v1458 = vpack.c.bf16 %v1436, %v1435
        %v1459 = vpack.c.bf16 %v1438, %v1437
        %v1460 = vpack.c.bf16 %v1440, %v1439
        %v1461 = vpack.c.bf16 %v1442, %v1441
        %v1462 = vpack.c.bf16 %v1444, %v1443
        %v1463 = vpack.c.bf16 %v1446, %v1445
        %v1464 = vpack.c.bf16 %v1448, %v1447
        %s1465 = scalar_lea.vmem [#allocation8], 128
        %v1466 = vld [vmem:[%s1465] sm:$0xf]
        %v1467 = vld [vmem:[%s1465 + $0x4] sm:$0xf]
        %v1468 = vld [vmem:[%s1465 + $0x8] sm:$0xf]
        %v1469 = vld [vmem:[%s1465 + $0xc] sm:$0xf]
        %v1470 = vld [vmem:[%s1465 + $0x10] sm:$0xf]
        %v1471 = vld [vmem:[%s1465 + $0x14] sm:$0xf]
        %v1472 = vld [vmem:[%s1465 + $0x18] sm:$0xf]
        %v1473 = vld [vmem:[%s1465 + $0x1c] sm:$0xf]
        %v1474 = vld [vmem:[%s1465 + $0x20] sm:$0xf]
        %v1475 = vld [vmem:[%s1465 + $0x24] sm:$0xf]
        %v1476 = vld [vmem:[%s1465 + $0x28] sm:$0xf]
        %v1477 = vld [vmem:[%s1465 + $0x2c] sm:$0xf]
        %v1478 = vld [vmem:[%s1465 + $0x30] sm:$0xf]
        %v1479 = vld [vmem:[%s1465 + $0x34] sm:$0xf]
        %v1480 = vld [vmem:[%s1465 + $0x38] sm:$0xf]
        %v1481 = vld [vmem:[%s1465 + $0x3c] sm:$0xf]
        %v1498 = vunpack.c.l.b16 %v1466
        %v1499 = vunpack.c.l.b16 %v1467
        %v1500 = vunpack.c.l.b16 %v1468
        %v1501 = vunpack.c.l.b16 %v1469
        %v1502 = vunpack.c.l.b16 %v1470
        %v1503 = vunpack.c.l.b16 %v1471
        %v1504 = vunpack.c.l.b16 %v1472
        %v1505 = vunpack.c.l.b16 %v1473
        %v1506 = vunpack.c.l.b16 %v1474
        %v1507 = vunpack.c.l.b16 %v1475
        %v1508 = vunpack.c.l.b16 %v1476
        %v1509 = vunpack.c.l.b16 %v1477
        %v1510 = vunpack.c.l.b16 %v1478
        %v1511 = vunpack.c.l.b16 %v1479
        %v1512 = vunpack.c.l.b16 %v1480
        %v1513 = vunpack.c.l.b16 %v1481
        %v1514 = vpack.c.b16 %v1499, %v1498
        %v1515 = vpack.c.b16 %v1501, %v1500
        %v1516 = vpack.c.b16 %v1503, %v1502
        %v1517 = vpack.c.b16 %v1505, %v1504
        %v1518 = vpack.c.b16 %v1507, %v1506
        %v1519 = vpack.c.b16 %v1509, %v1508
        %v1520 = vpack.c.b16 %v1511, %v1510
        %v1521 = vpack.c.b16 %v1513, %v1512
        %1530 = vmatprep.subr.bf16.mxu0 0
        %1531 = vmatpush1.bf16.msra.mxu0 %v1514
        %1532 = vmatprep.subr.bf16.mxu0 0
        %1533 = vmatpush1.bf16.msra.mxu0 %v1515
        %1534 = vmatprep.subr.bf16.mxu0 0
        %1535 = vmatpush1.bf16.msra.mxu0 %v1516
        %1536 = vmatprep.subr.bf16.mxu0 0
        %1537 = vmatpush1.bf16.msra.mxu0 %v1517
        %1538 = vmatprep.subr.bf16.mxu0 0
        %1539 = vmatpush1.bf16.msra.mxu0 %v1518
        %1540 = vmatprep.subr.bf16.mxu0 0
        %1541 = vmatpush1.bf16.msra.mxu0 %v1519
        %1542 = vmatprep.subr.bf16.mxu0 0
        %1543 = vmatpush1.bf16.msra.mxu0 %v1520
        %1544 = vmatprep.subr.bf16.mxu0 0
        %1545 = vmatpush1.bf16.msra.mxu0 %v1521
        %1546 = vmatprep.subr.bf16.mxu0 0
        %1547 = vmatpush1.bf16.msra.mxu0 0
        %1548 = vmatprep.subr.bf16.mxu0 0
        %1549 = vmatpush1.bf16.msra.mxu0 0
        %1550 = vmatprep.subr.bf16.mxu0 0
        %1551 = vmatpush1.bf16.msra.mxu0 0
        %1552 = vmatprep.subr.bf16.mxu0 0
        %1553 = vmatpush1.bf16.msra.mxu0 0
        %1554 = vmatprep.subr.bf16.mxu0 0
        %1555 = vmatpush1.bf16.msra.mxu0 0
        %1556 = vmatprep.subr.bf16.mxu0 0
        %1557 = vmatpush1.bf16.msra.mxu0 0
        %1558 = vmatprep.subr.bf16.mxu0 0
        %1559 = vmatpush1.bf16.msra.mxu0 0
        %1560 = vmatprep.subr.bf16.mxu0 0
        %1561 = vmatpush1.bf16.msra.mxu0 0
        %1562 = vmatprep.mubr.bf16.mxu0 0
        %1563 = vmatmul.mubr.bf16.gmra.mrb[0].mxu0 %v1449
        %v1564 = vpop.f32.mrb[0].mxu0
        %v1565 = vadd.f32 0.0, %v1564
        %v1566 = vpop.f32.mrb[0].mxu0
        %v1567 = vpop.f32.mrb[0].mxu0
        %v1568 = vadd.f32 0.0, %v1567
        %v1569 = vpop.f32.mrb[0].mxu0
        %1570 = vmatprep.mubr.bf16.mxu0 0
        %1571 = vmatmul.mubr.bf16.gmra.mrb[0].mxu0 %v1450
        %v1572 = vpop.f32.mrb[0].mxu0
        %v1573 = vadd.f32 0.0, %v1572
        %v1574 = vpop.f32.mrb[0].mxu0
        %v1575 = vpop.f32.mrb[0].mxu0
        %v1576 = vadd.f32 0.0, %v1575
        %v1577 = vpop.f32.mrb[0].mxu0
        %1578 = vmatprep.mubr.bf16.mxu0 0
        %1579 = vmatmul.mubr.bf16.gmra.mrb[0].mxu0 %v1451
        %v1580 = vpop.f32.mrb[0].mxu0
        %v1581 = vadd.f32 0.0, %v1580
        %v1582 = vpop.f32.mrb[0].mxu0
        %v1583 = vpop.f32.mrb[0].mxu0
        %v1584 = vadd.f32 0.0, %v1583
        %v1585 = vpop.f32.mrb[0].mxu0
        %1586 = vmatprep.mubr.bf16.mxu0 0
        %1587 = vmatmul.mubr.bf16.gmra.mrb[0].mxu0 %v1452
        %v1588 = vpop.f32.mrb[0].mxu0
        %v1589 = vadd.f32 0.0, %v1588
        %v1590 = vpop.f32.mrb[0].mxu0
        %v1591 = vpop.f32.mrb[0].mxu0
        %v1592 = vadd.f32 0.0, %v1591
        %v1593 = vpop.f32.mrb[0].mxu0
        %1594 = vmatprep.mubr.bf16.mxu0 0
        %1595 = vmatmul.mubr.bf16.gmra.mrb[0].mxu0 %v1453
        %v1596 = vpop.f32.mrb[0].mxu0
        %v1597 = vadd.f32 0.0, %v1596
        %v1598 = vpop.f32.mrb[0].mxu0
        %v1599 = vpop.f32.mrb[0].mxu0
        %v1600 = vadd.f32 0.0, %v1599
        %v1601 = vpop.f32.mrb[0].mxu0
        %1602 = vmatprep.mubr.bf16.mxu0 0
        %1603 = vmatmul.mubr.bf16.gmra.mrb[0].mxu0 %v1454
        %v1604 = vpop.f32.mrb[0].mxu0
        %v1605 = vadd.f32 0.0, %v1604
        %v1606 = vpop.f32.mrb[0].mxu0
        %v1607 = vpop.f32.mrb[0].mxu0
        %v1608 = vadd.f32 0.0, %v1607
        %v1609 = vpop.f32.mrb[0].mxu0
        %1610 = vmatprep.mubr.bf16.mxu0 0
        %1611 = vmatmul.mubr.bf16.gmra.mrb[0].mxu0 %v1455
        %v1612 = vpop.f32.mrb[0].mxu0
        %v1613 = vadd.f32 0.0, %v1612
        %v1614 = vpop.f32.mrb[0].mxu0
        %v1615 = vpop.f32.mrb[0].mxu0
        %v1616 = vadd.f32 0.0, %v1615
        %v1617 = vpop.f32.mrb[0].mxu0
        %1618 = vmatprep.mubr.bf16.mxu0 0
        %1619 = vmatmul.mubr.bf16.gmra.mrb[0].mxu0 %v1456
        %v1620 = vpop.f32.mrb[0].mxu0
        %v1621 = vadd.f32 0.0, %v1620
        %v1622 = vpop.f32.mrb[0].mxu0
        %v1623 = vpop.f32.mrb[0].mxu0
        %v1624 = vadd.f32 0.0, %v1623
        %v1625 = vpop.f32.mrb[0].mxu0
        %1626 = vmatprep.mubr.bf16.mxu0 0
        %1627 = vmatmul.mubr.bf16.gmra.mrb[0].mxu0 %v1457
        %v1628 = vpop.f32.mrb[0].mxu0
        %v1629 = vadd.f32 0.0, %v1628
        %v1630 = vpop.f32.mrb[0].mxu0
        %v1631 = vpop.f32.mrb[0].mxu0
        %v1632 = vadd.f32 0.0, %v1631
        %v1633 = vpop.f32.mrb[0].mxu0
        %1634 = vmatprep.mubr.bf16.mxu0 0
        %1635 = vmatmul.mubr.bf16.gmra.mrb[0].mxu0 %v1458
        %v1636 = vpop.f32.mrb[0].mxu0
        %v1637 = vadd.f32 0.0, %v1636
        %v1638 = vpop.f32.mrb[0].mxu0
        %v1639 = vpop.f32.mrb[0].mxu0
        %v1640 = vadd.f32 0.0, %v1639
        %v1641 = vpop.f32.mrb[0].mxu0
        %1642 = vmatprep.mubr.bf16.mxu0 0
        %1643 = vmatmul.mubr.bf16.gmra.mrb[0].mxu0 %v1459
        %v1644 = vpop.f32.mrb[0].mxu0
        %v1645 = vadd.f32 0.0, %v1644
        %v1646 = vpop.f32.mrb[0].mxu0
        %v1647 = vpop.f32.mrb[0].mxu0
        %v1648 = vadd.f32 0.0, %v1647
        %v1649 = vpop.f32.mrb[0].mxu0
        %1650 = vmatprep.mubr.bf16.mxu0 0
        %1651 = vmatmul.mubr.bf16.gmra.mrb[0].mxu0 %v1460
        %v1652 = vpop.f32.mrb[0].mxu0
        %v1653 = vadd.f32 0.0, %v1652
        %v1654 = vpop.f32.mrb[0].mxu0
        %v1655 = vpop.f32.mrb[0].mxu0
        %v1656 = vadd.f32 0.0, %v1655
        %v1657 = vpop.f32.mrb[0].mxu0
        %1658 = vmatprep.mubr.bf16.mxu0 0
        %1659 = vmatmul.mubr.bf16.gmra.mrb[0].mxu0 %v1461
        %v1660 = vpop.f32.mrb[0].mxu0
        %v1661 = vadd.f32 0.0, %v1660
        %v1662 = vpop.f32.mrb[0].mxu0
        %v1663 = vpop.f32.mrb[0].mxu0
        %v1664 = vadd.f32 0.0, %v1663
        %v1665 = vpop.f32.mrb[0].mxu0
        %1666 = vmatprep.mubr.bf16.mxu0 0
        %1667 = vmatmul.mubr.bf16.gmra.mrb[0].mxu0 %v1462
        %v1668 = vpop.f32.mrb[0].mxu0
        %v1669 = vadd.f32 0.0, %v1668
        %v1670 = vpop.f32.mrb[0].mxu0
        %v1671 = vpop.f32.mrb[0].mxu0
        %v1672 = vadd.f32 0.0, %v1671
        %v1673 = vpop.f32.mrb[0].mxu0
        %1674 = vmatprep.mubr.bf16.mxu0 0
        %1675 = vmatmul.mubr.bf16.gmra.mrb[0].mxu0 %v1463
        %v1676 = vpop.f32.mrb[0].mxu0
        %v1677 = vadd.f32 0.0, %v1676
        %v1678 = vpop.f32.mrb[0].mxu0
        %v1679 = vpop.f32.mrb[0].mxu0
        %v1680 = vadd.f32 0.0, %v1679
        %v1681 = vpop.f32.mrb[0].mxu0
        %1682 = vmatprep.mubr.bf16.mxu0 0
        %1683 = vmatmul.mubr.bf16.gmra.mrb[0].mxu0 %v1464
        %v1684 = vpop.f32.mrb[0].mxu0
        %v1685 = vadd.f32 0.0, %v1684
        %v1686 = vpop.f32.mrb[0].mxu0
        %v1687 = vpop.f32.mrb[0].mxu0
        %v1688 = vadd.f32 0.0, %v1687
        %v1689 = vpop.f32.mrb[0].mxu0
        %1690 = vdwg.mxu0
        %v1691 = vadd.f32 %v1291, %v1565
        %v1692 = vadd.f32 %v1294, %v1568
        %v1693 = vadd.f32 %v1299, %v1573
        %v1694 = vadd.f32 %v1302, %v1576
        %v1695 = vadd.f32 %v1307, %v1581
        %v1696 = vadd.f32 %v1310, %v1584
        %v1697 = vadd.f32 %v1315, %v1589
        %v1698 = vadd.f32 %v1318, %v1592
        %v1699 = vadd.f32 %v1323, %v1597
        %v1700 = vadd.f32 %v1326, %v1600
        %v1701 = vadd.f32 %v1331, %v1605
        %v1702 = vadd.f32 %v1334, %v1608
        %v1703 = vadd.f32 %v1339, %v1613
        %v1704 = vadd.f32 %v1342, %v1616
        %v1705 = vadd.f32 %v1347, %v1621
        %v1706 = vadd.f32 %v1350, %v1624
        %v1707 = vadd.f32 %v1355, %v1629
        %v1708 = vadd.f32 %v1358, %v1632
        %v1709 = vadd.f32 %v1363, %v1637
        %v1710 = vadd.f32 %v1366, %v1640
        %v1711 = vadd.f32 %v1371, %v1645
        %v1712 = vadd.f32 %v1374, %v1648
        %v1713 = vadd.f32 %v1379, %v1653
        %v1714 = vadd.f32 %v1382, %v1656
        %v1715 = vadd.f32 %v1387, %v1661
        %v1716 = vadd.f32 %v1390, %v1664
        %v1717 = vadd.f32 %v1395, %v1669
        %v1718 = vadd.f32 %v1398, %v1672
        %v1719 = vadd.f32 %v1403, %v1677
        %v1720 = vadd.f32 %v1406, %v1680
        %v1721 = vadd.f32 %v1411, %v1685
        %v1722 = vadd.f32 %v1414, %v1688
        %v1723 = vld [vmem:[%s805] sm:$0xff]
        %v1724 = vld [vmem:[%s805 + $0x8] sm:$0xff]
        %v1725 = vld [vmem:[%s805 + $0x18] sm:$0xff]
        %v1726 = vld [vmem:[%s805 + $0x20] sm:$0xff]
        %v1727 = vld [vmem:[%s805 + $0x30] sm:$0xff]
        %v1728 = vld [vmem:[%s805 + $0x38] sm:$0xff]
        %v1729 = vld [vmem:[%s805 + $0x48] sm:$0xff]
        %v1730 = vld [vmem:[%s805 + $0x50] sm:$0xff]
        %v1731 = vld [vmem:[%s805 + $0x60] sm:$0xff]
        %v1732 = vld [vmem:[%s805 + $0x68] sm:$0xff]
        %v1733 = vld [vmem:[%s805 + $0x78] sm:$0xff]
        %v1734 = vld [vmem:[%s805 + $0x80] sm:$0xff]
        %v1735 = vld [vmem:[%s805 + $0x90] sm:$0xff]
        %v1736 = vld [vmem:[%s805 + $0x98] sm:$0xff]
        %v1737 = vld [vmem:[%s805 + $0xa8] sm:$0xff]
        %v1738 = vld [vmem:[%s805 + $0xb0] sm:$0xff]
        %v1739 = vld [vmem:[%s805 + $0xc0] sm:$0xff]
        %v1740 = vld [vmem:[%s805 + $0xc8] sm:$0xff]
        %v1741 = vld [vmem:[%s805 + $0xd8] sm:$0xff]
        %v1742 = vld [vmem:[%s805 + $0xe0] sm:$0xff]
        %v1743 = vld [vmem:[%s805 + $0xf0] sm:$0xff]
        %v1744 = vld [vmem:[%s805 + $0xf8] sm:$0xff]
        %v1745 = vld [vmem:[%s805 + $0x108] sm:$0xff]
        %v1746 = vld [vmem:[%s805 + $0x110] sm:$0xff]
        %v1747 = vld [vmem:[%s805 + $0x120] sm:$0xff]
        %v1748 = vld [vmem:[%s805 + $0x128] sm:$0xff]
        %v1749 = vld [vmem:[%s805 + $0x138] sm:$0xff]
        %v1750 = vld [vmem:[%s805 + $0x140] sm:$0xff]
        %v1751 = vld [vmem:[%s805 + $0x150] sm:$0xff]
        %v1752 = vld [vmem:[%s805 + $0x158] sm:$0xff]
        %v1753 = vld [vmem:[%s805 + $0x168] sm:$0xff]
        %v1754 = vld [vmem:[%s805 + $0x170] sm:$0xff]
        %v1755 = vpack.c.bf16 %v1724, %v1723
        %v1756 = vpack.c.bf16 %v1726, %v1725
        %v1757 = vpack.c.bf16 %v1728, %v1727
        %v1758 = vpack.c.bf16 %v1730, %v1729
        %v1759 = vpack.c.bf16 %v1732, %v1731
        %v1760 = vpack.c.bf16 %v1734, %v1733
        %v1761 = vpack.c.bf16 %v1736, %v1735
        %v1762 = vpack.c.bf16 %v1738, %v1737
        %v1763 = vpack.c.bf16 %v1740, %v1739
        %v1764 = vpack.c.bf16 %v1742, %v1741
        %v1765 = vpack.c.bf16 %v1744, %v1743
        %v1766 = vpack.c.bf16 %v1746, %v1745
        %v1767 = vpack.c.bf16 %v1748, %v1747
        %v1768 = vpack.c.bf16 %v1750, %v1749
        %v1769 = vpack.c.bf16 %v1752, %v1751
        %v1770 = vpack.c.bf16 %v1754, %v1753
        %s1771 = scalar_lea.vmem [#allocation8], 192
        %v1772 = vld [vmem:[%s1771] sm:$0xf]
        %v1773 = vld [vmem:[%s1771 + $0x4] sm:$0xf]
        %v1774 = vld [vmem:[%s1771 + $0x8] sm:$0xf]
        %v1775 = vld [vmem:[%s1771 + $0xc] sm:$0xf]
        %v1776 = vld [vmem:[%s1771 + $0x10] sm:$0xf]
        %v1777 = vld [vmem:[%s1771 + $0x14] sm:$0xf]
        %v1778 = vld [vmem:[%s1771 + $0x18] sm:$0xf]
        %v1779 = vld [vmem:[%s1771 + $0x1c] sm:$0xf]
        %v1780 = vld [vmem:[%s1771 + $0x20] sm:$0xf]
        %v1781 = vld [vmem:[%s1771 + $0x24] sm:$0xf]
        %v1782 = vld [vmem:[%s1771 + $0x28] sm:$0xf]
        %v1783 = vld [vmem:[%s1771 + $0x2c] sm:$0xf]
        %v1784 = vld [vmem:[%s1771 + $0x30] sm:$0xf]
        %v1785 = vld [vmem:[%s1771 + $0x34] sm:$0xf]
        %v1786 = vld [vmem:[%s1771 + $0x38] sm:$0xf]
        %v1787 = vld [vmem:[%s1771 + $0x3c] sm:$0xf]
        %v1804 = vunpack.c.l.b16 %v1772
        %v1805 = vunpack.c.l.b16 %v1773
        %v1806 = vunpack.c.l.b16 %v1774
        %v1807 = vunpack.c.l.b16 %v1775
        %v1808 = vunpack.c.l.b16 %v1776
        %v1809 = vunpack.c.l.b16 %v1777
        %v1810 = vunpack.c.l.b16 %v1778
        %v1811 = vunpack.c.l.b16 %v1779
        %v1812 = vunpack.c.l.b16 %v1780
        %v1813 = vunpack.c.l.b16 %v1781
        %v1814 = vunpack.c.l.b16 %v1782
        %v1815 = vunpack.c.l.b16 %v1783
        %v1816 = vunpack.c.l.b16 %v1784
        %v1817 = vunpack.c.l.b16 %v1785
        %v1818 = vunpack.c.l.b16 %v1786
        %v1819 = vunpack.c.l.b16 %v1787
        %v1820 = vpack.c.b16 %v1805, %v1804
        %v1821 = vpack.c.b16 %v1807, %v1806
        %v1822 = vpack.c.b16 %v1809, %v1808
        %v1823 = vpack.c.b16 %v1811, %v1810
        %v1824 = vpack.c.b16 %v1813, %v1812
        %v1825 = vpack.c.b16 %v1815, %v1814
        %v1826 = vpack.c.b16 %v1817, %v1816
        %v1827 = vpack.c.b16 %v1819, %v1818
        %1836 = vmatprep.subr.bf16.mxu0 0
        %1837 = vmatpush1.bf16.msra.mxu0 %v1820
        %1838 = vmatprep.subr.bf16.mxu0 0
        %1839 = vmatpush1.bf16.msra.mxu0 %v1821
        %1840 = vmatprep.subr.bf16.mxu0 0
        %1841 = vmatpush1.bf16.msra.mxu0 %v1822
        %1842 = vmatprep.subr.bf16.mxu0 0
        %1843 = vmatpush1.bf16.msra.mxu0 %v1823
        %1844 = vmatprep.subr.bf16.mxu0 0
        %1845 = vmatpush1.bf16.msra.mxu0 %v1824
        %1846 = vmatprep.subr.bf16.mxu0 0
        %1847 = vmatpush1.bf16.msra.mxu0 %v1825
        %1848 = vmatprep.subr.bf16.mxu0 0
        %1849 = vmatpush1.bf16.msra.mxu0 %v1826
        %1850 = vmatprep.subr.bf16.mxu0 0
        %1851 = vmatpush1.bf16.msra.mxu0 %v1827
        %1852 = vmatprep.subr.bf16.mxu0 0
        %1853 = vmatpush1.bf16.msra.mxu0 0
        %1854 = vmatprep.subr.bf16.mxu0 0
        %1855 = vmatpush1.bf16.msra.mxu0 0
        %1856 = vmatprep.subr.bf16.mxu0 0
        %1857 = vmatpush1.bf16.msra.mxu0 0
        %1858 = vmatprep.subr.bf16.mxu0 0
        %1859 = vmatpush1.bf16.msra.mxu0 0
        %1860 = vmatprep.subr.bf16.mxu0 0
        %1861 = vmatpush1.bf16.msra.mxu0 0
        %1862 = vmatprep.subr.bf16.mxu0 0
        %1863 = vmatpush1.bf16.msra.mxu0 0
        %1864 = vmatprep.subr.bf16.mxu0 0
        %1865 = vmatpush1.bf16.msra.mxu0 0
        %1866 = vmatprep.subr.bf16.mxu0 0
        %1867 = vmatpush1.bf16.msra.mxu0 0
        %1868 = vmatprep.mubr.bf16.mxu0 0
        %1869 = vmatmul.mubr.bf16.gmra.mrb[0].mxu0 %v1755
        %v1870 = vpop.f32.mrb[0].mxu0
        %v1871 = vadd.f32 0.0, %v1870
        %v1872 = vpop.f32.mrb[0].mxu0
        %v1873 = vpop.f32.mrb[0].mxu0
        %v1874 = vadd.f32 0.0, %v1873
        %v1875 = vpop.f32.mrb[0].mxu0
        %1876 = vmatprep.mubr.bf16.mxu0 0
        %1877 = vmatmul.mubr.bf16.gmra.mrb[0].mxu0 %v1756
        %v1878 = vpop.f32.mrb[0].mxu0
        %v1879 = vadd.f32 0.0, %v1878
        %v1880 = vpop.f32.mrb[0].mxu0
        %v1881 = vpop.f32.mrb[0].mxu0
        %v1882 = vadd.f32 0.0, %v1881
        %v1883 = vpop.f32.mrb[0].mxu0
        %1884 = vmatprep.mubr.bf16.mxu0 0
        %1885 = vmatmul.mubr.bf16.gmra.mrb[0].mxu0 %v1757
        %v1886 = vpop.f32.mrb[0].mxu0
        %v1887 = vadd.f32 0.0, %v1886
        %v1888 = vpop.f32.mrb[0].mxu0
        %v1889 = vpop.f32.mrb[0].mxu0
        %v1890 = vadd.f32 0.0, %v1889
        %v1891 = vpop.f32.mrb[0].mxu0
        %1892 = vmatprep.mubr.bf16.mxu0 0
        %1893 = vmatmul.mubr.bf16.gmra.mrb[0].mxu0 %v1758
        %v1894 = vpop.f32.mrb[0].mxu0
        %v1895 = vadd.f32 0.0, %v1894
        %v1896 = vpop.f32.mrb[0].mxu0
        %v1897 = vpop.f32.mrb[0].mxu0
        %v1898 = vadd.f32 0.0, %v1897
        %v1899 = vpop.f32.mrb[0].mxu0
        %1900 = vmatprep.mubr.bf16.mxu0 0
        %1901 = vmatmul.mubr.bf16.gmra.mrb[0].mxu0 %v1759
        %v1902 = vpop.f32.mrb[0].mxu0
        %v1903 = vadd.f32 0.0, %v1902
        %v1904 = vpop.f32.mrb[0].mxu0
        %v1905 = vpop.f32.mrb[0].mxu0
        %v1906 = vadd.f32 0.0, %v1905
        %v1907 = vpop.f32.mrb[0].mxu0
        %1908 = vmatprep.mubr.bf16.mxu0 0
        %1909 = vmatmul.mubr.bf16.gmra.mrb[0].mxu0 %v1760
        %v1910 = vpop.f32.mrb[0].mxu0
        %v1911 = vadd.f32 0.0, %v1910
        %v1912 = vpop.f32.mrb[0].mxu0
        %v1913 = vpop.f32.mrb[0].mxu0
        %v1914 = vadd.f32 0.0, %v1913
        %v1915 = vpop.f32.mrb[0].mxu0
        %1916 = vmatprep.mubr.bf16.mxu0 0
        %1917 = vmatmul.mubr.bf16.gmra.mrb[0].mxu0 %v1761
        %v1918 = vpop.f32.mrb[0].mxu0
        %v1919 = vadd.f32 0.0, %v1918
        %v1920 = vpop.f32.mrb[0].mxu0
        %v1921 = vpop.f32.mrb[0].mxu0
        %v1922 = vadd.f32 0.0, %v1921
        %v1923 = vpop.f32.mrb[0].mxu0
        %1924 = vmatprep.mubr.bf16.mxu0 0
        %1925 = vmatmul.mubr.bf16.gmra.mrb[0].mxu0 %v1762
        %v1926 = vpop.f32.mrb[0].mxu0
        %v1927 = vadd.f32 0.0, %v1926
        %v1928 = vpop.f32.mrb[0].mxu0
        %v1929 = vpop.f32.mrb[0].mxu0
        %v1930 = vadd.f32 0.0, %v1929
        %v1931 = vpop.f32.mrb[0].mxu0
        %1932 = vmatprep.mubr.bf16.mxu0 0
        %1933 = vmatmul.mubr.bf16.gmra.mrb[0].mxu0 %v1763
        %v1934 = vpop.f32.mrb[0].mxu0
        %v1935 = vadd.f32 0.0, %v1934
        %v1936 = vpop.f32.mrb[0].mxu0
        %v1937 = vpop.f32.mrb[0].mxu0
        %v1938 = vadd.f32 0.0, %v1937
        %v1939 = vpop.f32.mrb[0].mxu0
        %1940 = vmatprep.mubr.bf16.mxu0 0
        %1941 = vmatmul.mubr.bf16.gmra.mrb[0].mxu0 %v1764
        %v1942 = vpop.f32.mrb[0].mxu0
        %v1943 = vadd.f32 0.0, %v1942
        %v1944 = vpop.f32.mrb[0].mxu0
        %v1945 = vpop.f32.mrb[0].mxu0
        %v1946 = vadd.f32 0.0, %v1945
        %v1947 = vpop.f32.mrb[0].mxu0
        %1948 = vmatprep.mubr.bf16.mxu0 0
        %1949 = vmatmul.mubr.bf16.gmra.mrb[0].mxu0 %v1765
        %v1950 = vpop.f32.mrb[0].mxu0
        %v1951 = vadd.f32 0.0, %v1950
        %v1952 = vpop.f32.mrb[0].mxu0
        %v1953 = vpop.f32.mrb[0].mxu0
        %v1954 = vadd.f32 0.0, %v1953
        %v1955 = vpop.f32.mrb[0].mxu0
        %1956 = vmatprep.mubr.bf16.mxu0 0
        %1957 = vmatmul.mubr.bf16.gmra.mrb[0].mxu0 %v1766
        %v1958 = vpop.f32.mrb[0].mxu0
        %v1959 = vadd.f32 0.0, %v1958
        %v1960 = vpop.f32.mrb[0].mxu0
        %v1961 = vpop.f32.mrb[0].mxu0
        %v1962 = vadd.f32 0.0, %v1961
        %v1963 = vpop.f32.mrb[0].mxu0
        %1964 = vmatprep.mubr.bf16.mxu0 0
        %1965 = vmatmul.mubr.bf16.gmra.mrb[0].mxu0 %v1767
        %v1966 = vpop.f32.mrb[0].mxu0
        %v1967 = vadd.f32 0.0, %v1966
        %v1968 = vpop.f32.mrb[0].mxu0
        %v1969 = vpop.f32.mrb[0].mxu0
        %v1970 = vadd.f32 0.0, %v1969
        %v1971 = vpop.f32.mrb[0].mxu0
        %1972 = vmatprep.mubr.bf16.mxu0 0
        %1973 = vmatmul.mubr.bf16.gmra.mrb[0].mxu0 %v1768
        %v1974 = vpop.f32.mrb[0].mxu0
        %v1975 = vadd.f32 0.0, %v1974
        %v1976 = vpop.f32.mrb[0].mxu0
        %v1977 = vpop.f32.mrb[0].mxu0
        %v1978 = vadd.f32 0.0, %v1977
        %v1979 = vpop.f32.mrb[0].mxu0
        %1980 = vmatprep.mubr.bf16.mxu0 0
        %1981 = vmatmul.mubr.bf16.gmra.mrb[0].mxu0 %v1769
        %v1982 = vpop.f32.mrb[0].mxu0
        %v1983 = vadd.f32 0.0, %v1982
        %v1984 = vpop.f32.mrb[0].mxu0
        %v1985 = vpop.f32.mrb[0].mxu0
        %v1986 = vadd.f32 0.0, %v1985
        %v1987 = vpop.f32.mrb[0].mxu0
        %1988 = vmatprep.mubr.bf16.mxu0 0
        %1989 = vmatmul.mubr.bf16.gmra.mrb[0].mxu0 %v1770
        %v1990 = vpop.f32.mrb[0].mxu0
        %v1991 = vadd.f32 0.0, %v1990
        %v1992 = vpop.f32.mrb[0].mxu0
        %v1993 = vpop.f32.mrb[0].mxu0
        %v1994 = vadd.f32 0.0, %v1993
        %v1995 = vpop.f32.mrb[0].mxu0
        %1996 = vdwg.mxu0
        %v1997 = vadd.f32 %v1691, %v1871
        %v1998 = vadd.f32 %v1692, %v1874
        %v1999 = vadd.f32 %v1693, %v1879
        %v2000 = vadd.f32 %v1694, %v1882
        %v2001 = vadd.f32 %v1695, %v1887
        %v2002 = vadd.f32 %v1696, %v1890
        %v2003 = vadd.f32 %v1697, %v1895
        %v2004 = vadd.f32 %v1698, %v1898
        %v2005 = vadd.f32 %v1699, %v1903
        %v2006 = vadd.f32 %v1700, %v1906
        %v2007 = vadd.f32 %v1701, %v1911
        %v2008 = vadd.f32 %v1702, %v1914
        %v2009 = vadd.f32 %v1703, %v1919
        %v2010 = vadd.f32 %v1704, %v1922
        %v2011 = vadd.f32 %v1705, %v1927
        %v2012 = vadd.f32 %v1706, %v1930
        %v2013 = vadd.f32 %v1707, %v1935
        %v2014 = vadd.f32 %v1708, %v1938
        %v2015 = vadd.f32 %v1709, %v1943
        %v2016 = vadd.f32 %v1710, %v1946
        %v2017 = vadd.f32 %v1711, %v1951
        %v2018 = vadd.f32 %v1712, %v1954
        %v2019 = vadd.f32 %v1713, %v1959
        %v2020 = vadd.f32 %v1714, %v1962
        %v2021 = vadd.f32 %v1715, %v1967
        %v2022 = vadd.f32 %v1716, %v1970
        %v2023 = vadd.f32 %v1717, %v1975
        %v2024 = vadd.f32 %v1718, %v1978
        %v2025 = vadd.f32 %v1719, %v1983
        %v2026 = vadd.f32 %v1720, %v1986
        %v2027 = vadd.f32 %v1721, %v1991
        %v2028 = vadd.f32 %v1722, %v1994
        %v2029 = vld [vmem:[%s805 + $0x1] sm:$0xff]
        %v2030 = vld [vmem:[%s805 + $0x9] sm:$0xff]
        %v2031 = vld [vmem:[%s805 + $0x19] sm:$0xff]
        %v2032 = vld [vmem:[%s805 + $0x21] sm:$0xff]
        %v2033 = vld [vmem:[%s805 + $0x31] sm:$0xff]
        %v2034 = vld [vmem:[%s805 + $0x39] sm:$0xff]
        %v2035 = vld [vmem:[%s805 + $0x49] sm:$0xff]
        %v2036 = vld [vmem:[%s805 + $0x51] sm:$0xff]
        %v2037 = vld [vmem:[%s805 + $0x61] sm:$0xff]
        %v2038 = vld [vmem:[%s805 + $0x69] sm:$0xff]
        %v2039 = vld [vmem:[%s805 + $0x79] sm:$0xff]
        %v2040 = vld [vmem:[%s805 + $0x81] sm:$0xff]
        %v2041 = vld [vmem:[%s805 + $0x91] sm:$0xff]
        %v2042 = vld [vmem:[%s805 + $0x99] sm:$0xff]
        %v2043 = vld [vmem:[%s805 + $0xa9] sm:$0xff]
        %v2044 = vld [vmem:[%s805 + $0xb1] sm:$0xff]
        %v2045 = vld [vmem:[%s805 + $0xc1] sm:$0xff]
        %v2046 = vld [vmem:[%s805 + $0xc9] sm:$0xff]
        %v2047 = vld [vmem:[%s805 + $0xd9] sm:$0xff]
        %v2048 = vld [vmem:[%s805 + $0xe1] sm:$0xff]
        %v2049 = vld [vmem:[%s805 + $0xf1] sm:$0xff]
        %v2050 = vld [vmem:[%s805 + $0xf9] sm:$0xff]
        %v2051 = vld [vmem:[%s805 + $0x109] sm:$0xff]
        %v2052 = vld [vmem:[%s805 + $0x111] sm:$0xff]
        %v2053 = vld [vmem:[%s805 + $0x121] sm:$0xff]
        %v2054 = vld [vmem:[%s805 + $0x129] sm:$0xff]
        %v2055 = vld [vmem:[%s805 + $0x139] sm:$0xff]
        %v2056 = vld [vmem:[%s805 + $0x141] sm:$0xff]
        %v2057 = vld [vmem:[%s805 + $0x151] sm:$0xff]
        %v2058 = vld [vmem:[%s805 + $0x159] sm:$0xff]
        %v2059 = vld [vmem:[%s805 + $0x169] sm:$0xff]
        %v2060 = vld [vmem:[%s805 + $0x171] sm:$0xff]
        %v2061 = vpack.c.bf16 %v2030, %v2029
        %v2062 = vpack.c.bf16 %v2032, %v2031
        %v2063 = vpack.c.bf16 %v2034, %v2033
        %v2064 = vpack.c.bf16 %v2036, %v2035
        %v2065 = vpack.c.bf16 %v2038, %v2037
        %v2066 = vpack.c.bf16 %v2040, %v2039
        %v2067 = vpack.c.bf16 %v2042, %v2041
        %v2068 = vpack.c.bf16 %v2044, %v2043
        %v2069 = vpack.c.bf16 %v2046, %v2045
        %v2070 = vpack.c.bf16 %v2048, %v2047
        %v2071 = vpack.c.bf16 %v2050, %v2049
        %v2072 = vpack.c.bf16 %v2052, %v2051
        %v2073 = vpack.c.bf16 %v2054, %v2053
        %v2074 = vpack.c.bf16 %v2056, %v2055
        %v2075 = vpack.c.bf16 %v2058, %v2057
        %v2076 = vpack.c.bf16 %v2060, %v2059
        %s2077 = scalar_lea.vmem [#allocation8], 256
        %v2078 = vld [vmem:[%s2077] sm:$0xf]
        %v2079 = vld [vmem:[%s2077 + $0x4] sm:$0xf]
        %v2080 = vld [vmem:[%s2077 + $0x8] sm:$0xf]
        %v2081 = vld [vmem:[%s2077 + $0xc] sm:$0xf]
        %v2082 = vld [vmem:[%s2077 + $0x10] sm:$0xf]
        %v2083 = vld [vmem:[%s2077 + $0x14] sm:$0xf]
        %v2084 = vld [vmem:[%s2077 + $0x18] sm:$0xf]
        %v2085 = vld [vmem:[%s2077 + $0x1c] sm:$0xf]
        %v2086 = vld [vmem:[%s2077 + $0x20] sm:$0xf]
        %v2087 = vld [vmem:[%s2077 + $0x24] sm:$0xf]
        %v2088 = vld [vmem:[%s2077 + $0x28] sm:$0xf]
        %v2089 = vld [vmem:[%s2077 + $0x2c] sm:$0xf]
        %v2090 = vld [vmem:[%s2077 + $0x30] sm:$0xf]
        %v2091 = vld [vmem:[%s2077 + $0x34] sm:$0xf]
        %v2092 = vld [vmem:[%s2077 + $0x38] sm:$0xf]
        %v2093 = vld [vmem:[%s2077 + $0x3c] sm:$0xf]
        %v2110 = vunpack.c.l.b16 %v2078
        %v2111 = vunpack.c.l.b16 %v2079
        %v2112 = vunpack.c.l.b16 %v2080
        %v2113 = vunpack.c.l.b16 %v2081
        %v2114 = vunpack.c.l.b16 %v2082
        %v2115 = vunpack.c.l.b16 %v2083
        %v2116 = vunpack.c.l.b16 %v2084
        %v2117 = vunpack.c.l.b16 %v2085
        %v2118 = vunpack.c.l.b16 %v2086
        %v2119 = vunpack.c.l.b16 %v2087
        %v2120 = vunpack.c.l.b16 %v2088
        %v2121 = vunpack.c.l.b16 %v2089
        %v2122 = vunpack.c.l.b16 %v2090
        %v2123 = vunpack.c.l.b16 %v2091
        %v2124 = vunpack.c.l.b16 %v2092
        %v2125 = vunpack.c.l.b16 %v2093
        %v2126 = vpack.c.b16 %v2111, %v2110
        %v2127 = vpack.c.b16 %v2113, %v2112
        %v2128 = vpack.c.b16 %v2115, %v2114
        %v2129 = vpack.c.b16 %v2117, %v2116
        %v2130 = vpack.c.b16 %v2119, %v2118
        %v2131 = vpack.c.b16 %v2121, %v2120
        %v2132 = vpack.c.b16 %v2123, %v2122
        %v2133 = vpack.c.b16 %v2125, %v2124
        %2142 = vmatprep.subr.bf16.mxu0 0
        %2143 = vmatpush1.bf16.msra.mxu0 %v2126
        %2144 = vmatprep.subr.bf16.mxu0 0
        %2145 = vmatpush1.bf16.msra.mxu0 %v2127
        %2146 = vmatprep.subr.bf16.mxu0 0
        %2147 = vmatpush1.bf16.msra.mxu0 %v2128
        %2148 = vmatprep.subr.bf16.mxu0 0
        %2149 = vmatpush1.bf16.msra.mxu0 %v2129
        %2150 = vmatprep.subr.bf16.mxu0 0
        %2151 = vmatpush1.bf16.msra.mxu0 %v2130
        %2152 = vmatprep.subr.bf16.mxu0 0
        %2153 = vmatpush1.bf16.msra.mxu0 %v2131
        %2154 = vmatprep.subr.bf16.mxu0 0
        %2155 = vmatpush1.bf16.msra.mxu0 %v2132
        %2156 = vmatprep.subr.bf16.mxu0 0
        %2157 = vmatpush1.bf16.msra.mxu0 %v2133
        %2158 = vmatprep.subr.bf16.mxu0 0
        %2159 = vmatpush1.bf16.msra.mxu0 0
        %2160 = vmatprep.subr.bf16.mxu0 0
        %2161 = vmatpush1.bf16.msra.mxu0 0
        %2162 = vmatprep.subr.bf16.mxu0 0
        %2163 = vmatpush1.bf16.msra.mxu0 0
        %2164 = vmatprep.subr.bf16.mxu0 0
        %2165 = vmatpush1.bf16.msra.mxu0 0
        %2166 = vmatprep.subr.bf16.mxu0 0
        %2167 = vmatpush1.bf16.msra.mxu0 0
        %2168 = vmatprep.subr.bf16.mxu0 0
        %2169 = vmatpush1.bf16.msra.mxu0 0
        %2170 = vmatprep.subr.bf16.mxu0 0
        %2171 = vmatpush1.bf16.msra.mxu0 0
        %2172 = vmatprep.subr.bf16.mxu0 0
        %2173 = vmatpush1.bf16.msra.mxu0 0
        %2174 = vmatprep.mubr.bf16.mxu0 0
        %2175 = vmatmul.mubr.bf16.gmra.mrb[0].mxu0 %v2061
        %v2176 = vpop.f32.mrb[0].mxu0
        %v2177 = vadd.f32 0.0, %v2176
        %v2178 = vpop.f32.mrb[0].mxu0
        %v2179 = vpop.f32.mrb[0].mxu0
        %v2180 = vadd.f32 0.0, %v2179
        %v2181 = vpop.f32.mrb[0].mxu0
        %2182 = vmatprep.mubr.bf16.mxu0 0
        %2183 = vmatmul.mubr.bf16.gmra.mrb[0].mxu0 %v2062
        %v2184 = vpop.f32.mrb[0].mxu0
        %v2185 = vadd.f32 0.0, %v2184
        %v2186 = vpop.f32.mrb[0].mxu0
        %v2187 = vpop.f32.mrb[0].mxu0
        %v2188 = vadd.f32 0.0, %v2187
        %v2189 = vpop.f32.mrb[0].mxu0
        %2190 = vmatprep.mubr.bf16.mxu0 0
        %2191 = vmatmul.mubr.bf16.gmra.mrb[0].mxu0 %v2063
        %v2192 = vpop.f32.mrb[0].mxu0
        %v2193 = vadd.f32 0.0, %v2192
        %v2194 = vpop.f32.mrb[0].mxu0
        %v2195 = vpop.f32.mrb[0].mxu0
        %v2196 = vadd.f32 0.0, %v2195
        %v2197 = vpop.f32.mrb[0].mxu0
        %2198 = vmatprep.mubr.bf16.mxu0 0
        %2199 = vmatmul.mubr.bf16.gmra.mrb[0].mxu0 %v2064
        %v2200 = vpop.f32.mrb[0].mxu0
        %v2201 = vadd.f32 0.0, %v2200
        %v2202 = vpop.f32.mrb[0].mxu0
        %v2203 = vpop.f32.mrb[0].mxu0
        %v2204 = vadd.f32 0.0, %v2203
        %v2205 = vpop.f32.mrb[0].mxu0
        %2206 = vmatprep.mubr.bf16.mxu0 0
        %2207 = vmatmul.mubr.bf16.gmra.mrb[0].mxu0 %v2065
        %v2208 = vpop.f32.mrb[0].mxu0
        %v2209 = vadd.f32 0.0, %v2208
        %v2210 = vpop.f32.mrb[0].mxu0
        %v2211 = vpop.f32.mrb[0].mxu0
        %v2212 = vadd.f32 0.0, %v2211
        %v2213 = vpop.f32.mrb[0].mxu0
        %2214 = vmatprep.mubr.bf16.mxu0 0
        %2215 = vmatmul.mubr.bf16.gmra.mrb[0].mxu0 %v2066
        %v2216 = vpop.f32.mrb[0].mxu0
        %v2217 = vadd.f32 0.0, %v2216
        %v2218 = vpop.f32.mrb[0].mxu0
        %v2219 = vpop.f32.mrb[0].mxu0
        %v2220 = vadd.f32 0.0, %v2219
        %v2221 = vpop.f32.mrb[0].mxu0
        %2222 = vmatprep.mubr.bf16.mxu0 0
        %2223 = vmatmul.mubr.bf16.gmra.mrb[0].mxu0 %v2067
        %v2224 = vpop.f32.mrb[0].mxu0
        %v2225 = vadd.f32 0.0, %v2224
        %v2226 = vpop.f32.mrb[0].mxu0
        %v2227 = vpop.f32.mrb[0].mxu0
        %v2228 = vadd.f32 0.0, %v2227
        %v2229 = vpop.f32.mrb[0].mxu0
        %2230 = vmatprep.mubr.bf16.mxu0 0
        %2231 = vmatmul.mubr.bf16.gmra.mrb[0].mxu0 %v2068
        %v2232 = vpop.f32.mrb[0].mxu0
        %v2233 = vadd.f32 0.0, %v2232
        %v2234 = vpop.f32.mrb[0].mxu0
        %v2235 = vpop.f32.mrb[0].mxu0
        %v2236 = vadd.f32 0.0, %v2235
        %v2237 = vpop.f32.mrb[0].mxu0
        %2238 = vmatprep.mubr.bf16.mxu0 0
        %2239 = vmatmul.mubr.bf16.gmra.mrb[0].mxu0 %v2069
        %v2240 = vpop.f32.mrb[0].mxu0
        %v2241 = vadd.f32 0.0, %v2240
        %v2242 = vpop.f32.mrb[0].mxu0
        %v2243 = vpop.f32.mrb[0].mxu0
        %v2244 = vadd.f32 0.0, %v2243
        %v2245 = vpop.f32.mrb[0].mxu0
        %2246 = vmatprep.mubr.bf16.mxu0 0
        %2247 = vmatmul.mubr.bf16.gmra.mrb[0].mxu0 %v2070
        %v2248 = vpop.f32.mrb[0].mxu0
        %v2249 = vadd.f32 0.0, %v2248
        %v2250 = vpop.f32.mrb[0].mxu0
        %v2251 = vpop.f32.mrb[0].mxu0
        %v2252 = vadd.f32 0.0, %v2251
        %v2253 = vpop.f32.mrb[0].mxu0
        %2254 = vmatprep.mubr.bf16.mxu0 0
        %2255 = vmatmul.mubr.bf16.gmra.mrb[0].mxu0 %v2071
        %v2256 = vpop.f32.mrb[0].mxu0
        %v2257 = vadd.f32 0.0, %v2256
        %v2258 = vpop.f32.mrb[0].mxu0
        %v2259 = vpop.f32.mrb[0].mxu0
        %v2260 = vadd.f32 0.0, %v2259
        %v2261 = vpop.f32.mrb[0].mxu0
        %2262 = vmatprep.mubr.bf16.mxu0 0
        %2263 = vmatmul.mubr.bf16.gmra.mrb[0].mxu0 %v2072
        %v2264 = vpop.f32.mrb[0].mxu0
        %v2265 = vadd.f32 0.0, %v2264
        %v2266 = vpop.f32.mrb[0].mxu0
        %v2267 = vpop.f32.mrb[0].mxu0
        %v2268 = vadd.f32 0.0, %v2267
        %v2269 = vpop.f32.mrb[0].mxu0
        %2270 = vmatprep.mubr.bf16.mxu0 0
        %2271 = vmatmul.mubr.bf16.gmra.mrb[0].mxu0 %v2073
        %v2272 = vpop.f32.mrb[0].mxu0
        %v2273 = vadd.f32 0.0, %v2272
        %v2274 = vpop.f32.mrb[0].mxu0
        %v2275 = vpop.f32.mrb[0].mxu0
        %v2276 = vadd.f32 0.0, %v2275
        %v2277 = vpop.f32.mrb[0].mxu0
        %2278 = vmatprep.mubr.bf16.mxu0 0
        %2279 = vmatmul.mubr.bf16.gmra.mrb[0].mxu0 %v2074
        %v2280 = vpop.f32.mrb[0].mxu0
        %v2281 = vadd.f32 0.0, %v2280
        %v2282 = vpop.f32.mrb[0].mxu0
        %v2283 = vpop.f32.mrb[0].mxu0
        %v2284 = vadd.f32 0.0, %v2283
        %v2285 = vpop.f32.mrb[0].mxu0
        %2286 = vmatprep.mubr.bf16.mxu0 0
        %2287 = vmatmul.mubr.bf16.gmra.mrb[0].mxu0 %v2075
        %v2288 = vpop.f32.mrb[0].mxu0
        %v2289 = vadd.f32 0.0, %v2288
        %v2290 = vpop.f32.mrb[0].mxu0
        %v2291 = vpop.f32.mrb[0].mxu0
        %v2292 = vadd.f32 0.0, %v2291
        %v2293 = vpop.f32.mrb[0].mxu0
        %2294 = vmatprep.mubr.bf16.mxu0 0
        %2295 = vmatmul.mubr.bf16.gmra.mrb[0].mxu0 %v2076
        %v2296 = vpop.f32.mrb[0].mxu0
        %v2297 = vadd.f32 0.0, %v2296
        %v2298 = vpop.f32.mrb[0].mxu0
        %v2299 = vpop.f32.mrb[0].mxu0
        %v2300 = vadd.f32 0.0, %v2299
        %v2301 = vpop.f32.mrb[0].mxu0
        %2302 = vdwg.mxu0
        %v2303 = vadd.f32 %v1997, %v2177
        %v2304 = vadd.f32 %v1998, %v2180
        %v2305 = vadd.f32 %v1999, %v2185
        %v2306 = vadd.f32 %v2000, %v2188
        %v2307 = vadd.f32 %v2001, %v2193
        %v2308 = vadd.f32 %v2002, %v2196
        %v2309 = vadd.f32 %v2003, %v2201
        %v2310 = vadd.f32 %v2004, %v2204
        %v2311 = vadd.f32 %v2005, %v2209
        %v2312 = vadd.f32 %v2006, %v2212
        %v2313 = vadd.f32 %v2007, %v2217
        %v2314 = vadd.f32 %v2008, %v2220
        %v2315 = vadd.f32 %v2009, %v2225
        %v2316 = vadd.f32 %v2010, %v2228
        %v2317 = vadd.f32 %v2011, %v2233
        %v2318 = vadd.f32 %v2012, %v2236
        %v2319 = vadd.f32 %v2013, %v2241
        %v2320 = vadd.f32 %v2014, %v2244
        %v2321 = vadd.f32 %v2015, %v2249
        %v2322 = vadd.f32 %v2016, %v2252
        %v2323 = vadd.f32 %v2017, %v2257
        %v2324 = vadd.f32 %v2018, %v2260
        %v2325 = vadd.f32 %v2019, %v2265
        %v2326 = vadd.f32 %v2020, %v2268
        %v2327 = vadd.f32 %v2021, %v2273
        %v2328 = vadd.f32 %v2022, %v2276
        %v2329 = vadd.f32 %v2023, %v2281
        %v2330 = vadd.f32 %v2024, %v2284
        %v2331 = vadd.f32 %v2025, %v2289
        %v2332 = vadd.f32 %v2026, %v2292
        %v2333 = vadd.f32 %v2027, %v2297
        %v2334 = vadd.f32 %v2028, %v2300
        %v2335 = vld [vmem:[%s805 + $0x2] sm:$0xff]
        %v2336 = vld [vmem:[%s805 + $0xa] sm:$0xff]
        %v2337 = vld [vmem:[%s805 + $0x1a] sm:$0xff]
        %v2338 = vld [vmem:[%s805 + $0x22] sm:$0xff]
        %v2339 = vld [vmem:[%s805 + $0x32] sm:$0xff]
        %v2340 = vld [vmem:[%s805 + $0x3a] sm:$0xff]
        %v2341 = vld [vmem:[%s805 + $0x4a] sm:$0xff]
        %v2342 = vld [vmem:[%s805 + $0x52] sm:$0xff]
        %v2343 = vld [vmem:[%s805 + $0x62] sm:$0xff]
        %v2344 = vld [vmem:[%s805 + $0x6a] sm:$0xff]
        %v2345 = vld [vmem:[%s805 + $0x7a] sm:$0xff]
        %v2346 = vld [vmem:[%s805 + $0x82] sm:$0xff]
        %v2347 = vld [vmem:[%s805 + $0x92] sm:$0xff]
        %v2348 = vld [vmem:[%s805 + $0x9a] sm:$0xff]
        %v2349 = vld [vmem:[%s805 + $0xaa] sm:$0xff]
        %v2350 = vld [vmem:[%s805 + $0xb2] sm:$0xff]
        %v2351 = vld [vmem:[%s805 + $0xc2] sm:$0xff]
        %v2352 = vld [vmem:[%s805 + $0xca] sm:$0xff]
        %v2353 = vld [vmem:[%s805 + $0xda] sm:$0xff]
        %v2354 = vld [vmem:[%s805 + $0xe2] sm:$0xff]
        %v2355 = vld [vmem:[%s805 + $0xf2] sm:$0xff]
        %v2356 = vld [vmem:[%s805 + $0xfa] sm:$0xff]
        %v2357 = vld [vmem:[%s805 + $0x10a] sm:$0xff]
        %v2358 = vld [vmem:[%s805 + $0x112] sm:$0xff]
        %v2359 = vld [vmem:[%s805 + $0x122] sm:$0xff]
        %v2360 = vld [vmem:[%s805 + $0x12a] sm:$0xff]
        %v2361 = vld [vmem:[%s805 + $0x13a] sm:$0xff]
        %v2362 = vld [vmem:[%s805 + $0x142] sm:$0xff]
        %v2363 = vld [vmem:[%s805 + $0x152] sm:$0xff]
        %v2364 = vld [vmem:[%s805 + $0x15a] sm:$0xff]
        %v2365 = vld [vmem:[%s805 + $0x16a] sm:$0xff]
        %v2366 = vld [vmem:[%s805 + $0x172] sm:$0xff]
        %v2367 = vpack.c.bf16 %v2336, %v2335
        %v2368 = vpack.c.bf16 %v2338, %v2337
        %v2369 = vpack.c.bf16 %v2340, %v2339
        %v2370 = vpack.c.bf16 %v2342, %v2341
        %v2371 = vpack.c.bf16 %v2344, %v2343
        %v2372 = vpack.c.bf16 %v2346, %v2345
        %v2373 = vpack.c.bf16 %v2348, %v2347
        %v2374 = vpack.c.bf16 %v2350, %v2349
        %v2375 = vpack.c.bf16 %v2352, %v2351
        %v2376 = vpack.c.bf16 %v2354, %v2353
        %v2377 = vpack.c.bf16 %v2356, %v2355
        %v2378 = vpack.c.bf16 %v2358, %v2357
        %v2379 = vpack.c.bf16 %v2360, %v2359
        %v2380 = vpack.c.bf16 %v2362, %v2361
        %v2381 = vpack.c.bf16 %v2364, %v2363
        %v2382 = vpack.c.bf16 %v2366, %v2365
        %s2383 = scalar_lea.vmem [#allocation8], 320
        %v2384 = vld [vmem:[%s2383] sm:$0xf]
        %v2385 = vld [vmem:[%s2383 + $0x4] sm:$0xf]
        %v2386 = vld [vmem:[%s2383 + $0x8] sm:$0xf]
        %v2387 = vld [vmem:[%s2383 + $0xc] sm:$0xf]
        %v2388 = vld [vmem:[%s2383 + $0x10] sm:$0xf]
        %v2389 = vld [vmem:[%s2383 + $0x14] sm:$0xf]
        %v2390 = vld [vmem:[%s2383 + $0x18] sm:$0xf]
        %v2391 = vld [vmem:[%s2383 + $0x1c] sm:$0xf]
        %v2392 = vld [vmem:[%s2383 + $0x20] sm:$0xf]
        %v2393 = vld [vmem:[%s2383 + $0x24] sm:$0xf]
        %v2394 = vld [vmem:[%s2383 + $0x28] sm:$0xf]
        %v2395 = vld [vmem:[%s2383 + $0x2c] sm:$0xf]
        %v2396 = vld [vmem:[%s2383 + $0x30] sm:$0xf]
        %v2397 = vld [vmem:[%s2383 + $0x34] sm:$0xf]
        %v2398 = vld [vmem:[%s2383 + $0x38] sm:$0xf]
        %v2399 = vld [vmem:[%s2383 + $0x3c] sm:$0xf]
        %v2416 = vunpack.c.l.b16 %v2384
        %v2417 = vunpack.c.l.b16 %v2385
        %v2418 = vunpack.c.l.b16 %v2386
        %v2419 = vunpack.c.l.b16 %v2387
        %v2420 = vunpack.c.l.b16 %v2388
        %v2421 = vunpack.c.l.b16 %v2389
        %v2422 = vunpack.c.l.b16 %v2390
        %v2423 = vunpack.c.l.b16 %v2391
        %v2424 = vunpack.c.l.b16 %v2392
        %v2425 = vunpack.c.l.b16 %v2393
        %v2426 = vunpack.c.l.b16 %v2394
        %v2427 = vunpack.c.l.b16 %v2395
        %v2428 = vunpack.c.l.b16 %v2396
        %v2429 = vunpack.c.l.b16 %v2397
        %v2430 = vunpack.c.l.b16 %v2398
        %v2431 = vunpack.c.l.b16 %v2399
        %v2432 = vpack.c.b16 %v2417, %v2416
        %v2433 = vpack.c.b16 %v2419, %v2418
        %v2434 = vpack.c.b16 %v2421, %v2420
        %v2435 = vpack.c.b16 %v2423, %v2422
        %v2436 = vpack.c.b16 %v2425, %v2424
        %v2437 = vpack.c.b16 %v2427, %v2426
        %v2438 = vpack.c.b16 %v2429, %v2428
        %v2439 = vpack.c.b16 %v2431, %v2430
        %2448 = vmatprep.subr.bf16.mxu0 0
        %2449 = vmatpush1.bf16.msra.mxu0 %v2432
        %2450 = vmatprep.subr.bf16.mxu0 0
        %2451 = vmatpush1.bf16.msra.mxu0 %v2433
        %2452 = vmatprep.subr.bf16.mxu0 0
        %2453 = vmatpush1.bf16.msra.mxu0 %v2434
        %2454 = vmatprep.subr.bf16.mxu0 0
        %2455 = vmatpush1.bf16.msra.mxu0 %v2435
        %2456 = vmatprep.subr.bf16.mxu0 0
        %2457 = vmatpush1.bf16.msra.mxu0 %v2436
        %2458 = vmatprep.subr.bf16.mxu0 0
        %2459 = vmatpush1.bf16.msra.mxu0 %v2437
        %2460 = vmatprep.subr.bf16.mxu0 0
        %2461 = vmatpush1.bf16.msra.mxu0 %v2438
        %2462 = vmatprep.subr.bf16.mxu0 0
        %2463 = vmatpush1.bf16.msra.mxu0 %v2439
        %2464 = vmatprep.subr.bf16.mxu0 0
        %2465 = vmatpush1.bf16.msra.mxu0 0
        %2466 = vmatprep.subr.bf16.mxu0 0
        %2467 = vmatpush1.bf16.msra.mxu0 0
        %2468 = vmatprep.subr.bf16.mxu0 0
        %2469 = vmatpush1.bf16.msra.mxu0 0
        %2470 = vmatprep.subr.bf16.mxu0 0
        %2471 = vmatpush1.bf16.msra.mxu0 0
        %2472 = vmatprep.subr.bf16.mxu0 0
        %2473 = vmatpush1.bf16.msra.mxu0 0
        %2474 = vmatprep.subr.bf16.mxu0 0
        %2475 = vmatpush1.bf16.msra.mxu0 0
        %2476 = vmatprep.subr.bf16.mxu0 0
        %2477 = vmatpush1.bf16.msra.mxu0 0
        %2478 = vmatprep.subr.bf16.mxu0 0
        %2479 = vmatpush1.bf16.msra.mxu0 0
        %2480 = vmatprep.mubr.bf16.mxu0 0
        %2481 = vmatmul.mubr.bf16.gmra.mrb[0].mxu0 %v2367
        %v2482 = vpop.f32.mrb[0].mxu0
        %v2483 = vadd.f32 0.0, %v2482
        %v2484 = vpop.f32.mrb[0].mxu0
        %v2485 = vpop.f32.mrb[0].mxu0
        %v2486 = vadd.f32 0.0, %v2485
        %v2487 = vpop.f32.mrb[0].mxu0
        %2488 = vmatprep.mubr.bf16.mxu0 0
        %2489 = vmatmul.mubr.bf16.gmra.mrb[0].mxu0 %v2368
        %v2490 = vpop.f32.mrb[0].mxu0
        %v2491 = vadd.f32 0.0, %v2490
        %v2492 = vpop.f32.mrb[0].mxu0
        %v2493 = vpop.f32.mrb[0].mxu0
        %v2494 = vadd.f32 0.0, %v2493
        %v2495 = vpop.f32.mrb[0].mxu0
        %2496 = vmatprep.mubr.bf16.mxu0 0
        %2497 = vmatmul.mubr.bf16.gmra.mrb[0].mxu0 %v2369
        %v2498 = vpop.f32.mrb[0].mxu0
        %v2499 = vadd.f32 0.0, %v2498
        %v2500 = vpop.f32.mrb[0].mxu0
        %v2501 = vpop.f32.mrb[0].mxu0
        %v2502 = vadd.f32 0.0, %v2501
        %v2503 = vpop.f32.mrb[0].mxu0
        %2504 = vmatprep.mubr.bf16.mxu0 0
        %2505 = vmatmul.mubr.bf16.gmra.mrb[0].mxu0 %v2370
        %v2506 = vpop.f32.mrb[0].mxu0
        %v2507 = vadd.f32 0.0, %v2506
        %v2508 = vpop.f32.mrb[0].mxu0
        %v2509 = vpop.f32.mrb[0].mxu0
        %v2510 = vadd.f32 0.0, %v2509
        %v2511 = vpop.f32.mrb[0].mxu0
        %2512 = vmatprep.mubr.bf16.mxu0 0
        %2513 = vmatmul.mubr.bf16.gmra.mrb[0].mxu0 %v2371
        %v2514 = vpop.f32.mrb[0].mxu0
        %v2515 = vadd.f32 0.0, %v2514
        %v2516 = vpop.f32.mrb[0].mxu0
        %v2517 = vpop.f32.mrb[0].mxu0
        %v2518 = vadd.f32 0.0, %v2517
        %v2519 = vpop.f32.mrb[0].mxu0
        %2520 = vmatprep.mubr.bf16.mxu0 0
        %2521 = vmatmul.mubr.bf16.gmra.mrb[0].mxu0 %v2372
        %v2522 = vpop.f32.mrb[0].mxu0
        %v2523 = vadd.f32 0.0, %v2522
        %v2524 = vpop.f32.mrb[0].mxu0
        %v2525 = vpop.f32.mrb[0].mxu0
        %v2526 = vadd.f32 0.0, %v2525
        %v2527 = vpop.f32.mrb[0].mxu0
        %2528 = vmatprep.mubr.bf16.mxu0 0
        %2529 = vmatmul.mubr.bf16.gmra.mrb[0].mxu0 %v2373
        %v2530 = vpop.f32.mrb[0].mxu0
        %v2531 = vadd.f32 0.0, %v2530
        %v2532 = vpop.f32.mrb[0].mxu0
        %v2533 = vpop.f32.mrb[0].mxu0
        %v2534 = vadd.f32 0.0, %v2533
        %v2535 = vpop.f32.mrb[0].mxu0
        %2536 = vmatprep.mubr.bf16.mxu0 0
        %2537 = vmatmul.mubr.bf16.gmra.mrb[0].mxu0 %v2374
        %v2538 = vpop.f32.mrb[0].mxu0
        %v2539 = vadd.f32 0.0, %v2538
        %v2540 = vpop.f32.mrb[0].mxu0
        %v2541 = vpop.f32.mrb[0].mxu0
        %v2542 = vadd.f32 0.0, %v2541
        %v2543 = vpop.f32.mrb[0].mxu0
        %2544 = vmatprep.mubr.bf16.mxu0 0
        %2545 = vmatmul.mubr.bf16.gmra.mrb[0].mxu0 %v2375
        %v2546 = vpop.f32.mrb[0].mxu0
        %v2547 = vadd.f32 0.0, %v2546
        %v2548 = vpop.f32.mrb[0].mxu0
        %v2549 = vpop.f32.mrb[0].mxu0
        %v2550 = vadd.f32 0.0, %v2549
        %v2551 = vpop.f32.mrb[0].mxu0
        %2552 = vmatprep.mubr.bf16.mxu0 0
        %2553 = vmatmul.mubr.bf16.gmra.mrb[0].mxu0 %v2376
        %v2554 = vpop.f32.mrb[0].mxu0
        %v2555 = vadd.f32 0.0, %v2554
        %v2556 = vpop.f32.mrb[0].mxu0
        %v2557 = vpop.f32.mrb[0].mxu0
        %v2558 = vadd.f32 0.0, %v2557
        %v2559 = vpop.f32.mrb[0].mxu0
        %2560 = vmatprep.mubr.bf16.mxu0 0
        %2561 = vmatmul.mubr.bf16.gmra.mrb[0].mxu0 %v2377
        %v2562 = vpop.f32.mrb[0].mxu0
        %v2563 = vadd.f32 0.0, %v2562
        %v2564 = vpop.f32.mrb[0].mxu0
        %v2565 = vpop.f32.mrb[0].mxu0
        %v2566 = vadd.f32 0.0, %v2565
        %v2567 = vpop.f32.mrb[0].mxu0
        %2568 = vmatprep.mubr.bf16.mxu0 0
        %2569 = vmatmul.mubr.bf16.gmra.mrb[0].mxu0 %v2378
        %v2570 = vpop.f32.mrb[0].mxu0
        %v2571 = vadd.f32 0.0, %v2570
        %v2572 = vpop.f32.mrb[0].mxu0
        %v2573 = vpop.f32.mrb[0].mxu0
        %v2574 = vadd.f32 0.0, %v2573
        %v2575 = vpop.f32.mrb[0].mxu0
        %2576 = vmatprep.mubr.bf16.mxu0 0
        %2577 = vmatmul.mubr.bf16.gmra.mrb[0].mxu0 %v2379
        %v2578 = vpop.f32.mrb[0].mxu0
        %v2579 = vadd.f32 0.0, %v2578
        %v2580 = vpop.f32.mrb[0].mxu0
        %v2581 = vpop.f32.mrb[0].mxu0
        %v2582 = vadd.f32 0.0, %v2581
        %v2583 = vpop.f32.mrb[0].mxu0
        %2584 = vmatprep.mubr.bf16.mxu0 0
        %2585 = vmatmul.mubr.bf16.gmra.mrb[0].mxu0 %v2380
        %v2586 = vpop.f32.mrb[0].mxu0
        %v2587 = vadd.f32 0.0, %v2586
        %v2588 = vpop.f32.mrb[0].mxu0
        %v2589 = vpop.f32.mrb[0].mxu0
        %v2590 = vadd.f32 0.0, %v2589
        %v2591 = vpop.f32.mrb[0].mxu0
        %2592 = vmatprep.mubr.bf16.mxu0 0
        %2593 = vmatmul.mubr.bf16.gmra.mrb[0].mxu0 %v2381
        %v2594 = vpop.f32.mrb[0].mxu0
        %v2595 = vadd.f32 0.0, %v2594
        %v2596 = vpop.f32.mrb[0].mxu0
        %v2597 = vpop.f32.mrb[0].mxu0
        %v2598 = vadd.f32 0.0, %v2597
        %v2599 = vpop.f32.mrb[0].mxu0
        %2600 = vmatprep.mubr.bf16.mxu0 0
        %2601 = vmatmul.mubr.bf16.gmra.mrb[0].mxu0 %v2382
        %v2602 = vpop.f32.mrb[0].mxu0
        %v2603 = vadd.f32 0.0, %v2602
        %v2604 = vpop.f32.mrb[0].mxu0
        %v2605 = vpop.f32.mrb[0].mxu0
        %v2606 = vadd.f32 0.0, %v2605
        %v2607 = vpop.f32.mrb[0].mxu0
        %2608 = vdwg.mxu0
        %v2609 = vadd.f32 %v2303, %v2483
        %v2610 = vadd.f32 %v2304, %v2486
        %v2611 = vadd.f32 %v2305, %v2491
        %v2612 = vadd.f32 %v2306, %v2494
        %v2613 = vadd.f32 %v2307, %v2499
        %v2614 = vadd.f32 %v2308, %v2502
        %v2615 = vadd.f32 %v2309, %v2507
        %v2616 = vadd.f32 %v2310, %v2510
        %v2617 = vadd.f32 %v2311, %v2515
        %v2618 = vadd.f32 %v2312, %v2518
        %v2619 = vadd.f32 %v2313, %v2523
        %v2620 = vadd.f32 %v2314, %v2526
        %v2621 = vadd.f32 %v2315, %v2531
        %v2622 = vadd.f32 %v2316, %v2534
        %v2623 = vadd.f32 %v2317, %v2539
        %v2624 = vadd.f32 %v2318, %v2542
        %v2625 = vadd.f32 %v2319, %v2547
        %v2626 = vadd.f32 %v2320, %v2550
        %v2627 = vadd.f32 %v2321, %v2555
        %v2628 = vadd.f32 %v2322, %v2558
        %v2629 = vadd.f32 %v2323, %v2563
        %v2630 = vadd.f32 %v2324, %v2566
        %v2631 = vadd.f32 %v2325, %v2571
        %v2632 = vadd.f32 %v2326, %v2574
        %v2633 = vadd.f32 %v2327, %v2579
        %v2634 = vadd.f32 %v2328, %v2582
        %v2635 = vadd.f32 %v2329, %v2587
        %v2636 = vadd.f32 %v2330, %v2590
        %v2637 = vadd.f32 %v2331, %v2595
        %v2638 = vadd.f32 %v2332, %v2598
        %v2639 = vadd.f32 %v2333, %v2603
        %v2640 = vadd.f32 %v2334, %v2606
        %s2641 = scalar_lea.vmem [#allocation2], 48
        %v2642 = vld [vmem:[%s2641] sm:$0xff]
        %v2643 = vld [vmem:[%s2641 + $0x8] sm:$0xff]
        %v2644 = vld [vmem:[%s2641 + $0x18] sm:$0xff]
        %v2645 = vld [vmem:[%s2641 + $0x20] sm:$0xff]
        %v2646 = vld [vmem:[%s2641 + $0x30] sm:$0xff]
        %v2647 = vld [vmem:[%s2641 + $0x38] sm:$0xff]
        %v2648 = vld [vmem:[%s2641 + $0x48] sm:$0xff]
        %v2649 = vld [vmem:[%s2641 + $0x50] sm:$0xff]
        %v2650 = vld [vmem:[%s2641 + $0x60] sm:$0xff]
        %v2651 = vld [vmem:[%s2641 + $0x68] sm:$0xff]
        %v2652 = vld [vmem:[%s2641 + $0x78] sm:$0xff]
        %v2653 = vld [vmem:[%s2641 + $0x80] sm:$0xff]
        %v2654 = vld [vmem:[%s2641 + $0x90] sm:$0xff]
        %v2655 = vld [vmem:[%s2641 + $0x98] sm:$0xff]
        %v2656 = vld [vmem:[%s2641 + $0xa8] sm:$0xff]
        %v2657 = vld [vmem:[%s2641 + $0xb0] sm:$0xff]
        %v2658 = vld [vmem:[%s2641 + $0xc0] sm:$0xff]
        %v2659 = vld [vmem:[%s2641 + $0xc8] sm:$0xff]
        %v2660 = vld [vmem:[%s2641 + $0xd8] sm:$0xff]
        %v2661 = vld [vmem:[%s2641 + $0xe0] sm:$0xff]
        %v2662 = vld [vmem:[%s2641 + $0xf0] sm:$0xff]
        %v2663 = vld [vmem:[%s2641 + $0xf8] sm:$0xff]
        %v2664 = vld [vmem:[%s2641 + $0x108] sm:$0xff]
        %v2665 = vld [vmem:[%s2641 + $0x110] sm:$0xff]
        %v2666 = vld [vmem:[%s2641 + $0x120] sm:$0xff]
        %v2667 = vld [vmem:[%s2641 + $0x128] sm:$0xff]
        %v2668 = vld [vmem:[%s2641 + $0x138] sm:$0xff]
        %v2669 = vld [vmem:[%s2641 + $0x140] sm:$0xff]
        %v2670 = vld [vmem:[%s2641 + $0x150] sm:$0xff]
        %v2671 = vld [vmem:[%s2641 + $0x158] sm:$0xff]
        %v2672 = vld [vmem:[%s2641 + $0x168] sm:$0xff]
        %v2673 = vld [vmem:[%s2641 + $0x170] sm:$0xff]
        %v2674 = vpack.c.bf16 %v2643, %v2642
        %v2675 = vpack.c.bf16 %v2645, %v2644
        %v2676 = vpack.c.bf16 %v2647, %v2646
        %v2677 = vpack.c.bf16 %v2649, %v2648
        %v2678 = vpack.c.bf16 %v2651, %v2650
        %v2679 = vpack.c.bf16 %v2653, %v2652
        %v2680 = vpack.c.bf16 %v2655, %v2654
        %v2681 = vpack.c.bf16 %v2657, %v2656
        %v2682 = vpack.c.bf16 %v2659, %v2658
        %v2683 = vpack.c.bf16 %v2661, %v2660
        %v2684 = vpack.c.bf16 %v2663, %v2662
        %v2685 = vpack.c.bf16 %v2665, %v2664
        %v2686 = vpack.c.bf16 %v2667, %v2666
        %v2687 = vpack.c.bf16 %v2669, %v2668
        %v2688 = vpack.c.bf16 %v2671, %v2670
        %v2689 = vpack.c.bf16 %v2673, %v2672
        %s2690 = scalar_lea.vmem [#allocation8], 384
        %v2691 = vld [vmem:[%s2690] sm:$0xf]
        %v2692 = vld [vmem:[%s2690 + $0x4] sm:$0xf]
        %v2693 = vld [vmem:[%s2690 + $0x8] sm:$0xf]
        %v2694 = vld [vmem:[%s2690 + $0xc] sm:$0xf]
        %v2695 = vld [vmem:[%s2690 + $0x10] sm:$0xf]
        %v2696 = vld [vmem:[%s2690 + $0x14] sm:$0xf]
        %v2697 = vld [vmem:[%s2690 + $0x18] sm:$0xf]
        %v2698 = vld [vmem:[%s2690 + $0x1c] sm:$0xf]
        %v2699 = vld [vmem:[%s2690 + $0x20] sm:$0xf]
        %v2700 = vld [vmem:[%s2690 + $0x24] sm:$0xf]
        %v2701 = vld [vmem:[%s2690 + $0x28] sm:$0xf]
        %v2702 = vld [vmem:[%s2690 + $0x2c] sm:$0xf]
        %v2703 = vld [vmem:[%s2690 + $0x30] sm:$0xf]
        %v2704 = vld [vmem:[%s2690 + $0x34] sm:$0xf]
        %v2705 = vld [vmem:[%s2690 + $0x38] sm:$0xf]
        %v2706 = vld [vmem:[%s2690 + $0x3c] sm:$0xf]
        %v2723 = vunpack.c.l.b16 %v2691
        %v2724 = vunpack.c.l.b16 %v2692
        %v2725 = vunpack.c.l.b16 %v2693
        %v2726 = vunpack.c.l.b16 %v2694
        %v2727 = vunpack.c.l.b16 %v2695
        %v2728 = vunpack.c.l.b16 %v2696
        %v2729 = vunpack.c.l.b16 %v2697
        %v2730 = vunpack.c.l.b16 %v2698
        %v2731 = vunpack.c.l.b16 %v2699
        %v2732 = vunpack.c.l.b16 %v2700
        %v2733 = vunpack.c.l.b16 %v2701
        %v2734 = vunpack.c.l.b16 %v2702
        %v2735 = vunpack.c.l.b16 %v2703
        %v2736 = vunpack.c.l.b16 %v2704
        %v2737 = vunpack.c.l.b16 %v2705
        %v2738 = vunpack.c.l.b16 %v2706
        %v2739 = vpack.c.b16 %v2724, %v2723
        %v2740 = vpack.c.b16 %v2726, %v2725
        %v2741 = vpack.c.b16 %v2728, %v2727
        %v2742 = vpack.c.b16 %v2730, %v2729
        %v2743 = vpack.c.b16 %v2732, %v2731
        %v2744 = vpack.c.b16 %v2734, %v2733
        %v2745 = vpack.c.b16 %v2736, %v2735
        %v2746 = vpack.c.b16 %v2738, %v2737
        %2755 = vmatprep.subr.bf16.mxu0 0
        %2756 = vmatpush1.bf16.msra.mxu0 %v2739
        %2757 = vmatprep.subr.bf16.mxu0 0
        %2758 = vmatpush1.bf16.msra.mxu0 %v2740
        %2759 = vmatprep.subr.bf16.mxu0 0
        %2760 = vmatpush1.bf16.msra.mxu0 %v2741
        %2761 = vmatprep.subr.bf16.mxu0 0
        %2762 = vmatpush1.bf16.msra.mxu0 %v2742
        %2763 = vmatprep.subr.bf16.mxu0 0
        %2764 = vmatpush1.bf16.msra.mxu0 %v2743
        %2765 = vmatprep.subr.bf16.mxu0 0
        %2766 = vmatpush1.bf16.msra.mxu0 %v2744
        %2767 = vmatprep.subr.bf16.mxu0 0
        %2768 = vmatpush1.bf16.msra.mxu0 %v2745
        %2769 = vmatprep.subr.bf16.mxu0 0
        %2770 = vmatpush1.bf16.msra.mxu0 %v2746
        %2771 = vmatprep.subr.bf16.mxu0 0
        %2772 = vmatpush1.bf16.msra.mxu0 0
        %2773 = vmatprep.subr.bf16.mxu0 0
        %2774 = vmatpush1.bf16.msra.mxu0 0
        %2775 = vmatprep.subr.bf16.mxu0 0
        %2776 = vmatpush1.bf16.msra.mxu0 0
        %2777 = vmatprep.subr.bf16.mxu0 0
        %2778 = vmatpush1.bf16.msra.mxu0 0
        %2779 = vmatprep.subr.bf16.mxu0 0
        %2780 = vmatpush1.bf16.msra.mxu0 0
        %2781 = vmatprep.subr.bf16.mxu0 0
        %2782 = vmatpush1.bf16.msra.mxu0 0
        %2783 = vmatprep.subr.bf16.mxu0 0
        %2784 = vmatpush1.bf16.msra.mxu0 0
        %2785 = vmatprep.subr.bf16.mxu0 0
        %2786 = vmatpush1.bf16.msra.mxu0 0
        %2787 = vmatprep.mubr.bf16.mxu0 0
        %2788 = vmatmul.mubr.bf16.gmra.mrb[0].mxu0 %v2674
        %v2789 = vpop.f32.mrb[0].mxu0
        %v2790 = vadd.f32 0.0, %v2789
        %v2791 = vpop.f32.mrb[0].mxu0
        %v2792 = vpop.f32.mrb[0].mxu0
        %v2793 = vadd.f32 0.0, %v2792
        %v2794 = vpop.f32.mrb[0].mxu0
        %2795 = vmatprep.mubr.bf16.mxu0 0
        %2796 = vmatmul.mubr.bf16.gmra.mrb[0].mxu0 %v2675
        %v2797 = vpop.f32.mrb[0].mxu0
        %v2798 = vadd.f32 0.0, %v2797
        %v2799 = vpop.f32.mrb[0].mxu0
        %v2800 = vpop.f32.mrb[0].mxu0
        %v2801 = vadd.f32 0.0, %v2800
        %v2802 = vpop.f32.mrb[0].mxu0
        %2803 = vmatprep.mubr.bf16.mxu0 0
        %2804 = vmatmul.mubr.bf16.gmra.mrb[0].mxu0 %v2676
        %v2805 = vpop.f32.mrb[0].mxu0
        %v2806 = vadd.f32 0.0, %v2805
        %v2807 = vpop.f32.mrb[0].mxu0
        %v2808 = vpop.f32.mrb[0].mxu0
        %v2809 = vadd.f32 0.0, %v2808
        %v2810 = vpop.f32.mrb[0].mxu0
        %2811 = vmatprep.mubr.bf16.mxu0 0
        %2812 = vmatmul.mubr.bf16.gmra.mrb[0].mxu0 %v2677
        %v2813 = vpop.f32.mrb[0].mxu0
        %v2814 = vadd.f32 0.0, %v2813
        %v2815 = vpop.f32.mrb[0].mxu0
        %v2816 = vpop.f32.mrb[0].mxu0
        %v2817 = vadd.f32 0.0, %v2816
        %v2818 = vpop.f32.mrb[0].mxu0
        %2819 = vmatprep.mubr.bf16.mxu0 0
        %2820 = vmatmul.mubr.bf16.gmra.mrb[0].mxu0 %v2678
        %v2821 = vpop.f32.mrb[0].mxu0
        %v2822 = vadd.f32 0.0, %v2821
        %v2823 = vpop.f32.mrb[0].mxu0
        %v2824 = vpop.f32.mrb[0].mxu0
        %v2825 = vadd.f32 0.0, %v2824
        %v2826 = vpop.f32.mrb[0].mxu0
        %2827 = vmatprep.mubr.bf16.mxu0 0
        %2828 = vmatmul.mubr.bf16.gmra.mrb[0].mxu0 %v2679
        %v2829 = vpop.f32.mrb[0].mxu0
        %v2830 = vadd.f32 0.0, %v2829
        %v2831 = vpop.f32.mrb[0].mxu0
        %v2832 = vpop.f32.mrb[0].mxu0
        %v2833 = vadd.f32 0.0, %v2832
        %v2834 = vpop.f32.mrb[0].mxu0
        %2835 = vmatprep.mubr.bf16.mxu0 0
        %2836 = vmatmul.mubr.bf16.gmra.mrb[0].mxu0 %v2680
        %v2837 = vpop.f32.mrb[0].mxu0
        %v2838 = vadd.f32 0.0, %v2837
        %v2839 = vpop.f32.mrb[0].mxu0
        %v2840 = vpop.f32.mrb[0].mxu0
        %v2841 = vadd.f32 0.0, %v2840
        %v2842 = vpop.f32.mrb[0].mxu0
        %2843 = vmatprep.mubr.bf16.mxu0 0
        %2844 = vmatmul.mubr.bf16.gmra.mrb[0].mxu0 %v2681
        %v2845 = vpop.f32.mrb[0].mxu0
        %v2846 = vadd.f32 0.0, %v2845
        %v2847 = vpop.f32.mrb[0].mxu0
        %v2848 = vpop.f32.mrb[0].mxu0
        %v2849 = vadd.f32 0.0, %v2848
        %v2850 = vpop.f32.mrb[0].mxu0
        %2851 = vmatprep.mubr.bf16.mxu0 0
        %2852 = vmatmul.mubr.bf16.gmra.mrb[0].mxu0 %v2682
        %v2853 = vpop.f32.mrb[0].mxu0
        %v2854 = vadd.f32 0.0, %v2853
        %v2855 = vpop.f32.mrb[0].mxu0
        %v2856 = vpop.f32.mrb[0].mxu0
        %v2857 = vadd.f32 0.0, %v2856
        %v2858 = vpop.f32.mrb[0].mxu0
        %2859 = vmatprep.mubr.bf16.mxu0 0
        %2860 = vmatmul.mubr.bf16.gmra.mrb[0].mxu0 %v2683
        %v2861 = vpop.f32.mrb[0].mxu0
        %v2862 = vadd.f32 0.0, %v2861
        %v2863 = vpop.f32.mrb[0].mxu0
        %v2864 = vpop.f32.mrb[0].mxu0
        %v2865 = vadd.f32 0.0, %v2864
        %v2866 = vpop.f32.mrb[0].mxu0
        %2867 = vmatprep.mubr.bf16.mxu0 0
        %2868 = vmatmul.mubr.bf16.gmra.mrb[0].mxu0 %v2684
        %v2869 = vpop.f32.mrb[0].mxu0
        %v2870 = vadd.f32 0.0, %v2869
        %v2871 = vpop.f32.mrb[0].mxu0
        %v2872 = vpop.f32.mrb[0].mxu0
        %v2873 = vadd.f32 0.0, %v2872
        %v2874 = vpop.f32.mrb[0].mxu0
        %2875 = vmatprep.mubr.bf16.mxu0 0
        %2876 = vmatmul.mubr.bf16.gmra.mrb[0].mxu0 %v2685
        %v2877 = vpop.f32.mrb[0].mxu0
        %v2878 = vadd.f32 0.0, %v2877
        %v2879 = vpop.f32.mrb[0].mxu0
        %v2880 = vpop.f32.mrb[0].mxu0
        %v2881 = vadd.f32 0.0, %v2880
        %v2882 = vpop.f32.mrb[0].mxu0
        %2883 = vmatprep.mubr.bf16.mxu0 0
        %2884 = vmatmul.mubr.bf16.gmra.mrb[0].mxu0 %v2686
        %v2885 = vpop.f32.mrb[0].mxu0
        %v2886 = vadd.f32 0.0, %v2885
        %v2887 = vpop.f32.mrb[0].mxu0
        %v2888 = vpop.f32.mrb[0].mxu0
        %v2889 = vadd.f32 0.0, %v2888
        %v2890 = vpop.f32.mrb[0].mxu0
        %2891 = vmatprep.mubr.bf16.mxu0 0
        %2892 = vmatmul.mubr.bf16.gmra.mrb[0].mxu0 %v2687
        %v2893 = vpop.f32.mrb[0].mxu0
        %v2894 = vadd.f32 0.0, %v2893
        %v2895 = vpop.f32.mrb[0].mxu0
        %v2896 = vpop.f32.mrb[0].mxu0
        %v2897 = vadd.f32 0.0, %v2896
        %v2898 = vpop.f32.mrb[0].mxu0
        %2899 = vmatprep.mubr.bf16.mxu0 0
        %2900 = vmatmul.mubr.bf16.gmra.mrb[0].mxu0 %v2688
        %v2901 = vpop.f32.mrb[0].mxu0
        %v2902 = vadd.f32 0.0, %v2901
        %v2903 = vpop.f32.mrb[0].mxu0
        %v2904 = vpop.f32.mrb[0].mxu0
        %v2905 = vadd.f32 0.0, %v2904
        %v2906 = vpop.f32.mrb[0].mxu0
        %2907 = vmatprep.mubr.bf16.mxu0 0
        %2908 = vmatmul.mubr.bf16.gmra.mrb[0].mxu0 %v2689
        %v2909 = vpop.f32.mrb[0].mxu0
        %v2910 = vadd.f32 0.0, %v2909
        %v2911 = vpop.f32.mrb[0].mxu0
        %v2912 = vpop.f32.mrb[0].mxu0
        %v2913 = vadd.f32 0.0, %v2912
        %v2914 = vpop.f32.mrb[0].mxu0
        %2915 = vdwg.mxu0
        %v2916 = vadd.f32 %v2609, %v2790
        %v2917 = vadd.f32 %v2610, %v2793
        %v2918 = vadd.f32 %v2611, %v2798
        %v2919 = vadd.f32 %v2612, %v2801
        %v2920 = vadd.f32 %v2613, %v2806
        %v2921 = vadd.f32 %v2614, %v2809
        %v2922 = vadd.f32 %v2615, %v2814
        %v2923 = vadd.f32 %v2616, %v2817
        %v2924 = vadd.f32 %v2617, %v2822
        %v2925 = vadd.f32 %v2618, %v2825
        %v2926 = vadd.f32 %v2619, %v2830
        %v2927 = vadd.f32 %v2620, %v2833
        %v2928 = vadd.f32 %v2621, %v2838
        %v2929 = vadd.f32 %v2622, %v2841
        %v2930 = vadd.f32 %v2623, %v2846
        %v2931 = vadd.f32 %v2624, %v2849
        %v2932 = vadd.f32 %v2625, %v2854
        %v2933 = vadd.f32 %v2626, %v2857
        %v2934 = vadd.f32 %v2627, %v2862
        %v2935 = vadd.f32 %v2628, %v2865
        %v2936 = vadd.f32 %v2629, %v2870
        %v2937 = vadd.f32 %v2630, %v2873
        %v2938 = vadd.f32 %v2631, %v2878
        %v2939 = vadd.f32 %v2632, %v2881
        %v2940 = vadd.f32 %v2633, %v2886
        %v2941 = vadd.f32 %v2634, %v2889
        %v2942 = vadd.f32 %v2635, %v2894
        %v2943 = vadd.f32 %v2636, %v2897
        %v2944 = vadd.f32 %v2637, %v2902
        %v2945 = vadd.f32 %v2638, %v2905
        %v2946 = vadd.f32 %v2639, %v2910
        %v2947 = vadd.f32 %v2640, %v2913
        %v2948 = vld [vmem:[%s2641 + $0x1] sm:$0xff]
        %v2949 = vld [vmem:[%s2641 + $0x9] sm:$0xff]
        %v2950 = vld [vmem:[%s2641 + $0x19] sm:$0xff]
        %v2951 = vld [vmem:[%s2641 + $0x21] sm:$0xff]
        %v2952 = vld [vmem:[%s2641 + $0x31] sm:$0xff]
        %v2953 = vld [vmem:[%s2641 + $0x39] sm:$0xff]
        %v2954 = vld [vmem:[%s2641 + $0x49] sm:$0xff]
        %v2955 = vld [vmem:[%s2641 + $0x51] sm:$0xff]
        %v2956 = vld [vmem:[%s2641 + $0x61] sm:$0xff]
        %v2957 = vld [vmem:[%s2641 + $0x69] sm:$0xff]
        %v2958 = vld [vmem:[%s2641 + $0x79] sm:$0xff]
        %v2959 = vld [vmem:[%s2641 + $0x81] sm:$0xff]
        %v2960 = vld [vmem:[%s2641 + $0x91] sm:$0xff]
        %v2961 = vld [vmem:[%s2641 + $0x99] sm:$0xff]
        %v2962 = vld [vmem:[%s2641 + $0xa9] sm:$0xff]
        %v2963 = vld [vmem:[%s2641 + $0xb1] sm:$0xff]
        %v2964 = vld [vmem:[%s2641 + $0xc1] sm:$0xff]
        %v2965 = vld [vmem:[%s2641 + $0xc9] sm:$0xff]
        %v2966 = vld [vmem:[%s2641 + $0xd9] sm:$0xff]
        %v2967 = vld [vmem:[%s2641 + $0xe1] sm:$0xff]
        %v2968 = vld [vmem:[%s2641 + $0xf1] sm:$0xff]
        %v2969 = vld [vmem:[%s2641 + $0xf9] sm:$0xff]
        %v2970 = vld [vmem:[%s2641 + $0x109] sm:$0xff]
        %v2971 = vld [vmem:[%s2641 + $0x111] sm:$0xff]
        %v2972 = vld [vmem:[%s2641 + $0x121] sm:$0xff]
        %v2973 = vld [vmem:[%s2641 + $0x129] sm:$0xff]
        %v2974 = vld [vmem:[%s2641 + $0x139] sm:$0xff]
        %v2975 = vld [vmem:[%s2641 + $0x141] sm:$0xff]
        %v2976 = vld [vmem:[%s2641 + $0x151] sm:$0xff]
        %v2977 = vld [vmem:[%s2641 + $0x159] sm:$0xff]
        %v2978 = vld [vmem:[%s2641 + $0x169] sm:$0xff]
        %v2979 = vld [vmem:[%s2641 + $0x171] sm:$0xff]
        %v2980 = vpack.c.bf16 %v2949, %v2948
        %v2981 = vpack.c.bf16 %v2951, %v2950
        %v2982 = vpack.c.bf16 %v2953, %v2952
        %v2983 = vpack.c.bf16 %v2955, %v2954
        %v2984 = vpack.c.bf16 %v2957, %v2956
        %v2985 = vpack.c.bf16 %v2959, %v2958
        %v2986 = vpack.c.bf16 %v2961, %v2960
        %v2987 = vpack.c.bf16 %v2963, %v2962
        %v2988 = vpack.c.bf16 %v2965, %v2964
        %v2989 = vpack.c.bf16 %v2967, %v2966
        %v2990 = vpack.c.bf16 %v2969, %v2968
        %v2991 = vpack.c.bf16 %v2971, %v2970
        %v2992 = vpack.c.bf16 %v2973, %v2972
        %v2993 = vpack.c.bf16 %v2975, %v2974
        %v2994 = vpack.c.bf16 %v2977, %v2976
        %v2995 = vpack.c.bf16 %v2979, %v2978
        %s2996 = scalar_lea.vmem [#allocation8], 448
        %v2997 = vld [vmem:[%s2996] sm:$0xf]
        %v2998 = vld [vmem:[%s2996 + $0x4] sm:$0xf]
        %v2999 = vld [vmem:[%s2996 + $0x8] sm:$0xf]
        %v3000 = vld [vmem:[%s2996 + $0xc] sm:$0xf]
        %v3001 = vld [vmem:[%s2996 + $0x10] sm:$0xf]
        %v3002 = vld [vmem:[%s2996 + $0x14] sm:$0xf]
        %v3003 = vld [vmem:[%s2996 + $0x18] sm:$0xf]
        %v3004 = vld [vmem:[%s2996 + $0x1c] sm:$0xf]
        %v3005 = vld [vmem:[%s2996 + $0x20] sm:$0xf]
        %v3006 = vld [vmem:[%s2996 + $0x24] sm:$0xf]
        %v3007 = vld [vmem:[%s2996 + $0x28] sm:$0xf]
        %v3008 = vld [vmem:[%s2996 + $0x2c] sm:$0xf]
        %v3009 = vld [vmem:[%s2996 + $0x30] sm:$0xf]
        %v3010 = vld [vmem:[%s2996 + $0x34] sm:$0xf]
        %v3011 = vld [vmem:[%s2996 + $0x38] sm:$0xf]
        %v3012 = vld [vmem:[%s2996 + $0x3c] sm:$0xf]
        %v3029 = vunpack.c.l.b16 %v2997
        %v3030 = vunpack.c.l.b16 %v2998
        %v3031 = vunpack.c.l.b16 %v2999
        %v3032 = vunpack.c.l.b16 %v3000
        %v3033 = vunpack.c.l.b16 %v3001
        %v3034 = vunpack.c.l.b16 %v3002
        %v3035 = vunpack.c.l.b16 %v3003
        %v3036 = vunpack.c.l.b16 %v3004
        %v3037 = vunpack.c.l.b16 %v3005
        %v3038 = vunpack.c.l.b16 %v3006
        %v3039 = vunpack.c.l.b16 %v3007
        %v3040 = vunpack.c.l.b16 %v3008
        %v3041 = vunpack.c.l.b16 %v3009
        %v3042 = vunpack.c.l.b16 %v3010
        %v3043 = vunpack.c.l.b16 %v3011
        %v3044 = vunpack.c.l.b16 %v3012
        %v3045 = vpack.c.b16 %v3030, %v3029
        %v3046 = vpack.c.b16 %v3032, %v3031
        %v3047 = vpack.c.b16 %v3034, %v3033
        %v3048 = vpack.c.b16 %v3036, %v3035
        %v3049 = vpack.c.b16 %v3038, %v3037
        %v3050 = vpack.c.b16 %v3040, %v3039
        %v3051 = vpack.c.b16 %v3042, %v3041
        %v3052 = vpack.c.b16 %v3044, %v3043
        %3061 = vmatprep.subr.bf16.mxu0 0
        %3062 = vmatpush1.bf16.msra.mxu0 %v3045
        %3063 = vmatprep.subr.bf16.mxu0 0
        %3064 = vmatpush1.bf16.msra.mxu0 %v3046
        %3065 = vmatprep.subr.bf16.mxu0 0
        %3066 = vmatpush1.bf16.msra.mxu0 %v3047
        %3067 = vmatprep.subr.bf16.mxu0 0
        %3068 = vmatpush1.bf16.msra.mxu0 %v3048
        %3069 = vmatprep.subr.bf16.mxu0 0
        %3070 = vmatpush1.bf16.msra.mxu0 %v3049
        %3071 = vmatprep.subr.bf16.mxu0 0
        %3072 = vmatpush1.bf16.msra.mxu0 %v3050
        %3073 = vmatprep.subr.bf16.mxu0 0
        %3074 = vmatpush1.bf16.msra.mxu0 %v3051
        %3075 = vmatprep.subr.bf16.mxu0 0
        %3076 = vmatpush1.bf16.msra.mxu0 %v3052
        %3077 = vmatprep.subr.bf16.mxu0 0
        %3078 = vmatpush1.bf16.msra.mxu0 0
        %3079 = vmatprep.subr.bf16.mxu0 0
        %3080 = vmatpush1.bf16.msra.mxu0 0
        %3081 = vmatprep.subr.bf16.mxu0 0
        %3082 = vmatpush1.bf16.msra.mxu0 0
        %3083 = vmatprep.subr.bf16.mxu0 0
        %3084 = vmatpush1.bf16.msra.mxu0 0
        %3085 = vmatprep.subr.bf16.mxu0 0
        %3086 = vmatpush1.bf16.msra.mxu0 0
        %3087 = vmatprep.subr.bf16.mxu0 0
        %3088 = vmatpush1.bf16.msra.mxu0 0
        %3089 = vmatprep.subr.bf16.mxu0 0
        %3090 = vmatpush1.bf16.msra.mxu0 0
        %3091 = vmatprep.subr.bf16.mxu0 0
        %3092 = vmatpush1.bf16.msra.mxu0 0
        %3093 = vmatprep.mubr.bf16.mxu0 0
        %3094 = vmatmul.mubr.bf16.gmra.mrb[0].mxu0 %v2980
        %v3095 = vpop.f32.mrb[0].mxu0
        %v3096 = vadd.f32 0.0, %v3095
        %v3097 = vpop.f32.mrb[0].mxu0
        %v3098 = vpop.f32.mrb[0].mxu0
        %v3099 = vadd.f32 0.0, %v3098
        %v3100 = vpop.f32.mrb[0].mxu0
        %3101 = vmatprep.mubr.bf16.mxu0 0
        %3102 = vmatmul.mubr.bf16.gmra.mrb[0].mxu0 %v2981
        %v3103 = vpop.f32.mrb[0].mxu0
        %v3104 = vadd.f32 0.0, %v3103
        %v3105 = vpop.f32.mrb[0].mxu0
        %v3106 = vpop.f32.mrb[0].mxu0
        %v3107 = vadd.f32 0.0, %v3106
        %v3108 = vpop.f32.mrb[0].mxu0
        %3109 = vmatprep.mubr.bf16.mxu0 0
        %3110 = vmatmul.mubr.bf16.gmra.mrb[0].mxu0 %v2982
        %v3111 = vpop.f32.mrb[0].mxu0
        %v3112 = vadd.f32 0.0, %v3111
        %v3113 = vpop.f32.mrb[0].mxu0
        %v3114 = vpop.f32.mrb[0].mxu0
        %v3115 = vadd.f32 0.0, %v3114
        %v3116 = vpop.f32.mrb[0].mxu0
        %3117 = vmatprep.mubr.bf16.mxu0 0
        %3118 = vmatmul.mubr.bf16.gmra.mrb[0].mxu0 %v2983
        %v3119 = vpop.f32.mrb[0].mxu0
        %v3120 = vadd.f32 0.0, %v3119
        %v3121 = vpop.f32.mrb[0].mxu0
        %v3122 = vpop.f32.mrb[0].mxu0
        %v3123 = vadd.f32 0.0, %v3122
        %v3124 = vpop.f32.mrb[0].mxu0
        %3125 = vmatprep.mubr.bf16.mxu0 0
        %3126 = vmatmul.mubr.bf16.gmra.mrb[0].mxu0 %v2984
        %v3127 = vpop.f32.mrb[0].mxu0
        %v3128 = vadd.f32 0.0, %v3127
        %v3129 = vpop.f32.mrb[0].mxu0
        %v3130 = vpop.f32.mrb[0].mxu0
        %v3131 = vadd.f32 0.0, %v3130
        %v3132 = vpop.f32.mrb[0].mxu0
        %3133 = vmatprep.mubr.bf16.mxu0 0
        %3134 = vmatmul.mubr.bf16.gmra.mrb[0].mxu0 %v2985
        %v3135 = vpop.f32.mrb[0].mxu0
        %v3136 = vadd.f32 0.0, %v3135
        %v3137 = vpop.f32.mrb[0].mxu0
        %v3138 = vpop.f32.mrb[0].mxu0
        %v3139 = vadd.f32 0.0, %v3138
        %v3140 = vpop.f32.mrb[0].mxu0
        %3141 = vmatprep.mubr.bf16.mxu0 0
        %3142 = vmatmul.mubr.bf16.gmra.mrb[0].mxu0 %v2986
        %v3143 = vpop.f32.mrb[0].mxu0
        %v3144 = vadd.f32 0.0, %v3143
        %v3145 = vpop.f32.mrb[0].mxu0
        %v3146 = vpop.f32.mrb[0].mxu0
        %v3147 = vadd.f32 0.0, %v3146
        %v3148 = vpop.f32.mrb[0].mxu0
        %3149 = vmatprep.mubr.bf16.mxu0 0
        %3150 = vmatmul.mubr.bf16.gmra.mrb[0].mxu0 %v2987
        %v3151 = vpop.f32.mrb[0].mxu0
        %v3152 = vadd.f32 0.0, %v3151
        %v3153 = vpop.f32.mrb[0].mxu0
        %v3154 = vpop.f32.mrb[0].mxu0
        %v3155 = vadd.f32 0.0, %v3154
        %v3156 = vpop.f32.mrb[0].mxu0
        %3157 = vmatprep.mubr.bf16.mxu0 0
        %3158 = vmatmul.mubr.bf16.gmra.mrb[0].mxu0 %v2988
        %v3159 = vpop.f32.mrb[0].mxu0
        %v3160 = vadd.f32 0.0, %v3159
        %v3161 = vpop.f32.mrb[0].mxu0
        %v3162 = vpop.f32.mrb[0].mxu0
        %v3163 = vadd.f32 0.0, %v3162
        %v3164 = vpop.f32.mrb[0].mxu0
        %3165 = vmatprep.mubr.bf16.mxu0 0
        %3166 = vmatmul.mubr.bf16.gmra.mrb[0].mxu0 %v2989
        %v3167 = vpop.f32.mrb[0].mxu0
        %v3168 = vadd.f32 0.0, %v3167
        %v3169 = vpop.f32.mrb[0].mxu0
        %v3170 = vpop.f32.mrb[0].mxu0
        %v3171 = vadd.f32 0.0, %v3170
        %v3172 = vpop.f32.mrb[0].mxu0
        %3173 = vmatprep.mubr.bf16.mxu0 0
        %3174 = vmatmul.mubr.bf16.gmra.mrb[0].mxu0 %v2990
        %v3175 = vpop.f32.mrb[0].mxu0
        %v3176 = vadd.f32 0.0, %v3175
        %v3177 = vpop.f32.mrb[0].mxu0
        %v3178 = vpop.f32.mrb[0].mxu0
        %v3179 = vadd.f32 0.0, %v3178
        %v3180 = vpop.f32.mrb[0].mxu0
        %3181 = vmatprep.mubr.bf16.mxu0 0
        %3182 = vmatmul.mubr.bf16.gmra.mrb[0].mxu0 %v2991
        %v3183 = vpop.f32.mrb[0].mxu0
        %v3184 = vadd.f32 0.0, %v3183
        %v3185 = vpop.f32.mrb[0].mxu0
        %v3186 = vpop.f32.mrb[0].mxu0
        %v3187 = vadd.f32 0.0, %v3186
        %v3188 = vpop.f32.mrb[0].mxu0
        %3189 = vmatprep.mubr.bf16.mxu0 0
        %3190 = vmatmul.mubr.bf16.gmra.mrb[0].mxu0 %v2992
        %v3191 = vpop.f32.mrb[0].mxu0
        %v3192 = vadd.f32 0.0, %v3191
        %v3193 = vpop.f32.mrb[0].mxu0
        %v3194 = vpop.f32.mrb[0].mxu0
        %v3195 = vadd.f32 0.0, %v3194
        %v3196 = vpop.f32.mrb[0].mxu0
        %3197 = vmatprep.mubr.bf16.mxu0 0
        %3198 = vmatmul.mubr.bf16.gmra.mrb[0].mxu0 %v2993
        %v3199 = vpop.f32.mrb[0].mxu0
        %v3200 = vadd.f32 0.0, %v3199
        %v3201 = vpop.f32.mrb[0].mxu0
        %v3202 = vpop.f32.mrb[0].mxu0
        %v3203 = vadd.f32 0.0, %v3202
        %v3204 = vpop.f32.mrb[0].mxu0
        %3205 = vmatprep.mubr.bf16.mxu0 0
        %3206 = vmatmul.mubr.bf16.gmra.mrb[0].mxu0 %v2994
        %v3207 = vpop.f32.mrb[0].mxu0
        %v3208 = vadd.f32 0.0, %v3207
        %v3209 = vpop.f32.mrb[0].mxu0
        %v3210 = vpop.f32.mrb[0].mxu0
        %v3211 = vadd.f32 0.0, %v3210
        %v3212 = vpop.f32.mrb[0].mxu0
        %3213 = vmatprep.mubr.bf16.mxu0 0
        %3214 = vmatmul.mubr.bf16.gmra.mrb[0].mxu0 %v2995
        %v3215 = vpop.f32.mrb[0].mxu0
        %v3216 = vadd.f32 0.0, %v3215
        %v3217 = vpop.f32.mrb[0].mxu0
        %v3218 = vpop.f32.mrb[0].mxu0
        %v3219 = vadd.f32 0.0, %v3218
        %v3220 = vpop.f32.mrb[0].mxu0
        %3221 = vdwg.mxu0
        %v3222 = vadd.f32 %v2916, %v3096
        %v3223 = vadd.f32 %v2917, %v3099
        %v3224 = vadd.f32 %v2918, %v3104
        %v3225 = vadd.f32 %v2919, %v3107
        %v3226 = vadd.f32 %v2920, %v3112
        %v3227 = vadd.f32 %v2921, %v3115
        %v3228 = vadd.f32 %v2922, %v3120
        %v3229 = vadd.f32 %v2923, %v3123
        %v3230 = vadd.f32 %v2924, %v3128
        %v3231 = vadd.f32 %v2925, %v3131
        %v3232 = vadd.f32 %v2926, %v3136
        %v3233 = vadd.f32 %v2927, %v3139
        %v3234 = vadd.f32 %v2928, %v3144
        %v3235 = vadd.f32 %v2929, %v3147
        %v3236 = vadd.f32 %v2930, %v3152
        %v3237 = vadd.f32 %v2931, %v3155
        %v3238 = vadd.f32 %v2932, %v3160
        %v3239 = vadd.f32 %v2933, %v3163
        %v3240 = vadd.f32 %v2934, %v3168
        %v3241 = vadd.f32 %v2935, %v3171
        %v3242 = vadd.f32 %v2936, %v3176
        %v3243 = vadd.f32 %v2937, %v3179
        %v3244 = vadd.f32 %v2938, %v3184
        %v3245 = vadd.f32 %v2939, %v3187
        %v3246 = vadd.f32 %v2940, %v3192
        %v3247 = vadd.f32 %v2941, %v3195
        %v3248 = vadd.f32 %v2942, %v3200
        %v3249 = vadd.f32 %v2943, %v3203
        %v3250 = vadd.f32 %v2944, %v3208
        %v3251 = vadd.f32 %v2945, %v3211
        %v3252 = vadd.f32 %v2946, %v3216
        %v3253 = vadd.f32 %v2947, %v3219
        %v3254 = vld [vmem:[%s2641 + $0x2] sm:$0xff]
        %v3255 = vld [vmem:[%s2641 + $0xa] sm:$0xff]
        %v3256 = vld [vmem:[%s2641 + $0x1a] sm:$0xff]
        %v3257 = vld [vmem:[%s2641 + $0x22] sm:$0xff]
        %v3258 = vld [vmem:[%s2641 + $0x32] sm:$0xff]
        %v3259 = vld [vmem:[%s2641 + $0x3a] sm:$0xff]
        %v3260 = vld [vmem:[%s2641 + $0x4a] sm:$0xff]
        %v3261 = vld [vmem:[%s2641 + $0x52] sm:$0xff]
        %v3262 = vld [vmem:[%s2641 + $0x62] sm:$0xff]
        %v3263 = vld [vmem:[%s2641 + $0x6a] sm:$0xff]
        %v3264 = vld [vmem:[%s2641 + $0x7a] sm:$0xff]
        %v3265 = vld [vmem:[%s2641 + $0x82] sm:$0xff]
        %v3266 = vld [vmem:[%s2641 + $0x92] sm:$0xff]
        %v3267 = vld [vmem:[%s2641 + $0x9a] sm:$0xff]
        %v3268 = vld [vmem:[%s2641 + $0xaa] sm:$0xff]
        %v3269 = vld [vmem:[%s2641 + $0xb2] sm:$0xff]
        %v3270 = vld [vmem:[%s2641 + $0xc2] sm:$0xff]
        %v3271 = vld [vmem:[%s2641 + $0xca] sm:$0xff]
        %v3272 = vld [vmem:[%s2641 + $0xda] sm:$0xff]
        %v3273 = vld [vmem:[%s2641 + $0xe2] sm:$0xff]
        %v3274 = vld [vmem:[%s2641 + $0xf2] sm:$0xff]
        %v3275 = vld [vmem:[%s2641 + $0xfa] sm:$0xff]
        %v3276 = vld [vmem:[%s2641 + $0x10a] sm:$0xff]
        %v3277 = vld [vmem:[%s2641 + $0x112] sm:$0xff]
        %v3278 = vld [vmem:[%s2641 + $0x122] sm:$0xff]
        %v3279 = vld [vmem:[%s2641 + $0x12a] sm:$0xff]
        %v3280 = vld [vmem:[%s2641 + $0x13a] sm:$0xff]
        %v3281 = vld [vmem:[%s2641 + $0x142] sm:$0xff]
        %v3282 = vld [vmem:[%s2641 + $0x152] sm:$0xff]
        %v3283 = vld [vmem:[%s2641 + $0x15a] sm:$0xff]
        %v3284 = vld [vmem:[%s2641 + $0x16a] sm:$0xff]
        %v3285 = vld [vmem:[%s2641 + $0x172] sm:$0xff]
        %v3286 = vpack.c.bf16 %v3255, %v3254
        %v3287 = vpack.c.bf16 %v3257, %v3256
        %v3288 = vpack.c.bf16 %v3259, %v3258
        %v3289 = vpack.c.bf16 %v3261, %v3260
        %v3290 = vpack.c.bf16 %v3263, %v3262
        %v3291 = vpack.c.bf16 %v3265, %v3264
        %v3292 = vpack.c.bf16 %v3267, %v3266
        %v3293 = vpack.c.bf16 %v3269, %v3268
        %v3294 = vpack.c.bf16 %v3271, %v3270
        %v3295 = vpack.c.bf16 %v3273, %v3272
        %v3296 = vpack.c.bf16 %v3275, %v3274
        %v3297 = vpack.c.bf16 %v3277, %v3276
        %v3298 = vpack.c.bf16 %v3279, %v3278
        %v3299 = vpack.c.bf16 %v3281, %v3280
        %v3300 = vpack.c.bf16 %v3283, %v3282
        %v3301 = vpack.c.bf16 %v3285, %v3284
        %s3302 = scalar_lea.vmem [#allocation8], 512
        %v3303 = vld [vmem:[%s3302] sm:$0xf]
        %v3304 = vld [vmem:[%s3302 + $0x4] sm:$0xf]
        %v3305 = vld [vmem:[%s3302 + $0x8] sm:$0xf]
        %v3306 = vld [vmem:[%s3302 + $0xc] sm:$0xf]
        %v3307 = vld [vmem:[%s3302 + $0x10] sm:$0xf]
        %v3308 = vld [vmem:[%s3302 + $0x14] sm:$0xf]
        %v3309 = vld [vmem:[%s3302 + $0x18] sm:$0xf]
        %v3310 = vld [vmem:[%s3302 + $0x1c] sm:$0xf]
        %v3311 = vld [vmem:[%s3302 + $0x20] sm:$0xf]
        %v3312 = vld [vmem:[%s3302 + $0x24] sm:$0xf]
        %v3313 = vld [vmem:[%s3302 + $0x28] sm:$0xf]
        %v3314 = vld [vmem:[%s3302 + $0x2c] sm:$0xf]
        %v3315 = vld [vmem:[%s3302 + $0x30] sm:$0xf]
        %v3316 = vld [vmem:[%s3302 + $0x34] sm:$0xf]
        %v3317 = vld [vmem:[%s3302 + $0x38] sm:$0xf]
        %v3318 = vld [vmem:[%s3302 + $0x3c] sm:$0xf]
        %v3335 = vunpack.c.l.b16 %v3303
        %v3336 = vunpack.c.l.b16 %v3304
        %v3337 = vunpack.c.l.b16 %v3305
        %v3338 = vunpack.c.l.b16 %v3306
        %v3339 = vunpack.c.l.b16 %v3307
        %v3340 = vunpack.c.l.b16 %v3308
        %v3341 = vunpack.c.l.b16 %v3309
        %v3342 = vunpack.c.l.b16 %v3310
        %v3343 = vunpack.c.l.b16 %v3311
        %v3344 = vunpack.c.l.b16 %v3312
        %v3345 = vunpack.c.l.b16 %v3313
        %v3346 = vunpack.c.l.b16 %v3314
        %v3347 = vunpack.c.l.b16 %v3315
        %v3348 = vunpack.c.l.b16 %v3316
        %v3349 = vunpack.c.l.b16 %v3317
        %v3350 = vunpack.c.l.b16 %v3318
        %v3351 = vpack.c.b16 %v3336, %v3335
        %v3352 = vpack.c.b16 %v3338, %v3337
        %v3353 = vpack.c.b16 %v3340, %v3339
        %v3354 = vpack.c.b16 %v3342, %v3341
        %v3355 = vpack.c.b16 %v3344, %v3343
        %v3356 = vpack.c.b16 %v3346, %v3345
        %v3357 = vpack.c.b16 %v3348, %v3347
        %v3358 = vpack.c.b16 %v3350, %v3349
        %3367 = vmatprep.subr.bf16.mxu0 0
        %3368 = vmatpush1.bf16.msra.mxu0 %v3351
        %3369 = vmatprep.subr.bf16.mxu0 0
        %3370 = vmatpush1.bf16.msra.mxu0 %v3352
        %3371 = vmatprep.subr.bf16.mxu0 0
        %3372 = vmatpush1.bf16.msra.mxu0 %v3353
        %3373 = vmatprep.subr.bf16.mxu0 0
        %3374 = vmatpush1.bf16.msra.mxu0 %v3354
        %3375 = vmatprep.subr.bf16.mxu0 0
        %3376 = vmatpush1.bf16.msra.mxu0 %v3355
        %3377 = vmatprep.subr.bf16.mxu0 0
        %3378 = vmatpush1.bf16.msra.mxu0 %v3356
        %3379 = vmatprep.subr.bf16.mxu0 0
        %3380 = vmatpush1.bf16.msra.mxu0 %v3357
        %3381 = vmatprep.subr.bf16.mxu0 0
        %3382 = vmatpush1.bf16.msra.mxu0 %v3358
        %3383 = vmatprep.subr.bf16.mxu0 0
        %3384 = vmatpush1.bf16.msra.mxu0 0
        %3385 = vmatprep.subr.bf16.mxu0 0
        %3386 = vmatpush1.bf16.msra.mxu0 0
        %3387 = vmatprep.subr.bf16.mxu0 0
        %3388 = vmatpush1.bf16.msra.mxu0 0
        %3389 = vmatprep.subr.bf16.mxu0 0
        %3390 = vmatpush1.bf16.msra.mxu0 0
        %3391 = vmatprep.subr.bf16.mxu0 0
        %3392 = vmatpush1.bf16.msra.mxu0 0
        %3393 = vmatprep.subr.bf16.mxu0 0
        %3394 = vmatpush1.bf16.msra.mxu0 0
        %3395 = vmatprep.subr.bf16.mxu0 0
        %3396 = vmatpush1.bf16.msra.mxu0 0
        %3397 = vmatprep.subr.bf16.mxu0 0
        %3398 = vmatpush1.bf16.msra.mxu0 0
        %3399 = vmatprep.mubr.bf16.mxu0 0
        %3400 = vmatmul.mubr.bf16.gmra.mrb[0].mxu0 %v3286
        %v3401 = vpop.f32.mrb[0].mxu0
        %v3402 = vadd.f32 0.0, %v3401
        %v3403 = vpop.f32.mrb[0].mxu0
        %v3404 = vpop.f32.mrb[0].mxu0
        %v3405 = vadd.f32 0.0, %v3404
        %v3406 = vpop.f32.mrb[0].mxu0
        %3407 = vmatprep.mubr.bf16.mxu0 0
        %3408 = vmatmul.mubr.bf16.gmra.mrb[0].mxu0 %v3287
        %v3409 = vpop.f32.mrb[0].mxu0
        %v3410 = vadd.f32 0.0, %v3409
        %v3411 = vpop.f32.mrb[0].mxu0
        %v3412 = vpop.f32.mrb[0].mxu0
        %v3413 = vadd.f32 0.0, %v3412
        %v3414 = vpop.f32.mrb[0].mxu0
        %3415 = vmatprep.mubr.bf16.mxu0 0
        %3416 = vmatmul.mubr.bf16.gmra.mrb[0].mxu0 %v3288
        %v3417 = vpop.f32.mrb[0].mxu0
        %v3418 = vadd.f32 0.0, %v3417
        %v3419 = vpop.f32.mrb[0].mxu0
        %v3420 = vpop.f32.mrb[0].mxu0
        %v3421 = vadd.f32 0.0, %v3420
        %v3422 = vpop.f32.mrb[0].mxu0
        %3423 = vmatprep.mubr.bf16.mxu0 0
        %3424 = vmatmul.mubr.bf16.gmra.mrb[0].mxu0 %v3289
        %v3425 = vpop.f32.mrb[0].mxu0
        %v3426 = vadd.f32 0.0, %v3425
        %v3427 = vpop.f32.mrb[0].mxu0
        %v3428 = vpop.f32.mrb[0].mxu0
        %v3429 = vadd.f32 0.0, %v3428
        %v3430 = vpop.f32.mrb[0].mxu0
        %3431 = vmatprep.mubr.bf16.mxu0 0
        %3432 = vmatmul.mubr.bf16.gmra.mrb[0].mxu0 %v3290
        %v3433 = vpop.f32.mrb[0].mxu0
        %v3434 = vadd.f32 0.0, %v3433
        %v3435 = vpop.f32.mrb[0].mxu0
        %v3436 = vpop.f32.mrb[0].mxu0
        %v3437 = vadd.f32 0.0, %v3436
        %v3438 = vpop.f32.mrb[0].mxu0
        %3439 = vmatprep.mubr.bf16.mxu0 0
        %3440 = vmatmul.mubr.bf16.gmra.mrb[0].mxu0 %v3291
        %v3441 = vpop.f32.mrb[0].mxu0
        %v3442 = vadd.f32 0.0, %v3441
        %v3443 = vpop.f32.mrb[0].mxu0
        %v3444 = vpop.f32.mrb[0].mxu0
        %v3445 = vadd.f32 0.0, %v3444
        %v3446 = vpop.f32.mrb[0].mxu0
        %3447 = vmatprep.mubr.bf16.mxu0 0
        %3448 = vmatmul.mubr.bf16.gmra.mrb[0].mxu0 %v3292
        %v3449 = vpop.f32.mrb[0].mxu0
        %v3450 = vadd.f32 0.0, %v3449
        %v3451 = vpop.f32.mrb[0].mxu0
        %v3452 = vpop.f32.mrb[0].mxu0
        %v3453 = vadd.f32 0.0, %v3452
        %v3454 = vpop.f32.mrb[0].mxu0
        %3455 = vmatprep.mubr.bf16.mxu0 0
        %3456 = vmatmul.mubr.bf16.gmra.mrb[0].mxu0 %v3293
        %v3457 = vpop.f32.mrb[0].mxu0
        %v3458 = vadd.f32 0.0, %v3457
        %v3459 = vpop.f32.mrb[0].mxu0
        %v3460 = vpop.f32.mrb[0].mxu0
        %v3461 = vadd.f32 0.0, %v3460
        %v3462 = vpop.f32.mrb[0].mxu0
        %3463 = vmatprep.mubr.bf16.mxu0 0
        %3464 = vmatmul.mubr.bf16.gmra.mrb[0].mxu0 %v3294
        %v3465 = vpop.f32.mrb[0].mxu0
        %v3466 = vadd.f32 0.0, %v3465
        %v3467 = vpop.f32.mrb[0].mxu0
        %v3468 = vpop.f32.mrb[0].mxu0
        %v3469 = vadd.f32 0.0, %v3468
        %v3470 = vpop.f32.mrb[0].mxu0
        %3471 = vmatprep.mubr.bf16.mxu0 0
        %3472 = vmatmul.mubr.bf16.gmra.mrb[0].mxu0 %v3295
        %v3473 = vpop.f32.mrb[0].mxu0
        %v3474 = vadd.f32 0.0, %v3473
        %v3475 = vpop.f32.mrb[0].mxu0
        %v3476 = vpop.f32.mrb[0].mxu0
        %v3477 = vadd.f32 0.0, %v3476
        %v3478 = vpop.f32.mrb[0].mxu0
        %3479 = vmatprep.mubr.bf16.mxu0 0
        %3480 = vmatmul.mubr.bf16.gmra.mrb[0].mxu0 %v3296
        %v3481 = vpop.f32.mrb[0].mxu0
        %v3482 = vadd.f32 0.0, %v3481
        %v3483 = vpop.f32.mrb[0].mxu0
        %v3484 = vpop.f32.mrb[0].mxu0
        %v3485 = vadd.f32 0.0, %v3484
        %v3486 = vpop.f32.mrb[0].mxu0
        %3487 = vmatprep.mubr.bf16.mxu0 0
        %3488 = vmatmul.mubr.bf16.gmra.mrb[0].mxu0 %v3297
        %v3489 = vpop.f32.mrb[0].mxu0
        %v3490 = vadd.f32 0.0, %v3489
        %v3491 = vpop.f32.mrb[0].mxu0
        %v3492 = vpop.f32.mrb[0].mxu0
        %v3493 = vadd.f32 0.0, %v3492
        %v3494 = vpop.f32.mrb[0].mxu0
        %3495 = vmatprep.mubr.bf16.mxu0 0
        %3496 = vmatmul.mubr.bf16.gmra.mrb[0].mxu0 %v3298
        %v3497 = vpop.f32.mrb[0].mxu0
        %v3498 = vadd.f32 0.0, %v3497
        %v3499 = vpop.f32.mrb[0].mxu0
        %v3500 = vpop.f32.mrb[0].mxu0
        %v3501 = vadd.f32 0.0, %v3500
        %v3502 = vpop.f32.mrb[0].mxu0
        %3503 = vmatprep.mubr.bf16.mxu0 0
        %3504 = vmatmul.mubr.bf16.gmra.mrb[0].mxu0 %v3299
        %v3505 = vpop.f32.mrb[0].mxu0
        %v3506 = vadd.f32 0.0, %v3505
        %v3507 = vpop.f32.mrb[0].mxu0
        %v3508 = vpop.f32.mrb[0].mxu0
        %v3509 = vadd.f32 0.0, %v3508
        %v3510 = vpop.f32.mrb[0].mxu0
        %3511 = vmatprep.mubr.bf16.mxu0 0
        %3512 = vmatmul.mubr.bf16.gmra.mrb[0].mxu0 %v3300
        %v3513 = vpop.f32.mrb[0].mxu0
        %v3514 = vadd.f32 0.0, %v3513
        %v3515 = vpop.f32.mrb[0].mxu0
        %v3516 = vpop.f32.mrb[0].mxu0
        %v3517 = vadd.f32 0.0, %v3516
        %v3518 = vpop.f32.mrb[0].mxu0
        %3519 = vmatprep.mubr.bf16.mxu0 0
        %3520 = vmatmul.mubr.bf16.gmra.mrb[0].mxu0 %v3301
        %v3521 = vpop.f32.mrb[0].mxu0
        %v3522 = vadd.f32 0.0, %v3521
        %v3523 = vpop.f32.mrb[0].mxu0
        %v3524 = vpop.f32.mrb[0].mxu0
        %v3525 = vadd.f32 0.0, %v3524
        %v3526 = vpop.f32.mrb[0].mxu0
        %3527 = vdwg.mxu0
        %v3528 = vadd.f32 %v3222, %v3402
        %v3529 = vadd.f32 %v3223, %v3405
        %v3530 = vadd.f32 %v3224, %v3410
        %v3531 = vadd.f32 %v3225, %v3413
        %v3532 = vadd.f32 %v3226, %v3418
        %v3533 = vadd.f32 %v3227, %v3421
        %v3534 = vadd.f32 %v3228, %v3426
        %v3535 = vadd.f32 %v3229, %v3429
        %v3536 = vadd.f32 %v3230, %v3434
        %v3537 = vadd.f32 %v3231, %v3437
        %v3538 = vadd.f32 %v3232, %v3442
        %v3539 = vadd.f32 %v3233, %v3445
        %v3540 = vadd.f32 %v3234, %v3450
        %v3541 = vadd.f32 %v3235, %v3453
        %v3542 = vadd.f32 %v3236, %v3458
        %v3543 = vadd.f32 %v3237, %v3461
        %v3544 = vadd.f32 %v3238, %v3466
        %v3545 = vadd.f32 %v3239, %v3469
        %v3546 = vadd.f32 %v3240, %v3474
        %v3547 = vadd.f32 %v3241, %v3477
        %v3548 = vadd.f32 %v3242, %v3482
        %v3549 = vadd.f32 %v3243, %v3485
        %v3550 = vadd.f32 %v3244, %v3490
        %v3551 = vadd.f32 %v3245, %v3493
        %v3552 = vadd.f32 %v3246, %v3498
        %v3553 = vadd.f32 %v3247, %v3501
        %v3554 = vadd.f32 %v3248, %v3506
        %v3555 = vadd.f32 %v3249, %v3509
        %v3556 = vadd.f32 %v3250, %v3514
        %v3557 = vadd.f32 %v3251, %v3517
        %v3558 = vadd.f32 %v3252, %v3522
        %v3559 = vadd.f32 %v3253, %v3525
        %v3560 = vld [vmem:[%s4] sm:$0x1]
        %v3562 = vlaneseq
        %v3563 = vshrl.u32 %v3562, 7
        %v3564 = vsub.s32 0, %v3563
        %v3565 = vrot.slane %v3560, %v3564
        %v3567 = vadd.f32 %v3528, %v3565
        %v3568 = vadd.f32 %v3529, %v3565
        %v3569 = vadd.f32 %v3530, %v3565
        %v3570 = vadd.f32 %v3531, %v3565
        %v3571 = vadd.f32 %v3532, %v3565
        %v3572 = vadd.f32 %v3533, %v3565
        %v3573 = vadd.f32 %v3534, %v3565
        %v3574 = vadd.f32 %v3535, %v3565
        %v3575 = vadd.f32 %v3536, %v3565
        %v3576 = vadd.f32 %v3537, %v3565
        %v3577 = vadd.f32 %v3538, %v3565
        %v3578 = vadd.f32 %v3539, %v3565
        %v3579 = vadd.f32 %v3540, %v3565
        %v3580 = vadd.f32 %v3541, %v3565
        %v3581 = vadd.f32 %v3542, %v3565
        %v3582 = vadd.f32 %v3543, %v3565
        %v3583 = vadd.f32 %v3544, %v3565
        %v3584 = vadd.f32 %v3545, %v3565
        %v3585 = vadd.f32 %v3546, %v3565
        %v3586 = vadd.f32 %v3547, %v3565
        %v3587 = vadd.f32 %v3548, %v3565
        %v3588 = vadd.f32 %v3549, %v3565
        %v3589 = vadd.f32 %v3550, %v3565
        %v3590 = vadd.f32 %v3551, %v3565
        %v3591 = vadd.f32 %v3552, %v3565
        %v3592 = vadd.f32 %v3553, %v3565
        %v3593 = vadd.f32 %v3554, %v3565
        %v3594 = vadd.f32 %v3555, %v3565
        %v3595 = vadd.f32 %v3556, %v3565
        %v3596 = vadd.f32 %v3557, %v3565
        %v3597 = vadd.f32 %v3558, %v3565
        %v3598 = vadd.f32 %v3559, %v3565
        %vm3599 = vcmp.gt.f32.partialorder %v3567, 0.0
        %vm3600 = vcmp.gt.f32.partialorder %v3568, 0.0
        %vm3601 = vcmp.gt.f32.partialorder %v3569, 0.0
        %vm3602 = vcmp.gt.f32.partialorder %v3570, 0.0
        %vm3603 = vcmp.gt.f32.partialorder %v3571, 0.0
        %vm3604 = vcmp.gt.f32.partialorder %v3572, 0.0
        %vm3605 = vcmp.gt.f32.partialorder %v3573, 0.0
        %vm3606 = vcmp.gt.f32.partialorder %v3574, 0.0
        %vm3607 = vcmp.gt.f32.partialorder %v3575, 0.0
        %vm3608 = vcmp.gt.f32.partialorder %v3576, 0.0
        %vm3609 = vcmp.gt.f32.partialorder %v3577, 0.0
        %vm3610 = vcmp.gt.f32.partialorder %v3578, 0.0
        %vm3611 = vcmp.gt.f32.partialorder %v3579, 0.0
        %vm3612 = vcmp.gt.f32.partialorder %v3580, 0.0
        %vm3613 = vcmp.gt.f32.partialorder %v3581, 0.0
        %vm3614 = vcmp.gt.f32.partialorder %v3582, 0.0
        %vm3615 = vcmp.gt.f32.partialorder %v3583, 0.0
        %vm3616 = vcmp.gt.f32.partialorder %v3584, 0.0
        %vm3617 = vcmp.gt.f32.partialorder %v3585, 0.0
        %vm3618 = vcmp.gt.f32.partialorder %v3586, 0.0
        %vm3619 = vcmp.gt.f32.partialorder %v3587, 0.0
        %vm3620 = vcmp.gt.f32.partialorder %v3588, 0.0
        %vm3621 = vcmp.gt.f32.partialorder %v3589, 0.0
        %vm3622 = vcmp.gt.f32.partialorder %v3590, 0.0
        %vm3623 = vcmp.gt.f32.partialorder %v3591, 0.0
        %vm3624 = vcmp.gt.f32.partialorder %v3592, 0.0
        %vm3625 = vcmp.gt.f32.partialorder %v3593, 0.0
        %vm3626 = vcmp.gt.f32.partialorder %v3594, 0.0
        %vm3627 = vcmp.gt.f32.partialorder %v3595, 0.0
        %vm3628 = vcmp.gt.f32.partialorder %v3596, 0.0
        %vm3629 = vcmp.gt.f32.partialorder %v3597, 0.0
        %vm3630 = vcmp.gt.f32.partialorder %v3598, 0.0
        %v3631 = vmul.f32 %v3567, 0.01
        %v3632 = vmul.f32 %v3568, 0.01
        %v3633 = vmul.f32 %v3569, 0.01
        %v3634 = vmul.f32 %v3570, 0.01
        %v3635 = vmul.f32 %v3571, 0.01
        %v3636 = vmul.f32 %v3572, 0.01
        %v3637 = vmul.f32 %v3573, 0.01
        %v3638 = vmul.f32 %v3574, 0.01
        %v3639 = vmul.f32 %v3575, 0.01
        %v3640 = vmul.f32 %v3576, 0.01
        %v3641 = vmul.f32 %v3577, 0.01
        %v3642 = vmul.f32 %v3578, 0.01
        %v3643 = vmul.f32 %v3579, 0.01
        %v3644 = vmul.f32 %v3580, 0.01
        %v3645 = vmul.f32 %v3581, 0.01
        %v3646 = vmul.f32 %v3582, 0.01
        %v3647 = vmul.f32 %v3583, 0.01
        %v3648 = vmul.f32 %v3584, 0.01
        %v3649 = vmul.f32 %v3585, 0.01
        %v3650 = vmul.f32 %v3586, 0.01
        %v3651 = vmul.f32 %v3587, 0.01
        %v3652 = vmul.f32 %v3588, 0.01
        %v3653 = vmul.f32 %v3589, 0.01
        %v3654 = vmul.f32 %v3590, 0.01
        %v3655 = vmul.f32 %v3591, 0.01
        %v3656 = vmul.f32 %v3592, 0.01
        %v3657 = vmul.f32 %v3593, 0.01
        %v3658 = vmul.f32 %v3594, 0.01
        %v3659 = vmul.f32 %v3595, 0.01
        %v3660 = vmul.f32 %v3596, 0.01
        %v3661 = vmul.f32 %v3597, 0.01
        %v3662 = vmul.f32 %v3598, 0.01
        %v3663 = vsel %vm3599, %v3567, %v3631
        %v3664 = vsel %vm3600, %v3568, %v3632
        %v3665 = vsel %vm3601, %v3569, %v3633
        %v3666 = vsel %vm3602, %v3570, %v3634
        %v3667 = vsel %vm3603, %v3571, %v3635
        %v3668 = vsel %vm3604, %v3572, %v3636
        %v3669 = vsel %vm3605, %v3573, %v3637
        %v3670 = vsel %vm3606, %v3574, %v3638
        %v3671 = vsel %vm3607, %v3575, %v3639
        %v3672 = vsel %vm3608, %v3576, %v3640
        %v3673 = vsel %vm3609, %v3577, %v3641
        %v3674 = vsel %vm3610, %v3578, %v3642
        %v3675 = vsel %vm3611, %v3579, %v3643
        %v3676 = vsel %vm3612, %v3580, %v3644
        %v3677 = vsel %vm3613, %v3581, %v3645
        %v3678 = vsel %vm3614, %v3582, %v3646
        %v3679 = vsel %vm3615, %v3583, %v3647
        %v3680 = vsel %vm3616, %v3584, %v3648
        %v3681 = vsel %vm3617, %v3585, %v3649
        %v3682 = vsel %vm3618, %v3586, %v3650
        %v3683 = vsel %vm3619, %v3587, %v3651
        %v3684 = vsel %vm3620, %v3588, %v3652
        %v3685 = vsel %vm3621, %v3589, %v3653
        %v3686 = vsel %vm3622, %v3590, %v3654
        %v3687 = vsel %vm3623, %v3591, %v3655
        %v3688 = vsel %vm3624, %v3592, %v3656
        %v3689 = vsel %vm3625, %v3593, %v3657
        %v3690 = vsel %vm3626, %v3594, %v3658
        %v3691 = vsel %vm3627, %v3595, %v3659
        %v3692 = vsel %vm3628, %v3596, %v3660
        %v3693 = vsel %vm3629, %v3597, %v3661
        %v3694 = vsel %vm3630, %v3598, %v3662
        %v3695 = vpack.c.bf16 %v3664, %v3663
        %v3696 = vpack.c.bf16 %v3666, %v3665
        %v3697 = vpack.c.bf16 %v3668, %v3667
        %v3698 = vpack.c.bf16 %v3670, %v3669
        %v3699 = vpack.c.bf16 %v3672, %v3671
        %v3700 = vpack.c.bf16 %v3674, %v3673
        %v3701 = vpack.c.bf16 %v3676, %v3675
        %v3702 = vpack.c.bf16 %v3678, %v3677
        %v3703 = vpack.c.bf16 %v3680, %v3679
        %v3704 = vpack.c.bf16 %v3682, %v3681
        %v3705 = vpack.c.bf16 %v3684, %v3683
        %v3706 = vpack.c.bf16 %v3686, %v3685
        %v3707 = vpack.c.bf16 %v3688, %v3687
        %v3708 = vpack.c.bf16 %v3690, %v3689
        %v3709 = vpack.c.bf16 %v3692, %v3691
        %v3710 = vpack.c.bf16 %v3694, %v3693
        %v3711 = vld [vmem:[#allocation9] sm:$0xf]
        %v3712 = vld [vmem:[#allocation9 + $0x4] sm:$0xf]
        %v3713 = vld [vmem:[#allocation9 + $0x8] sm:$0xf]
        %v3714 = vld [vmem:[#allocation9 + $0xc] sm:$0xf]
        %v3715 = vld [vmem:[#allocation9 + $0x10] sm:$0xf]
        %v3716 = vld [vmem:[#allocation9 + $0x14] sm:$0xf]
        %v3717 = vld [vmem:[#allocation9 + $0x18] sm:$0xf]
        %v3718 = vld [vmem:[#allocation9 + $0x1c] sm:$0xf]
        %v3719 = vld [vmem:[#allocation9 + $0x20] sm:$0xf]
        %v3720 = vld [vmem:[#allocation9 + $0x24] sm:$0xf]
        %v3721 = vld [vmem:[#allocation9 + $0x28] sm:$0xf]
        %v3722 = vld [vmem:[#allocation9 + $0x2c] sm:$0xf]
        %v3723 = vld [vmem:[#allocation9 + $0x30] sm:$0xf]
        %v3724 = vld [vmem:[#allocation9 + $0x34] sm:$0xf]
        %v3725 = vld [vmem:[#allocation9 + $0x38] sm:$0xf]
        %v3726 = vld [vmem:[#allocation9 + $0x3c] sm:$0xf]
        %v3727 = vld [vmem:[%s6] sm:$0x1]
        %v3729 = vlaneseq
        %v3730 = vshrl.u32 %v3729, 7
        %v3731 = vsub.s32 0, %v3730
        %v3732 = vrot.slane %v3727, %v3731
        %v3750 = vunpack.c.l.b16 %v3711
        %v3751 = vunpack.c.l.b16 %v3712
        %v3752 = vunpack.c.l.b16 %v3713
        %v3753 = vunpack.c.l.b16 %v3714
        %v3754 = vunpack.c.l.b16 %v3715
        %v3755 = vunpack.c.l.b16 %v3716
        %v3756 = vunpack.c.l.b16 %v3717
        %v3757 = vunpack.c.l.b16 %v3718
        %v3758 = vunpack.c.l.b16 %v3719
        %v3759 = vunpack.c.l.b16 %v3720
        %v3760 = vunpack.c.l.b16 %v3721
        %v3761 = vunpack.c.l.b16 %v3722
        %v3762 = vunpack.c.l.b16 %v3723
        %v3763 = vunpack.c.l.b16 %v3724
        %v3764 = vunpack.c.l.b16 %v3725
        %v3765 = vunpack.c.l.b16 %v3726
        %v3766 = vpack.c.b16 %v3751, %v3750
        %v3767 = vpack.c.b16 %v3753, %v3752
        %v3768 = vpack.c.b16 %v3755, %v3754
        %v3769 = vpack.c.b16 %v3757, %v3756
        %v3770 = vpack.c.b16 %v3759, %v3758
        %v3771 = vpack.c.b16 %v3761, %v3760
        %v3772 = vpack.c.b16 %v3763, %v3762
        %v3773 = vpack.c.b16 %v3765, %v3764
        %3782 = vmatprep.subr.bf16.mxu0 0
        %3783 = vmatpush1.bf16.msra.mxu0 %v3766
        %3784 = vmatprep.subr.bf16.mxu0 0
        %3785 = vmatpush1.bf16.msra.mxu0 %v3767
        %3786 = vmatprep.subr.bf16.mxu0 0
        %3787 = vmatpush1.bf16.msra.mxu0 %v3768
        %3788 = vmatprep.subr.bf16.mxu0 0
        %3789 = vmatpush1.bf16.msra.mxu0 %v3769
        %3790 = vmatprep.subr.bf16.mxu0 0
        %3791 = vmatpush1.bf16.msra.mxu0 %v3770
        %3792 = vmatprep.subr.bf16.mxu0 0
        %3793 = vmatpush1.bf16.msra.mxu0 %v3771
        %3794 = vmatprep.subr.bf16.mxu0 0
        %3795 = vmatpush1.bf16.msra.mxu0 %v3772
        %3796 = vmatprep.subr.bf16.mxu0 0
        %3797 = vmatpush1.bf16.msra.mxu0 %v3773
        %3798 = vmatprep.subr.bf16.mxu0 0
        %3799 = vmatpush1.bf16.msra.mxu0 0
        %3800 = vmatprep.subr.bf16.mxu0 0
        %3801 = vmatpush1.bf16.msra.mxu0 0
        %3802 = vmatprep.subr.bf16.mxu0 0
        %3803 = vmatpush1.bf16.msra.mxu0 0
        %3804 = vmatprep.subr.bf16.mxu0 0
        %3805 = vmatpush1.bf16.msra.mxu0 0
        %3806 = vmatprep.subr.bf16.mxu0 0
        %3807 = vmatpush1.bf16.msra.mxu0 0
        %3808 = vmatprep.subr.bf16.mxu0 0
        %3809 = vmatpush1.bf16.msra.mxu0 0
        %3810 = vmatprep.subr.bf16.mxu0 0
        %3811 = vmatpush1.bf16.msra.mxu0 0
        %3812 = vmatprep.subr.bf16.mxu0 0
        %3813 = vmatpush1.bf16.msra.mxu0 0
        %3814 = vmatprep.mubr.bf16.mxu0 0
        %3815 = vmatmul.mubr.bf16.gmra.mrb[0].mxu0 %v3695
        %v3816 = vpop.f32.mrb[0].mxu0
        %v3817 = vadd.f32 %v3732, %v3816
        %v3818 = vpop.f32.mrb[0].mxu0
        %v3819 = vpop.f32.mrb[0].mxu0
        %v3820 = vadd.f32 %v3732, %v3819
        %v3821 = vpop.f32.mrb[0].mxu0
        %3822 = vmatprep.mubr.bf16.mxu0 0
        %3823 = vmatmul.mubr.bf16.gmra.mrb[0].mxu0 %v3696
        %v3824 = vpop.f32.mrb[0].mxu0
        %v3825 = vadd.f32 %v3732, %v3824
        %v3826 = vpop.f32.mrb[0].mxu0
        %v3827 = vpop.f32.mrb[0].mxu0
        %v3828 = vadd.f32 %v3732, %v3827
        %v3829 = vpop.f32.mrb[0].mxu0
        %3830 = vmatprep.mubr.bf16.mxu0 0
        %3831 = vmatmul.mubr.bf16.gmra.mrb[0].mxu0 %v3697
        %v3832 = vpop.f32.mrb[0].mxu0
        %v3833 = vadd.f32 %v3732, %v3832
        %v3834 = vpop.f32.mrb[0].mxu0
        %v3835 = vpop.f32.mrb[0].mxu0
        %v3836 = vadd.f32 %v3732, %v3835
        %v3837 = vpop.f32.mrb[0].mxu0
        %3838 = vmatprep.mubr.bf16.mxu0 0
        %3839 = vmatmul.mubr.bf16.gmra.mrb[0].mxu0 %v3698
        %v3840 = vpop.f32.mrb[0].mxu0
        %v3841 = vadd.f32 %v3732, %v3840
        %v3842 = vpop.f32.mrb[0].mxu0
        %v3843 = vpop.f32.mrb[0].mxu0
        %v3844 = vadd.f32 %v3732, %v3843
        %v3845 = vpop.f32.mrb[0].mxu0
        %3846 = vmatprep.mubr.bf16.mxu0 0
        %3847 = vmatmul.mubr.bf16.gmra.mrb[0].mxu0 %v3699
        %v3848 = vpop.f32.mrb[0].mxu0
        %v3849 = vadd.f32 %v3732, %v3848
        %v3850 = vpop.f32.mrb[0].mxu0
        %v3851 = vpop.f32.mrb[0].mxu0
        %v3852 = vadd.f32 %v3732, %v3851
        %v3853 = vpop.f32.mrb[0].mxu0
        %3854 = vmatprep.mubr.bf16.mxu0 0
        %3855 = vmatmul.mubr.bf16.gmra.mrb[0].mxu0 %v3700
        %v3856 = vpop.f32.mrb[0].mxu0
        %v3857 = vadd.f32 %v3732, %v3856
        %v3858 = vpop.f32.mrb[0].mxu0
        %v3859 = vpop.f32.mrb[0].mxu0
        %v3860 = vadd.f32 %v3732, %v3859
        %v3861 = vpop.f32.mrb[0].mxu0
        %3862 = vmatprep.mubr.bf16.mxu0 0
        %3863 = vmatmul.mubr.bf16.gmra.mrb[0].mxu0 %v3701
        %v3864 = vpop.f32.mrb[0].mxu0
        %v3865 = vadd.f32 %v3732, %v3864
        %v3866 = vpop.f32.mrb[0].mxu0
        %v3867 = vpop.f32.mrb[0].mxu0
        %v3868 = vadd.f32 %v3732, %v3867
        %v3869 = vpop.f32.mrb[0].mxu0
        %3870 = vmatprep.mubr.bf16.mxu0 0
        %3871 = vmatmul.mubr.bf16.gmra.mrb[0].mxu0 %v3702
        %v3872 = vpop.f32.mrb[0].mxu0
        %v3873 = vadd.f32 %v3732, %v3872
        %v3874 = vpop.f32.mrb[0].mxu0
        %v3875 = vpop.f32.mrb[0].mxu0
        %v3876 = vadd.f32 %v3732, %v3875
        %v3877 = vpop.f32.mrb[0].mxu0
        %3878 = vmatprep.mubr.bf16.mxu0 0
        %3879 = vmatmul.mubr.bf16.gmra.mrb[0].mxu0 %v3703
        %v3880 = vpop.f32.mrb[0].mxu0
        %v3881 = vadd.f32 %v3732, %v3880
        %v3882 = vpop.f32.mrb[0].mxu0
        %v3883 = vpop.f32.mrb[0].mxu0
        %v3884 = vadd.f32 %v3732, %v3883
        %v3885 = vpop.f32.mrb[0].mxu0
        %3886 = vmatprep.mubr.bf16.mxu0 0
        %3887 = vmatmul.mubr.bf16.gmra.mrb[0].mxu0 %v3704
        %v3888 = vpop.f32.mrb[0].mxu0
        %v3889 = vadd.f32 %v3732, %v3888
        %v3890 = vpop.f32.mrb[0].mxu0
        %v3891 = vpop.f32.mrb[0].mxu0
        %v3892 = vadd.f32 %v3732, %v3891
        %v3893 = vpop.f32.mrb[0].mxu0
        %3894 = vmatprep.mubr.bf16.mxu0 0
        %3895 = vmatmul.mubr.bf16.gmra.mrb[0].mxu0 %v3705
        %v3896 = vpop.f32.mrb[0].mxu0
        %v3897 = vadd.f32 %v3732, %v3896
        %v3898 = vpop.f32.mrb[0].mxu0
        %v3899 = vpop.f32.mrb[0].mxu0
        %v3900 = vadd.f32 %v3732, %v3899
        %v3901 = vpop.f32.mrb[0].mxu0
        %3902 = vmatprep.mubr.bf16.mxu0 0
        %3903 = vmatmul.mubr.bf16.gmra.mrb[0].mxu0 %v3706
        %v3904 = vpop.f32.mrb[0].mxu0
        %v3905 = vadd.f32 %v3732, %v3904
        %v3906 = vpop.f32.mrb[0].mxu0
        %v3907 = vpop.f32.mrb[0].mxu0
        %v3908 = vadd.f32 %v3732, %v3907
        %v3909 = vpop.f32.mrb[0].mxu0
        %3910 = vmatprep.mubr.bf16.mxu0 0
        %3911 = vmatmul.mubr.bf16.gmra.mrb[0].mxu0 %v3707
        %v3912 = vpop.f32.mrb[0].mxu0
        %v3913 = vadd.f32 %v3732, %v3912
        %v3914 = vpop.f32.mrb[0].mxu0
        %v3915 = vpop.f32.mrb[0].mxu0
        %v3916 = vadd.f32 %v3732, %v3915
        %v3917 = vpop.f32.mrb[0].mxu0
        %3918 = vmatprep.mubr.bf16.mxu0 0
        %3919 = vmatmul.mubr.bf16.gmra.mrb[0].mxu0 %v3708
        %v3920 = vpop.f32.mrb[0].mxu0
        %v3921 = vadd.f32 %v3732, %v3920
        %v3922 = vpop.f32.mrb[0].mxu0
        %v3923 = vpop.f32.mrb[0].mxu0
        %v3924 = vadd.f32 %v3732, %v3923
        %v3925 = vpop.f32.mrb[0].mxu0
        %3926 = vmatprep.mubr.bf16.mxu0 0
        %3927 = vmatmul.mubr.bf16.gmra.mrb[0].mxu0 %v3709
        %v3928 = vpop.f32.mrb[0].mxu0
        %v3929 = vadd.f32 %v3732, %v3928
        %v3930 = vpop.f32.mrb[0].mxu0
        %v3931 = vpop.f32.mrb[0].mxu0
        %v3932 = vadd.f32 %v3732, %v3931
        %v3933 = vpop.f32.mrb[0].mxu0
        %3934 = vmatprep.mubr.bf16.mxu0 0
        %3935 = vmatmul.mubr.bf16.gmra.mrb[0].mxu0 %v3710
        %v3936 = vpop.f32.mrb[0].mxu0
        %v3937 = vadd.f32 %v3732, %v3936
        %v3938 = vpop.f32.mrb[0].mxu0
        %v3939 = vpop.f32.mrb[0].mxu0
        %v3940 = vadd.f32 %v3732, %v3939
        %v3941 = vpop.f32.mrb[0].mxu0
        %3942 = vdwg.mxu0
        %v3943 = vunpack.c.l.bf16 %v342
        %v3944 = vunpack.c.l.bf16 %v343
        %v3945 = vunpack.c.l.bf16 %v344
        %v3946 = vunpack.c.l.bf16 %v345
        %v3947 = vunpack.c.l.bf16 %v346
        %v3948 = vunpack.c.l.bf16 %v347
        %v3949 = vunpack.c.l.bf16 %v348
        %v3950 = vunpack.c.l.bf16 %v349
        %v3951 = vunpack.c.l.bf16 %v350
        %v3952 = vunpack.c.l.bf16 %v351
        %v3953 = vunpack.c.l.bf16 %v352
        %v3954 = vunpack.c.l.bf16 %v353
        %v3955 = vunpack.c.l.bf16 %v354
        %v3956 = vunpack.c.l.bf16 %v355
        %v3957 = vunpack.c.l.bf16 %v356
        %v3958 = vunpack.c.l.bf16 %v357
        %v3959 = vunpack.c.l.bf16 %v358
        %v3960 = vunpack.c.l.bf16 %v359
        %v3961 = vunpack.c.l.bf16 %v360
        %v3962 = vunpack.c.l.bf16 %v361
        %v3963 = vunpack.c.l.bf16 %v362
        %v3964 = vunpack.c.l.bf16 %v363
        %v3965 = vunpack.c.l.bf16 %v364
        %v3966 = vunpack.c.l.bf16 %v365
        %v3967 = vunpack.c.l.bf16 %v366
        %v3968 = vunpack.c.l.bf16 %v367
        %v3969 = vunpack.c.l.bf16 %v368
        %v3970 = vunpack.c.l.bf16 %v369
        %v3971 = vunpack.c.l.bf16 %v370
        %v3972 = vunpack.c.l.bf16 %v371
        %v3973 = vunpack.c.l.bf16 %v372
        %v3974 = vunpack.c.l.bf16 %v373
        %v3975 = vadd.f32 %v3817, %v3943
        %v3976 = vadd.f32 %v3820, %v3944
        %v3977 = vadd.f32 %v3825, %v3945
        %v3978 = vadd.f32 %v3828, %v3946
        %v3979 = vadd.f32 %v3833, %v3947
        %v3980 = vadd.f32 %v3836, %v3948
        %v3981 = vadd.f32 %v3841, %v3949
        %v3982 = vadd.f32 %v3844, %v3950
        %v3983 = vadd.f32 %v3849, %v3951
        %v3984 = vadd.f32 %v3852, %v3952
        %v3985 = vadd.f32 %v3857, %v3953
        %v3986 = vadd.f32 %v3860, %v3954
        %v3987 = vadd.f32 %v3865, %v3955
        %v3988 = vadd.f32 %v3868, %v3956
        %v3989 = vadd.f32 %v3873, %v3957
        %v3990 = vadd.f32 %v3876, %v3958
        %v3991 = vadd.f32 %v3881, %v3959
        %v3992 = vadd.f32 %v3884, %v3960
        %v3993 = vadd.f32 %v3889, %v3961
        %v3994 = vadd.f32 %v3892, %v3962
        %v3995 = vadd.f32 %v3897, %v3963
        %v3996 = vadd.f32 %v3900, %v3964
        %v3997 = vadd.f32 %v3905, %v3965
        %v3998 = vadd.f32 %v3908, %v3966
        %v3999 = vadd.f32 %v3913, %v3967
        %v4000 = vadd.f32 %v3916, %v3968
        %v4001 = vadd.f32 %v3921, %v3969
        %v4002 = vadd.f32 %v3924, %v3970
        %v4003 = vadd.f32 %v3929, %v3971
        %v4004 = vadd.f32 %v3932, %v3972
        %v4005 = vadd.f32 %v3937, %v3973
        %v4006 = vadd.f32 %v3940, %v3974
        %vm4007 = vcmp.gt.f32.partialorder %v3975, 0.0
        %vm4008 = vcmp.gt.f32.partialorder %v3976, 0.0
        %vm4009 = vcmp.gt.f32.partialorder %v3977, 0.0
        %vm4010 = vcmp.gt.f32.partialorder %v3978, 0.0
        %vm4011 = vcmp.gt.f32.partialorder %v3979, 0.0
        %vm4012 = vcmp.gt.f32.partialorder %v3980, 0.0
        %vm4013 = vcmp.gt.f32.partialorder %v3981, 0.0
        %vm4014 = vcmp.gt.f32.partialorder %v3982, 0.0
        %vm4015 = vcmp.gt.f32.partialorder %v3983, 0.0
        %vm4016 = vcmp.gt.f32.partialorder %v3984, 0.0
        %vm4017 = vcmp.gt.f32.partialorder %v3985, 0.0
        %vm4018 = vcmp.gt.f32.partialorder %v3986, 0.0
        %vm4019 = vcmp.gt.f32.partialorder %v3987, 0.0
        %vm4020 = vcmp.gt.f32.partialorder %v3988, 0.0
        %vm4021 = vcmp.gt.f32.partialorder %v3989, 0.0
        %vm4022 = vcmp.gt.f32.partialorder %v3990, 0.0
        %vm4023 = vcmp.gt.f32.partialorder %v3991, 0.0
        %vm4024 = vcmp.gt.f32.partialorder %v3992, 0.0
        %vm4025 = vcmp.gt.f32.partialorder %v3993, 0.0
        %vm4026 = vcmp.gt.f32.partialorder %v3994, 0.0
        %vm4027 = vcmp.gt.f32.partialorder %v3995, 0.0
        %vm4028 = vcmp.gt.f32.partialorder %v3996, 0.0
        %vm4029 = vcmp.gt.f32.partialorder %v3997, 0.0
        %vm4030 = vcmp.gt.f32.partialorder %v3998, 0.0
        %vm4031 = vcmp.gt.f32.partialorder %v3999, 0.0
        %vm4032 = vcmp.gt.f32.partialorder %v4000, 0.0
        %vm4033 = vcmp.gt.f32.partialorder %v4001, 0.0
        %vm4034 = vcmp.gt.f32.partialorder %v4002, 0.0
        %vm4035 = vcmp.gt.f32.partialorder %v4003, 0.0
        %vm4036 = vcmp.gt.f32.partialorder %v4004, 0.0
        %vm4037 = vcmp.gt.f32.partialorder %v4005, 0.0
        %vm4038 = vcmp.gt.f32.partialorder %v4006, 0.0
        %v4039 = vmul.f32 %v3975, 0.01
        %v4040 = vmul.f32 %v3976, 0.01
        %v4041 = vmul.f32 %v3977, 0.01
        %v4042 = vmul.f32 %v3978, 0.01
        %v4043 = vmul.f32 %v3979, 0.01
        %v4044 = vmul.f32 %v3980, 0.01
        %v4045 = vmul.f32 %v3981, 0.01
        %v4046 = vmul.f32 %v3982, 0.01
        %v4047 = vmul.f32 %v3983, 0.01
        %v4048 = vmul.f32 %v3984, 0.01
        %v4049 = vmul.f32 %v3985, 0.01
        %v4050 = vmul.f32 %v3986, 0.01
        %v4051 = vmul.f32 %v3987, 0.01
        %v4052 = vmul.f32 %v3988, 0.01
        %v4053 = vmul.f32 %v3989, 0.01
        %v4054 = vmul.f32 %v3990, 0.01
        %v4055 = vmul.f32 %v3991, 0.01
        %v4056 = vmul.f32 %v3992, 0.01
        %v4057 = vmul.f32 %v3993, 0.01
        %v4058 = vmul.f32 %v3994, 0.01
        %v4059 = vmul.f32 %v3995, 0.01
        %v4060 = vmul.f32 %v3996, 0.01
        %v4061 = vmul.f32 %v3997, 0.01
        %v4062 = vmul.f32 %v3998, 0.01
        %v4063 = vmul.f32 %v3999, 0.01
        %v4064 = vmul.f32 %v4000, 0.01
        %v4065 = vmul.f32 %v4001, 0.01
        %v4066 = vmul.f32 %v4002, 0.01
        %v4067 = vmul.f32 %v4003, 0.01
        %v4068 = vmul.f32 %v4004, 0.01
        %v4069 = vmul.f32 %v4005, 0.01
        %v4070 = vmul.f32 %v4006, 0.01
        %v4071 = vsel %vm4007, %v3975, %v4039
        %v4072 = vsel %vm4008, %v3976, %v4040
        %v4073 = vsel %vm4009, %v3977, %v4041
        %v4074 = vsel %vm4010, %v3978, %v4042
        %v4075 = vsel %vm4011, %v3979, %v4043
        %v4076 = vsel %vm4012, %v3980, %v4044
        %v4077 = vsel %vm4013, %v3981, %v4045
        %v4078 = vsel %vm4014, %v3982, %v4046
        %v4079 = vsel %vm4015, %v3983, %v4047
        %v4080 = vsel %vm4016, %v3984, %v4048
        %v4081 = vsel %vm4017, %v3985, %v4049
        %v4082 = vsel %vm4018, %v3986, %v4050
        %v4083 = vsel %vm4019, %v3987, %v4051
        %v4084 = vsel %vm4020, %v3988, %v4052
        %v4085 = vsel %vm4021, %v3989, %v4053
        %v4086 = vsel %vm4022, %v3990, %v4054
        %v4087 = vsel %vm4023, %v3991, %v4055
        %v4088 = vsel %vm4024, %v3992, %v4056
        %v4089 = vsel %vm4025, %v3993, %v4057
        %v4090 = vsel %vm4026, %v3994, %v4058
        %v4091 = vsel %vm4027, %v3995, %v4059
        %v4092 = vsel %vm4028, %v3996, %v4060
        %v4093 = vsel %vm4029, %v3997, %v4061
        %v4094 = vsel %vm4030, %v3998, %v4062
        %v4095 = vsel %vm4031, %v3999, %v4063
        %v4096 = vsel %vm4032, %v4000, %v4064
        %v4097 = vsel %vm4033, %v4001, %v4065
        %v4098 = vsel %vm4034, %v4002, %v4066
        %v4099 = vsel %vm4035, %v4003, %v4067
        %v4100 = vsel %vm4036, %v4004, %v4068
        %v4101 = vsel %vm4037, %v4005, %v4069
        %v4102 = vsel %vm4038, %v4006, %v4070
        %4103 = vst [vmem:[%s340] sm:$0xff] %v4071
        %4104 = vst [vmem:[%s340 + $0x8] sm:$0xff] %v4072
        %4105 = vst [vmem:[%s340 + $0x10] sm:$0xff] %v4073
        %4106 = vst [vmem:[%s340 + $0x18] sm:$0xff] %v4074
        %4107 = vst [vmem:[%s340 + $0x20] sm:$0xff] %v4075
        %4108 = vst [vmem:[%s340 + $0x28] sm:$0xff] %v4076
        %4109 = vst [vmem:[%s340 + $0x30] sm:$0xff] %v4077
        %4110 = vst [vmem:[%s340 + $0x38] sm:$0xff] %v4078
        %4111 = vst [vmem:[%s340 + $0x40] sm:$0xff] %v4079
        %4112 = vst [vmem:[%s340 + $0x48] sm:$0xff] %v4080
        %4113 = vst [vmem:[%s340 + $0x50] sm:$0xff] %v4081
        %4114 = vst [vmem:[%s340 + $0x58] sm:$0xff] %v4082
        %4115 = vst [vmem:[%s340 + $0x60] sm:$0xff] %v4083
        %4116 = vst [vmem:[%s340 + $0x68] sm:$0xff] %v4084
        %4117 = vst [vmem:[%s340 + $0x70] sm:$0xff] %v4085
        %4118 = vst [vmem:[%s340 + $0x78] sm:$0xff] %v4086
        %4119 = vst [vmem:[%s340 + $0x80] sm:$0xff] %v4087
        %4120 = vst [vmem:[%s340 + $0x88] sm:$0xff] %v4088
        %4121 = vst [vmem:[%s340 + $0x90] sm:$0xff] %v4089
        %4122 = vst [vmem:[%s340 + $0x98] sm:$0xff] %v4090
        %4123 = vst [vmem:[%s340 + $0xa0] sm:$0xff] %v4091
        %4124 = vst [vmem:[%s340 + $0xa8] sm:$0xff] %v4092
        %4125 = vst [vmem:[%s340 + $0xb0] sm:$0xff] %v4093
        %4126 = vst [vmem:[%s340 + $0xb8] sm:$0xff] %v4094
        %4127 = vst [vmem:[%s340 + $0xc0] sm:$0xff] %v4095
        %4128 = vst [vmem:[%s340 + $0xc8] sm:$0xff] %v4096
        %4129 = vst [vmem:[%s340 + $0xd0] sm:$0xff] %v4097
        %4130 = vst [vmem:[%s340 + $0xd8] sm:$0xff] %v4098
        %4131 = vst [vmem:[%s340 + $0xe0] sm:$0xff] %v4099
        %4132 = vst [vmem:[%s340 + $0xe8] sm:$0xff] %v4100
        %4133 = vst [vmem:[%s340 + $0xf0] sm:$0xff] %v4101
        %4134 = vst [vmem:[%s340 + $0xf8] sm:$0xff] %v4102
        %s4135 = sand.u32 %s186, 1
        %s4136 = scalar_lea.sflag [#allocation5], %s4135
        %s4137 = sand.u32 %s186, 1
        %s4138 = smul.addr %s4137, 256
        %s4139 = scalar_lea.vmem [#allocation11], %s4138
        // Predicated region
        $region65: #{tpu_custom_call.1} parent=47 // pred_check
          %p4140 = pneg %p196
        $region66: #{tpu_custom_call.1} parent=47 // pred_check_branch
          %4142 = sbr.rel (%p4140) target = $region68
        $region67: #{tpu_custom_call.1} parent=47 // pred_region
          %s4144 = ssub.s32 4096, 4096
          %4145 = vsyncadd %s4136, %s4144
          %s4146 = smul.addr %s26, 32
          %s4147 = smul.addr %s4146, 128
          %s4148 = scalar_lea.hbm %s7, %s4147
          %s4149 = sshll.u32 %s4139, 4
          %s4150 = int_to_ptr.vmem [resolvable:$true] %s4149
          %4155 = dma.vmem_to_hbm [thread:$0]  %s4150, 4096, %s4148, %s4136, 128, 128, 8
        $region68: #{tpu_custom_call.1} parent=47 // pred_fallthru
          _
      $region48: #{tpu_custom_call.1} parent=5 // pred_fallthru
        _
      %p4156 = scmp.le.s32.totalorder 2, %s21
      // Predicated region
      $region69: #{tpu_custom_call.1} parent=5 // pred_check
        %p4157 = pneg %p4156
      $region70: #{tpu_custom_call.1} parent=5 // pred_check_branch
        %4159 = sbr.rel (%p4157) target = $region72
      $region71: #{tpu_custom_call.1} parent=5 // pred_region
        %s4160 = ssub.s32 %s21, 2
        // Predicated region
        $region73: #{tpu_custom_call.1} parent=71 // pred_check
          %p4161 = pneg %p202
        $region74: #{tpu_custom_call.1} parent=71 // pred_check_branch
          %4163 = sbr.rel (%p4161) target = $region76
        $region75: #{tpu_custom_call.1} parent=71 // pred_region
          %s4164 = sand.u32 %s187, 1
          %s4165 = scalar_lea.sflag [#allocation5], %s4164
          %s4166 = sand.u32 %s187, 1
          %s4167 = smul.addr %s4166, 256
          %s4168 = scalar_lea.vmem [#allocation11], %s4167
          %4169 = dma.done %s4165, 4096
        $region76: #{tpu_custom_call.1} parent=71 // pred_fallthru
          _
      $region72: #{tpu_custom_call.1} parent=5 // pred_fallthru
        _
    $region6: #{tpu_custom_call.1} parent=1 // loop_footer
      %s25 = sadd.s32 1, %s21
    $region7: #{tpu_custom_call.1} parent=1 // loop_footer_branch
      %20 = sbr.rel target = $region3
    $region8: #{tpu_custom_call.1} parent=1 // loop_exit
      _
    %4170 = vsyncpa [#allocation4], 1
    %s4171 = scalar_lea.sflag [#allocation4], 1
    %4172 = vsyncpa %s4171, 1
    %4173 = vsyncpa [#allocation7], 1
    %4174 = vsyncpa [#allocation10], 1
    %4175 = vsyncpa [#allocation5], 1
    %s4176 = scalar_lea.sflag [#allocation5], 1
    %4177 = vsyncpa %s4176, 1

</llo_original>
